<compile_context>
chip_gen: v7x
topology: tpu7x:2x2x1
jax: 0.10.0
libtpu: 0.0.40
codegen_flags: <defaults>
</compile_context>

<pallas_src>
import jax
import jax.numpy as jnp
from jax.experimental import pallas as pl
from jax.experimental.pallas import tpu as pltpu

IN_F = 1 * 28 * 28       # 784
HID = 300
OUT = 10

IN_PAD = 896             # 7 * 128
HID_PAD = 384            # 3 * 128  (smallest 128-multiple >= 300)
OUT_PAD = 128            # 1 * 128


def _mlp_kernel(x_ref,
                w1_ref, b1_ref,
                w2_ref, b2_ref,
                w3_ref, b3_ref,
                w4_ref, b4_ref,
                w5_ref, b5_ref,
                o_ref):
    # x_ref: (TILE_B, IN_PAD) bf16; weights bf16 (in, out); biases (1, out) f32.
    x = x_ref[...]

    h = jnp.dot(x, w1_ref[...], preferred_element_type=jnp.float32) + b1_ref[...]
    h = jnp.maximum(h, 0.0).astype(jnp.bfloat16)      # dropout1: identity (eval)

    h = jnp.dot(h, w2_ref[...], preferred_element_type=jnp.float32) + b2_ref[...]
    h = jnp.maximum(h, 0.0).astype(jnp.bfloat16)      # dropout2: identity (eval)

    h = jnp.dot(h, w3_ref[...], preferred_element_type=jnp.float32) + b3_ref[...]
    h = jnp.maximum(h, 0.0).astype(jnp.bfloat16)      # dropout3: identity (eval)

    h = jnp.dot(h, w4_ref[...], preferred_element_type=jnp.float32) + b4_ref[...]
    h = jnp.maximum(h, 0.0).astype(jnp.bfloat16)      # dropout4: identity (eval)

    out = jnp.dot(h, w5_ref[...], preferred_element_type=jnp.float32) + b5_ref[...]
    o_ref[...] = out.astype(o_ref.dtype)


def init_params(key):
    """nn.Linear-style init: U(-1/sqrt(fan_in), +1/sqrt(fan_in)).
    Weights stored as (in_features, out_features); biases as (1, out_features). Unpadded f32."""
    dims = [(IN_F, HID), (HID, HID), (HID, HID), (HID, HID), (HID, OUT)]
    params = []
    for fan_in, fan_out in dims:
        key, kw, kb = jax.random.split(key, 3)
        bound = 1.0 / jnp.sqrt(jnp.float32(fan_in))
        w = jax.random.uniform(kw, (fan_in, fan_out), jnp.float32, -bound, bound)
        b = jax.random.uniform(kb, (1, fan_out), jnp.float32, -bound, bound)
        params.append((w, b))
    return params


def prepare_params(params):
    """Zero-pad to lane-aligned shapes once, cast weights to bf16, keep biases f32."""
    pad_dims = [(IN_PAD, HID_PAD), (HID_PAD, HID_PAD), (HID_PAD, HID_PAD),
                (HID_PAD, HID_PAD), (HID_PAD, OUT_PAD)]
    prepared = []
    for (w, b), (pin, pout) in zip(params, pad_dims):
        wp = jnp.zeros((pin, pout), jnp.float32).at[:w.shape[0], :w.shape[1]].set(w)
        bp = jnp.zeros((1, pout), jnp.float32).at[:, :b.shape[1]].set(b)
        prepared.append((wp.astype(jnp.bfloat16), bp))
    return prepared


def modelD_forward(x, prepared_params, tile_b=512):
    """x: (B, 1, 28, 28) float32 (NCHW). Returns (B, 10) float32 logits."""
    B = x.shape[0]
    x_flat = x.reshape(B, -1).astype(jnp.float32)                 # (B, 784)

    # Tile must be a multiple of 16 (bf16 sublane packing); don't use a tile bigger
    # than the (rounded-up) batch itself.
    tile_b = max(16, min(tile_b, ((B + 15) // 16) * 16))
    n_tiles = pl.cdiv(B, tile_b)
    b_pad = n_tiles * tile_b

    # Pad batch (ragged last tile) and features (784 -> 896) with zeros, cast to bf16.
    # This is a single fused XLA op and halves the activation DMA into the kernel.
    x_p = jnp.pad(x_flat, ((0, b_pad - B), (0, IN_PAD - IN_F))).astype(jnp.bfloat16)

    (w1, b1), (w2, b2), (w3, b3), (w4, b4), (w5, b5) = prepared_params

    x_spec = pl.BlockSpec((tile_b, IN_PAD), lambda i: (i, 0))
    out_spec = pl.BlockSpec((tile_b, OUT_PAD), lambda i: (i, 0))

    def _resident(shape):
        # Constant index_map -> block never changes -> stays resident in VMEM.
        return pl.BlockSpec(shape, lambda i: (0, 0))

    in_specs = [
        x_spec,
        _resident((IN_PAD, HID_PAD)),  _resident((1, HID_PAD)),
        _resident((HID_PAD, HID_PAD)), _resident((1, HID_PAD)),
        _resident((HID_PAD, HID_PAD)), _resident((1, HID_PAD)),
        _resident((HID_PAD, HID_PAD)), _resident((1, HID_PAD)),
        _resident((HID_PAD, OUT_PAD)), _resident((1, OUT_PAD)),
    ]

    flops = 2 * b_pad * (IN_PAD * HID_PAD + 3 * HID_PAD * HID_PAD + HID_PAD * OUT_PAD)
    weight_bytes = 2 * (IN_PAD * HID_PAD + 3 * HID_PAD * HID_PAD + HID_PAD * OUT_PAD)
    bias_bytes = 4 * (4 * HID_PAD + OUT_PAD)
    bytes_accessed = weight_bytes + bias_bytes + b_pad * IN_PAD * 2 + b_pad * OUT_PAD * 4

    fn = pl.pallas_call(
        _mlp_kernel,
        out_shape=jax.ShapeDtypeStruct((b_pad, OUT_PAD), jnp.float32),
        grid=(n_tiles,),
        in_specs=in_specs,
        out_specs=out_spec,
        compiler_params=pltpu.CompilerParams(
            dimension_semantics=("parallel",),          # shard batch tiles across TCs (v7x)
            vmem_limit_bytes=32 * 1024 * 1024,
        ),
        cost_estimate=pl.CostEstimate(
            flops=flops, transcendentals=0, bytes_accessed=bytes_accessed),
    )
    out_padded = fn(x_p, w1, b1, w2, b2, w3, b3, w4, b4, w5, b5)
    return out_padded[:B, :OUT]


def reference_forward(x, params):
    """Pure-JAX f32 reference (unpadded params) for correctness checking."""
    h = x.reshape(x.shape[0], -1).astype(jnp.float32)
    for i, (w, b) in enumerate(params):
        h = h @ w + b
        if i < len(params) - 1:
            h = jnp.maximum(h, 0.0)
    return h


if __name__ == "__main__":
    key = jax.random.PRNGKey(0)
    key, kx = jax.random.split(key)

    params = init_params(key)
    prepared = prepare_params(params)

    # Small batch, MNIST-shaped input (B, 1, 28, 28) as the module's forward implies.
    B = 2
    x = jax.random.normal(kx, (B, 1, 28, 28), dtype=jnp.float32)

    out = modelD_forward(x, prepared)
    out = jax.block_until_ready(out)

    ref = reference_forward(x, params)
    assert out.shape == (B, 10), out.shape
    # bf16 matmul operands (f32 accumulate) -> loosened tolerance vs. f32 reference.
    assert jnp.allclose(out, ref, atol=5e-2, rtol=5e-2), (
        "mismatch vs reference: max abs diff "
        + str(float(jnp.max(jnp.abs(out - ref)))))

    print("KERNEL_OK")
</pallas_src>

<mosaic_0001>
module attributes {stable_mosaic.version = 11 : i64} {
  func.func @_mlp_kernel(%arg0: i32, %arg1: memref<16x896xbf16, #tpu.memory_space<vmem>>, %arg2: memref<896x384xbf16, #tpu.memory_space<vmem>>, %arg3: memref<1x384xf32, #tpu.memory_space<vmem>>, %arg4: memref<384x384xbf16, #tpu.memory_space<vmem>>, %arg5: memref<1x384xf32, #tpu.memory_space<vmem>>, %arg6: memref<384x384xbf16, #tpu.memory_space<vmem>>, %arg7: memref<1x384xf32, #tpu.memory_space<vmem>>, %arg8: memref<384x384xbf16, #tpu.memory_space<vmem>>, %arg9: memref<1x384xf32, #tpu.memory_space<vmem>>, %arg10: memref<384x128xbf16, #tpu.memory_space<vmem>>, %arg11: memref<1x128xf32, #tpu.memory_space<vmem>>, %arg12: memref<16x128xf32, #tpu.memory_space<vmem>>) attributes {dimension_semantics = [#tpu.dimension_semantics<parallel>], iteration_bounds = array<i64: 1>, scalar_prefetch = 0 : i64, scratch_operands = 0 : i64, tpu.core_type = #tpu.core_type<tc>, window_params = [{transform_indices = @transform_0, window_bounds = array<i64: 16, 896>}, {pipeline_mode = #tpu.pipeline_mode<synchronous>, transform_indices = @transform_1, window_bounds = array<i64: 896, 384>}, {pipeline_mode = #tpu.pipeline_mode<synchronous>, transform_indices = @transform_2, window_bounds = array<i64: 1, 384>}, {pipeline_mode = #tpu.pipeline_mode<synchronous>, transform_indices = @transform_3, window_bounds = array<i64: 384, 384>}, {pipeline_mode = #tpu.pipeline_mode<synchronous>, transform_indices = @transform_4, window_bounds = array<i64: 1, 384>}, {pipeline_mode = #tpu.pipeline_mode<synchronous>, transform_indices = @transform_5, window_bounds = array<i64: 384, 384>}, {pipeline_mode = #tpu.pipeline_mode<synchronous>, transform_indices = @transform_6, window_bounds = array<i64: 1, 384>}, {pipeline_mode = #tpu.pipeline_mode<synchronous>, transform_indices = @transform_7, window_bounds = array<i64: 384, 384>}, {pipeline_mode = #tpu.pipeline_mode<synchronous>, transform_indices = @transform_8, window_bounds = array<i64: 1, 384>}, {pipeline_mode = #tpu.pipeline_mode<synchronous>, transform_indices = @transform_9, window_bounds = array<i64: 384, 128>}, {pipeline_mode = #tpu.pipeline_mode<synchronous>, transform_indices = @transform_10, window_bounds = array<i64: 1, 128>}, {transform_indices = @transform_11, window_bounds = array<i64: 16, 128>}]} {
    %c0 = arith.constant 0 : index
    %c0_0 = arith.constant 0 : index
    %0 = vector.load %arg1[%c0, %c0_0] : memref<16x896xbf16, #tpu.memory_space<vmem>>, vector<16x896xbf16>
    %c0_1 = arith.constant 0 : index
    %c0_2 = arith.constant 0 : index
    %1 = vector.load %arg2[%c0_1, %c0_2] : memref<896x384xbf16, #tpu.memory_space<vmem>>, vector<896x384xbf16>
    %cst = arith.constant dense<0.000000e+00> : vector<16x384xf32>
    %2 = tpu.matmul %0, %1, %cst {dimension_numbers = #tpu.dot_dimension_numbers<[1], [0], [0], [1], [0, 0, 1, 1], [], []>} : vector<16x896xbf16>, vector<896x384xbf16>, vector<16x384xf32> -> vector<16x384xf32>
    %c0_3 = arith.constant 0 : index
    %c0_4 = arith.constant 0 : index
    %3 = vector.load %arg3[%c0_3, %c0_4] : memref<1x384xf32, #tpu.memory_space<vmem>>, vector<1x384xf32>
    %4 = vector.broadcast %3 : vector<1x384xf32> to vector<16x384xf32>
    %5 = arith.addf %2, %4 : vector<16x384xf32>
    %cst_5 = arith.constant 0.000000e+00 : f32
    %6 = vector.broadcast %cst_5 : f32 to vector<16x384xf32>
    %7 = arith.maximumf %5, %6 : vector<16x384xf32>
    %8 = arith.truncf %7 : vector<16x384xf32> to vector<16x384xbf16>
    %c0_6 = arith.constant 0 : index
    %c0_7 = arith.constant 0 : index
    %9 = vector.load %arg4[%c0_6, %c0_7] : memref<384x384xbf16, #tpu.memory_space<vmem>>, vector<384x384xbf16>
    %cst_8 = arith.constant dense<0.000000e+00> : vector<16x384xf32>
    %10 = tpu.matmul %8, %9, %cst_8 {dimension_numbers = #tpu.dot_dimension_numbers<[1], [0], [0], [1], [0, 0, 1, 1], [], []>} : vector<16x384xbf16>, vector<384x384xbf16>, vector<16x384xf32> -> vector<16x384xf32>
    %c0_9 = arith.constant 0 : index
    %c0_10 = arith.constant 0 : index
    %11 = vector.load %arg5[%c0_9, %c0_10] : memref<1x384xf32, #tpu.memory_space<vmem>>, vector<1x384xf32>
    %12 = vector.broadcast %11 : vector<1x384xf32> to vector<16x384xf32>
    %13 = arith.addf %10, %12 : vector<16x384xf32>
    %cst_11 = arith.constant 0.000000e+00 : f32
    %14 = vector.broadcast %cst_11 : f32 to vector<16x384xf32>
    %15 = arith.maximumf %13, %14 : vector<16x384xf32>
    %16 = arith.truncf %15 : vector<16x384xf32> to vector<16x384xbf16>
    %c0_12 = arith.constant 0 : index
    %c0_13 = arith.constant 0 : index
    %17 = vector.load %arg6[%c0_12, %c0_13] : memref<384x384xbf16, #tpu.memory_space<vmem>>, vector<384x384xbf16>
    %cst_14 = arith.constant dense<0.000000e+00> : vector<16x384xf32>
    %18 = tpu.matmul %16, %17, %cst_14 {dimension_numbers = #tpu.dot_dimension_numbers<[1], [0], [0], [1], [0, 0, 1, 1], [], []>} : vector<16x384xbf16>, vector<384x384xbf16>, vector<16x384xf32> -> vector<16x384xf32>
    %c0_15 = arith.constant 0 : index
    %c0_16 = arith.constant 0 : index
    %19 = vector.load %arg7[%c0_15, %c0_16] : memref<1x384xf32, #tpu.memory_space<vmem>>, vector<1x384xf32>
    %20 = vector.broadcast %19 : vector<1x384xf32> to vector<16x384xf32>
    %21 = arith.addf %18, %20 : vector<16x384xf32>
    %cst_17 = arith.constant 0.000000e+00 : f32
    %22 = vector.broadcast %cst_17 : f32 to vector<16x384xf32>
    %23 = arith.maximumf %21, %22 : vector<16x384xf32>
    %24 = arith.truncf %23 : vector<16x384xf32> to vector<16x384xbf16>
    %c0_18 = arith.constant 0 : index
    %c0_19 = arith.constant 0 : index
    %25 = vector.load %arg8[%c0_18, %c0_19] : memref<384x384xbf16, #tpu.memory_space<vmem>>, vector<384x384xbf16>
    %cst_20 = arith.constant dense<0.000000e+00> : vector<16x384xf32>
    %26 = tpu.matmul %24, %25, %cst_20 {dimension_numbers = #tpu.dot_dimension_numbers<[1], [0], [0], [1], [0, 0, 1, 1], [], []>} : vector<16x384xbf16>, vector<384x384xbf16>, vector<16x384xf32> -> vector<16x384xf32>
    %c0_21 = arith.constant 0 : index
    %c0_22 = arith.constant 0 : index
    %27 = vector.load %arg9[%c0_21, %c0_22] : memref<1x384xf32, #tpu.memory_space<vmem>>, vector<1x384xf32>
    %28 = vector.broadcast %27 : vector<1x384xf32> to vector<16x384xf32>
    %29 = arith.addf %26, %28 : vector<16x384xf32>
    %cst_23 = arith.constant 0.000000e+00 : f32
    %30 = vector.broadcast %cst_23 : f32 to vector<16x384xf32>
    %31 = arith.maximumf %29, %30 : vector<16x384xf32>
    %32 = arith.truncf %31 : vector<16x384xf32> to vector<16x384xbf16>
    %c0_24 = arith.constant 0 : index
    %c0_25 = arith.constant 0 : index
    %33 = vector.load %arg10[%c0_24, %c0_25] : memref<384x128xbf16, #tpu.memory_space<vmem>>, vector<384x128xbf16>
    %cst_26 = arith.constant dense<0.000000e+00> : vector<16x128xf32>
    %34 = tpu.matmul %32, %33, %cst_26 {dimension_numbers = #tpu.dot_dimension_numbers<[1], [0], [0], [1], [0, 0, 1, 1], [], []>} : vector<16x384xbf16>, vector<384x128xbf16>, vector<16x128xf32> -> vector<16x128xf32>
    %c0_27 = arith.constant 0 : index
    %c0_28 = arith.constant 0 : index
    %35 = vector.load %arg11[%c0_27, %c0_28] : memref<1x128xf32, #tpu.memory_space<vmem>>, vector<1x128xf32>
    %36 = vector.broadcast %35 : vector<1x128xf32> to vector<16x128xf32>
    %37 = arith.addf %34, %36 : vector<16x128xf32>
    %c0_29 = arith.constant 0 : index
    %c0_30 = arith.constant 0 : index
    %38 = vector.load %arg12[%c0_29, %c0_30] : memref<16x128xf32, #tpu.memory_space<vmem>>, vector<16x128xf32>
    tpu.vector_store %arg12[%c0_29, %c0_30], %37 {strides = array<i32>} : memref<16x128xf32, #tpu.memory_space<vmem>>, vector<16x128xf32>,
    return
  }
  func.func @transform_0(%arg0: i32) -> (i32, i32) {
    %c0_i32 = arith.constant 0 : i32
    %c0_i32_0 = arith.constant 0 : i32
    return %arg0, %c0_i32 : i32, i32
  }
  func.func @transform_1(%arg0: i32) -> (i32, i32) {
    %c0_i32 = arith.constant 0 : i32
    %c0_i32_0 = arith.constant 0 : i32
    %c0_i32_1 = arith.constant 0 : i32
    return %c0_i32, %c0_i32_0 : i32, i32
  }
  func.func @transform_2(%arg0: i32) -> (i32, i32) {
    %c0_i32 = arith.constant 0 : i32
    %c0_i32_0 = arith.constant 0 : i32
    %c0_i32_1 = arith.constant 0 : i32
    return %c0_i32, %c0_i32_0 : i32, i32
  }
  func.func @transform_3(%arg0: i32) -> (i32, i32) {
    %c0_i32 = arith.constant 0 : i32
    %c0_i32_0 = arith.constant 0 : i32
    %c0_i32_1 = arith.constant 0 : i32
    return %c0_i32, %c0_i32_0 : i32, i32
  }
  func.func @transform_4(%arg0: i32) -> (i32, i32) {
    %c0_i32 = arith.constant 0 : i32
    %c0_i32_0 = arith.constant 0 : i32
    %c0_i32_1 = arith.constant 0 : i32
    return %c0_i32, %c0_i32_0 : i32, i32
  }
  func.func @transform_5(%arg0: i32) -> (i32, i32) {
    %c0_i32 = arith.constant 0 : i32
    %c0_i32_0 = arith.constant 0 : i32
    %c0_i32_1 = arith.constant 0 : i32
    return %c0_i32, %c0_i32_0 : i32, i32
  }
  func.func @transform_6(%arg0: i32) -> (i32, i32) {
    %c0_i32 = arith.constant 0 : i32
    %c0_i32_0 = arith.constant 0 : i32
    %c0_i32_1 = arith.constant 0 : i32
    return %c0_i32, %c0_i32_0 : i32, i32
  }
  func.func @transform_7(%arg0: i32) -> (i32, i32) {
    %c0_i32 = arith.constant 0 : i32
    %c0_i32_0 = arith.constant 0 : i32
    %c0_i32_1 = arith.constant 0 : i32
    return %c0_i32, %c0_i32_0 : i32, i32
  }
  func.func @transform_8(%arg0: i32) -> (i32, i32) {
    %c0_i32 = arith.constant 0 : i32
    %c0_i32_0 = arith.constant 0 : i32
    %c0_i32_1 = arith.constant 0 : i32
    return %c0_i32, %c0_i32_0 : i32, i32
  }
  func.func @transform_9(%arg0: i32) -> (i32, i32) {
    %c0_i32 = arith.constant 0 : i32
    %c0_i32_0 = arith.constant 0 : i32
    %c0_i32_1 = arith.constant 0 : i32
    return %c0_i32, %c0_i32_0 : i32, i32
  }
  func.func @transform_10(%arg0: i32) -> (i32, i32) {
    %c0_i32 = arith.constant 0 : i32
    %c0_i32_0 = arith.constant 0 : i32
    %c0_i32_1 = arith.constant 0 : i32
    return %c0_i32, %c0_i32_0 : i32, i32
  }
  func.func @transform_11(%arg0: i32) -> (i32, i32) {
    %c0_i32 = arith.constant 0 : i32
    %c0_i32_0 = arith.constant 0 : i32
    return %arg0, %c0_i32 : i32, i32
  }
}

</mosaic_0001>

<llo_original>
// kernel: tpu_custom_call.1
$region0: #{tpu_custom_call.1}
  #allocation0 [shape = 'u32[]', space=smem, size = 0x4, offset = 0x4, fixed_abs, tag = 'smem constant byte address 0x4 - core index']
  #allocation1 [shape = 'u32[144,128]{1,0:T(1,128)}', space=vmem, size = 0x12000, scoped, tag = 'internal scratch']
  %s0 = inlined_call_operand.hbm [shape: bf16[16,896], index: 0, kind: input, shape index: {}]
  %s1 = inlined_call_operand.hbm [shape: bf16[896,384], index: 1, kind: input, shape index: {}]
  %s2 = inlined_call_operand.vmem [shape: f32[1,384], index: 2, kind: input, shape index: {}]
  %s3 = inlined_call_operand.hbm [shape: bf16[384,384], index: 3, kind: input, shape index: {}]
  %s4 = inlined_call_operand.vmem [shape: f32[1,384], index: 4, kind: input, shape index: {}]
  %s5 = inlined_call_operand.hbm [shape: bf16[384,384], index: 5, kind: input, shape index: {}]
  %s6 = inlined_call_operand.vmem [shape: f32[1,384], index: 6, kind: input, shape index: {}]
  %s7 = inlined_call_operand.hbm [shape: bf16[384,384], index: 7, kind: input, shape index: {}]
  %s8 = inlined_call_operand.vmem [shape: f32[1,384], index: 8, kind: input, shape index: {}]
  %s9 = inlined_call_operand.hbm [shape: bf16[384,128], index: 9, kind: input, shape index: {}]
  %s10 = inlined_call_operand.vmem [shape: f32[1,128], index: 10, kind: input, shape index: {}]
  %s11 = inlined_call_operand.hbm [shape: f32[16,128], index: 11, kind: output, shape index: {}]
  %s12 = sld [smem:[#allocation0]]
  $region78: #{tpu_custom_call.1} parent=0
    _
  %s14 = ssub.s32 1, %s12
  %s15 = scalar_select 0, %s14, %s12
  $region1: #{tpu_custom_call.1} parent=0
    #allocation2 [shape = 'u8[28672]{0}', space=vmem, size = 0x7000, scoped, tag = 'input window, operand 0, single buffered']
    #allocation3 [shape = 's32[1]{0}', space=sflag, size = 0x4, scoped, tag = 'scoped memory for tpu_custom_call.1']
    #allocation4 [shape = 's32[1]{0}', space=sflag, size = 0x4, scoped, tag = 'scoped memory for tpu_custom_call.1']
    #allocation5 [shape = 'u8[688128]{0}', space=vmem, size = 0xa8000, scoped, tag = 'input window, operand 1, single buffered']
    #allocation6 [shape = 's32[1]{0}', space=sflag, size = 0x4, scoped, tag = 'scoped memory for tpu_custom_call.1']
    #allocation7 [shape = 'u8[294912]{0}', space=vmem, size = 0x48000, scoped, tag = 'input window, operand 3, single buffered']
    #allocation8 [shape = 'u8[294912]{0}', space=vmem, size = 0x48000, scoped, tag = 'input window, operand 5, single buffered']
    #allocation9 [shape = 's32[1]{0}', space=sflag, size = 0x4, scoped, tag = 'scoped memory for tpu_custom_call.1']
    #allocation10 [shape = 'u8[294912]{0}', space=vmem, size = 0x48000, scoped, tag = 'input window, operand 7, single buffered']
    #allocation11 [shape = 'u8[98304]{0}', space=vmem, size = 0x18000, scoped, tag = 'input window, operand 9, single buffered']
    #allocation12 [shape = 's32[1]{0}', space=sflag, size = 0x4, scoped, tag = 'scoped memory for tpu_custom_call.1']
    #allocation13 [shape = 'u8[8192]{0}', space=vmem, size = 0x2000, scoped, tag = 'output window, operand 0, single buffered']
    %16 = vsyncpa [#allocation3], 0
    %17 = vsyncpa [#allocation6], 0
    %18 = vsyncpa [#allocation9], 0
    %19 = vsyncpa [#allocation12], 0
    %20 = vsyncpa [#allocation4], 0
    // Predicated region
    $region2: #{tpu_custom_call.1} parent=1 // pred_check
      _
    $region3: #{tpu_custom_call.1} parent=1 // pred_check_branch
      %22 = sbr.rel (0) target = $region5
    $region4: #{tpu_custom_call.1} parent=1 // pred_region
      %s24 = ssub.s32 896, 896
      %25 = vsyncadd [#allocation3], %s24
      %s26 = sshll.u32 [#allocation2], 4
      %s27 = int_to_ptr.vmem [resolvable:$true] %s26
      %32 = dma.hbm_to_vmem [thread:$0]  %s0, 896, %s27, [#allocation3], 448, 448, 28
    $region5: #{tpu_custom_call.1} parent=1 // pred_fallthru
      _
    // Predicated region
    $region6: #{tpu_custom_call.1} parent=1 // pred_check
      _
    $region7: #{tpu_custom_call.1} parent=1 // pred_check_branch
      %34 = sbr.rel (0) target = $region9
    $region8: #{tpu_custom_call.1} parent=1 // pred_region
      %s36 = ssub.s32 21504, 21504
      %37 = vsyncadd [#allocation6], %s36
      %s38 = sshll.u32 [#allocation5], 4
      %s39 = int_to_ptr.vmem [resolvable:$true] %s38
      %44 = dma.hbm_to_vmem [thread:$0]  %s1, 21504, %s39, [#allocation6], 192, 192, 12
    $region9: #{tpu_custom_call.1} parent=1 // pred_fallthru
      _
    // Predicated region
    $region10: #{tpu_custom_call.1} parent=1 // pred_check
      _
    $region11: #{tpu_custom_call.1} parent=1 // pred_check_branch
      %46 = sbr.rel (0) target = $region13
    $region12: #{tpu_custom_call.1} parent=1 // pred_region
      _
    $region13: #{tpu_custom_call.1} parent=1 // pred_fallthru
      _
    // Predicated region
    $region14: #{tpu_custom_call.1} parent=1 // pred_check
      _
    $region15: #{tpu_custom_call.1} parent=1 // pred_check_branch
      %48 = sbr.rel (0) target = $region17
    $region16: #{tpu_custom_call.1} parent=1 // pred_region
      %s50 = ssub.s32 9216, 9216
      %51 = vsyncadd [#allocation6], %s50
      %s52 = sshll.u32 [#allocation7], 4
      %s53 = int_to_ptr.vmem [resolvable:$true] %s52
      %58 = dma.hbm_to_vmem [thread:$0]  %s3, 9216, %s53, [#allocation6], 192, 192, 12
    $region17: #{tpu_custom_call.1} parent=1 // pred_fallthru
      _
    // Predicated region
    $region18: #{tpu_custom_call.1} parent=1 // pred_check
      _
    $region19: #{tpu_custom_call.1} parent=1 // pred_check_branch
      %60 = sbr.rel (0) target = $region21
    $region20: #{tpu_custom_call.1} parent=1 // pred_region
      _
    $region21: #{tpu_custom_call.1} parent=1 // pred_fallthru
      _
    // Predicated region
    $region22: #{tpu_custom_call.1} parent=1 // pred_check
      _
    $region23: #{tpu_custom_call.1} parent=1 // pred_check_branch
      %62 = sbr.rel (0) target = $region25
    $region24: #{tpu_custom_call.1} parent=1 // pred_region
      %s64 = ssub.s32 9216, 9216
      %65 = vsyncadd [#allocation9], %s64
      %s66 = sshll.u32 [#allocation8], 4
      %s67 = int_to_ptr.vmem [resolvable:$true] %s66
      %72 = dma.hbm_to_vmem [thread:$0]  %s5, 9216, %s67, [#allocation9], 192, 192, 12
    $region25: #{tpu_custom_call.1} parent=1 // pred_fallthru
      _
    // Predicated region
    $region26: #{tpu_custom_call.1} parent=1 // pred_check
      _
    $region27: #{tpu_custom_call.1} parent=1 // pred_check_branch
      %74 = sbr.rel (0) target = $region29
    $region28: #{tpu_custom_call.1} parent=1 // pred_region
      _
    $region29: #{tpu_custom_call.1} parent=1 // pred_fallthru
      _
    // Predicated region
    $region30: #{tpu_custom_call.1} parent=1 // pred_check
      _
    $region31: #{tpu_custom_call.1} parent=1 // pred_check_branch
      %76 = sbr.rel (0) target = $region33
    $region32: #{tpu_custom_call.1} parent=1 // pred_region
      %s78 = ssub.s32 9216, 9216
      %79 = vsyncadd [#allocation9], %s78
      %s80 = sshll.u32 [#allocation10], 4
      %s81 = int_to_ptr.vmem [resolvable:$true] %s80
      %86 = dma.hbm_to_vmem [thread:$0]  %s7, 9216, %s81, [#allocation9], 192, 192, 12
    $region33: #{tpu_custom_call.1} parent=1 // pred_fallthru
      _
    // Predicated region
    $region34: #{tpu_custom_call.1} parent=1 // pred_check
      _
    $region35: #{tpu_custom_call.1} parent=1 // pred_check_branch
      %88 = sbr.rel (0) target = $region37
    $region36: #{tpu_custom_call.1} parent=1 // pred_region
      _
    $region37: #{tpu_custom_call.1} parent=1 // pred_fallthru
      _
    // Predicated region
    $region38: #{tpu_custom_call.1} parent=1 // pred_check
      _
    $region39: #{tpu_custom_call.1} parent=1 // pred_check_branch
      %90 = sbr.rel (0) target = $region41
    $region40: #{tpu_custom_call.1} parent=1 // pred_region
      %s92 = ssub.s32 3072, 3072
      %93 = vsyncadd [#allocation12], %s92
      %s94 = sshll.u32 [#allocation11], 4
      %s95 = int_to_ptr.vmem [resolvable:$true] %s94
      %100 = dma.hbm_to_vmem [thread:$0]  %s9, 3072, %s95, [#allocation12], 64, 64, 4
    $region41: #{tpu_custom_call.1} parent=1 // pred_fallthru
      _
    // Predicated region
    $region42: #{tpu_custom_call.1} parent=1 // pred_check
      _
    $region43: #{tpu_custom_call.1} parent=1 // pred_check_branch
      %102 = sbr.rel (0) target = $region45
    $region44: #{tpu_custom_call.1} parent=1 // pred_region
      _
    $region45: #{tpu_custom_call.1} parent=1 // pred_fallthru
      _
    // Predicated region
    $region46: #{tpu_custom_call.1} parent=1 // pred_check
      _
    $region47: #{tpu_custom_call.1} parent=1 // pred_check_branch
      %104 = sbr.rel (0) target = $region49
    $region48: #{tpu_custom_call.1} parent=1 // pred_region
      %105 = dma.done [#allocation3], 896
    $region49: #{tpu_custom_call.1} parent=1 // pred_fallthru
      _
    // Predicated region
    $region50: #{tpu_custom_call.1} parent=1 // pred_check
      _
    $region51: #{tpu_custom_call.1} parent=1 // pred_check_branch
      %107 = sbr.rel (0) target = $region53
    $region52: #{tpu_custom_call.1} parent=1 // pred_region
      %108 = dma.done [#allocation6], 21504
    $region53: #{tpu_custom_call.1} parent=1 // pred_fallthru
      _
    // Predicated region
    $region54: #{tpu_custom_call.1} parent=1 // pred_check
      _
    $region55: #{tpu_custom_call.1} parent=1 // pred_check_branch
      %110 = sbr.rel (0) target = $region57
    $region56: #{tpu_custom_call.1} parent=1 // pred_region
      %111 = dma.done [#allocation6], 9216
    $region57: #{tpu_custom_call.1} parent=1 // pred_fallthru
      _
    // Predicated region
    $region58: #{tpu_custom_call.1} parent=1 // pred_check
      _
    $region59: #{tpu_custom_call.1} parent=1 // pred_check_branch
      %113 = sbr.rel (0) target = $region61
    $region60: #{tpu_custom_call.1} parent=1 // pred_region
      %114 = dma.done [#allocation9], 9216
    $region61: #{tpu_custom_call.1} parent=1 // pred_fallthru
      _
    // Predicated region
    $region62: #{tpu_custom_call.1} parent=1 // pred_check
      _
    $region63: #{tpu_custom_call.1} parent=1 // pred_check_branch
      %116 = sbr.rel (0) target = $region65
    $region64: #{tpu_custom_call.1} parent=1 // pred_region
      %117 = dma.done [#allocation9], 9216
    $region65: #{tpu_custom_call.1} parent=1 // pred_fallthru
      _
    // Predicated region
    $region66: #{tpu_custom_call.1} parent=1 // pred_check
      _
    $region67: #{tpu_custom_call.1} parent=1 // pred_check_branch
      %119 = sbr.rel (0) target = $region69
    $region68: #{tpu_custom_call.1} parent=1 // pred_region
      %120 = dma.done [#allocation12], 3072
    $region69: #{tpu_custom_call.1} parent=1 // pred_fallthru
      _
    %v122 = vld [vmem:[#allocation2] sm:$0xff]
    %v123 = vld [vmem:[#allocation2 + $0x8] sm:$0xff]
    %v124 = vld [vmem:[#allocation2 + $0x10] sm:$0xff]
    %v125 = vld [vmem:[#allocation2 + $0x18] sm:$0xf]
    %v126 = vld [vmem:[#allocation2 + $0x1c] sm:$0xff]
    %v127 = vld [vmem:[#allocation2 + $0x24] sm:$0xff]
    %v128 = vld [vmem:[#allocation2 + $0x2c] sm:$0xff]
    %v129 = vld [vmem:[#allocation2 + $0x34] sm:$0xf]
    %v130 = vld [vmem:[#allocation5] sm:$0xff]
    %v131 = vld [vmem:[#allocation5 + $0x8] sm:$0xf]
    %v132 = vld [vmem:[#allocation5 + $0xc] sm:$0xff]
    %v133 = vld [vmem:[#allocation5 + $0x14] sm:$0xf]
    %v134 = vld [vmem:[#allocation5 + $0x18] sm:$0xff]
    %v135 = vld [vmem:[#allocation5 + $0x20] sm:$0xf]
    %v136 = vld [vmem:[#allocation5 + $0x24] sm:$0xff]
    %v137 = vld [vmem:[#allocation5 + $0x2c] sm:$0xf]
    %v138 = vld [vmem:[#allocation5 + $0x30] sm:$0xff]
    %v139 = vld [vmem:[#allocation5 + $0x38] sm:$0xf]
    %v140 = vld [vmem:[#allocation5 + $0x3c] sm:$0xff]
    %v141 = vld [vmem:[#allocation5 + $0x44] sm:$0xf]
    %v142 = vld [vmem:[#allocation5 + $0x48] sm:$0xff]
    %v143 = vld [vmem:[#allocation5 + $0x50] sm:$0xf]
    %v144 = vld [vmem:[#allocation5 + $0x54] sm:$0xff]
    %v145 = vld [vmem:[#allocation5 + $0x5c] sm:$0xf]
    %v146 = vld [vmem:[#allocation5 + $0x60] sm:$0xff]
    %v147 = vld [vmem:[#allocation5 + $0x68] sm:$0xf]
    %v148 = vld [vmem:[#allocation5 + $0x6c] sm:$0xff]
    %v149 = vld [vmem:[#allocation5 + $0x74] sm:$0xf]
    %v150 = vld [vmem:[#allocation5 + $0x78] sm:$0xff]
    %v151 = vld [vmem:[#allocation5 + $0x80] sm:$0xf]
    %v152 = vld [vmem:[#allocation5 + $0x84] sm:$0xff]
    %v153 = vld [vmem:[#allocation5 + $0x8c] sm:$0xf]
    %v154 = vld [vmem:[#allocation5 + $0x90] sm:$0xff]
    %v155 = vld [vmem:[#allocation5 + $0x98] sm:$0xf]
    %v156 = vld [vmem:[#allocation5 + $0x9c] sm:$0xff]
    %v157 = vld [vmem:[#allocation5 + $0xa4] sm:$0xf]
    %v158 = vld [vmem:[#allocation5 + $0xa8] sm:$0xff]
    %v159 = vld [vmem:[#allocation5 + $0xb0] sm:$0xf]
    %v160 = vld [vmem:[#allocation5 + $0xb4] sm:$0xff]
    %v161 = vld [vmem:[#allocation5 + $0xbc] sm:$0xf]
    %v162 = vld [vmem:[#allocation5 + $0xc0] sm:$0xff]
    %v163 = vld [vmem:[#allocation5 + $0xc8] sm:$0xf]
    %v164 = vld [vmem:[#allocation5 + $0xcc] sm:$0xff]
    %v165 = vld [vmem:[#allocation5 + $0xd4] sm:$0xf]
    %v166 = vld [vmem:[#allocation5 + $0xd8] sm:$0xff]
    %v167 = vld [vmem:[#allocation5 + $0xe0] sm:$0xf]
    %v168 = vld [vmem:[#allocation5 + $0xe4] sm:$0xff]
    %v169 = vld [vmem:[#allocation5 + $0xec] sm:$0xf]
    %v170 = vld [vmem:[#allocation5 + $0xf0] sm:$0xff]
    %v171 = vld [vmem:[#allocation5 + $0xf8] sm:$0xf]
    %v172 = vld [vmem:[#allocation5 + $0xfc] sm:$0xff]
    %v173 = vld [vmem:[#allocation5 + $0x104] sm:$0xf]
    %v174 = vld [vmem:[#allocation5 + $0x108] sm:$0xff]
    %v175 = vld [vmem:[#allocation5 + $0x110] sm:$0xf]
    %v176 = vld [vmem:[#allocation5 + $0x114] sm:$0xff]
    %v177 = vld [vmem:[#allocation5 + $0x11c] sm:$0xf]
    %v178 = vld [vmem:[#allocation5 + $0x120] sm:$0xff]
    %v179 = vld [vmem:[#allocation5 + $0x128] sm:$0xf]
    %v180 = vld [vmem:[#allocation5 + $0x12c] sm:$0xff]
    %v181 = vld [vmem:[#allocation5 + $0x134] sm:$0xf]
    %v182 = vld [vmem:[#allocation5 + $0x138] sm:$0xff]
    %v183 = vld [vmem:[#allocation5 + $0x140] sm:$0xf]
    %v184 = vld [vmem:[#allocation5 + $0x144] sm:$0xff]
    %v185 = vld [vmem:[#allocation5 + $0x14c] sm:$0xf]
    %v186 = vld [vmem:[#allocation5 + $0x150] sm:$0xff]
    %v187 = vld [vmem:[#allocation5 + $0x158] sm:$0xf]
    %v188 = vld [vmem:[#allocation5 + $0x15c] sm:$0xff]
    %v189 = vld [vmem:[#allocation5 + $0x164] sm:$0xf]
    %v190 = vld [vmem:[#allocation5 + $0x168] sm:$0xff]
    %v191 = vld [vmem:[#allocation5 + $0x170] sm:$0xf]
    %v192 = vld [vmem:[#allocation5 + $0x174] sm:$0xff]
    %v193 = vld [vmem:[#allocation5 + $0x17c] sm:$0xf]
    %v194 = vld [vmem:[#allocation5 + $0x180] sm:$0xff]
    %v195 = vld [vmem:[#allocation5 + $0x188] sm:$0xf]
    %v196 = vld [vmem:[#allocation5 + $0x18c] sm:$0xff]
    %v197 = vld [vmem:[#allocation5 + $0x194] sm:$0xf]
    %v198 = vld [vmem:[#allocation5 + $0x198] sm:$0xff]
    %v199 = vld [vmem:[#allocation5 + $0x1a0] sm:$0xf]
    %v200 = vld [vmem:[#allocation5 + $0x1a4] sm:$0xff]
    %v201 = vld [vmem:[#allocation5 + $0x1ac] sm:$0xf]
    %v202 = vld [vmem:[#allocation5 + $0x1b0] sm:$0xff]
    %v203 = vld [vmem:[#allocation5 + $0x1b8] sm:$0xf]
    %v204 = vld [vmem:[#allocation5 + $0x1bc] sm:$0xff]
    %v205 = vld [vmem:[#allocation5 + $0x1c4] sm:$0xf]
    %v206 = vld [vmem:[#allocation5 + $0x1c8] sm:$0xff]
    %v207 = vld [vmem:[#allocation5 + $0x1d0] sm:$0xf]
    %v208 = vld [vmem:[#allocation5 + $0x1d4] sm:$0xff]
    %v209 = vld [vmem:[#allocation5 + $0x1dc] sm:$0xf]
    %v210 = vld [vmem:[#allocation5 + $0x1e0] sm:$0xff]
    %v211 = vld [vmem:[#allocation5 + $0x1e8] sm:$0xf]
    %v212 = vld [vmem:[#allocation5 + $0x1ec] sm:$0xff]
    %v213 = vld [vmem:[#allocation5 + $0x1f4] sm:$0xf]
    %v214 = vld [vmem:[#allocation5 + $0x1f8] sm:$0xff]
    %v215 = vld [vmem:[#allocation5 + $0x200] sm:$0xf]
    %v216 = vld [vmem:[#allocation5 + $0x204] sm:$0xff]
    %v217 = vld [vmem:[#allocation5 + $0x20c] sm:$0xf]
    %v218 = vld [vmem:[#allocation5 + $0x210] sm:$0xff]
    %v219 = vld [vmem:[#allocation5 + $0x218] sm:$0xf]
    %v220 = vld [vmem:[#allocation5 + $0x21c] sm:$0xff]
    %v221 = vld [vmem:[#allocation5 + $0x224] sm:$0xf]
    %v222 = vld [vmem:[#allocation5 + $0x228] sm:$0xff]
    %v223 = vld [vmem:[#allocation5 + $0x230] sm:$0xf]
    %v224 = vld [vmem:[#allocation5 + $0x234] sm:$0xff]
    %v225 = vld [vmem:[#allocation5 + $0x23c] sm:$0xf]
    %v226 = vld [vmem:[#allocation5 + $0x240] sm:$0xff]
    %v227 = vld [vmem:[#allocation5 + $0x248] sm:$0xf]
    %v228 = vld [vmem:[#allocation5 + $0x24c] sm:$0xff]
    %v229 = vld [vmem:[#allocation5 + $0x254] sm:$0xf]
    %v230 = vld [vmem:[#allocation5 + $0x258] sm:$0xff]
    %v231 = vld [vmem:[#allocation5 + $0x260] sm:$0xf]
    %v232 = vld [vmem:[#allocation5 + $0x264] sm:$0xff]
    %v233 = vld [vmem:[#allocation5 + $0x26c] sm:$0xf]
    %v234 = vld [vmem:[#allocation5 + $0x270] sm:$0xff]
    %v235 = vld [vmem:[#allocation5 + $0x278] sm:$0xf]
    %v236 = vld [vmem:[#allocation5 + $0x27c] sm:$0xff]
    %v237 = vld [vmem:[#allocation5 + $0x284] sm:$0xf]
    %v238 = vld [vmem:[#allocation5 + $0x288] sm:$0xff]
    %v239 = vld [vmem:[#allocation5 + $0x290] sm:$0xf]
    %v240 = vld [vmem:[#allocation5 + $0x294] sm:$0xff]
    %v241 = vld [vmem:[#allocation5 + $0x29c] sm:$0xf]
    %v242 = vld [vmem:[#allocation5 + $0x2a0] sm:$0xff]
    %v243 = vld [vmem:[#allocation5 + $0x2a8] sm:$0xf]
    %v244 = vld [vmem:[#allocation5 + $0x2ac] sm:$0xff]
    %v245 = vld [vmem:[#allocation5 + $0x2b4] sm:$0xf]
    %v246 = vld [vmem:[#allocation5 + $0x2b8] sm:$0xff]
    %v247 = vld [vmem:[#allocation5 + $0x2c0] sm:$0xf]
    %v248 = vld [vmem:[#allocation5 + $0x2c4] sm:$0xff]
    %v249 = vld [vmem:[#allocation5 + $0x2cc] sm:$0xf]
    %v250 = vld [vmem:[#allocation5 + $0x2d0] sm:$0xff]
    %v251 = vld [vmem:[#allocation5 + $0x2d8] sm:$0xf]
    %v252 = vld [vmem:[#allocation5 + $0x2dc] sm:$0xff]
    %v253 = vld [vmem:[#allocation5 + $0x2e4] sm:$0xf]
    %v254 = vld [vmem:[#allocation5 + $0x2e8] sm:$0xff]
    %v255 = vld [vmem:[#allocation5 + $0x2f0] sm:$0xf]
    %v256 = vld [vmem:[#allocation5 + $0x2f4] sm:$0xff]
    %v257 = vld [vmem:[#allocation5 + $0x2fc] sm:$0xf]
    %v258 = vld [vmem:[#allocation5 + $0x300] sm:$0xff]
    %v259 = vld [vmem:[#allocation5 + $0x308] sm:$0xf]
    %v260 = vld [vmem:[#allocation5 + $0x30c] sm:$0xff]
    %v261 = vld [vmem:[#allocation5 + $0x314] sm:$0xf]
    %v262 = vld [vmem:[#allocation5 + $0x318] sm:$0xff]
    %v263 = vld [vmem:[#allocation5 + $0x320] sm:$0xf]
    %v264 = vld [vmem:[#allocation5 + $0x324] sm:$0xff]
    %v265 = vld [vmem:[#allocation5 + $0x32c] sm:$0xf]
    %v266 = vld [vmem:[#allocation5 + $0x330] sm:$0xff]
    %v267 = vld [vmem:[#allocation5 + $0x338] sm:$0xf]
    %v268 = vld [vmem:[#allocation5 + $0x33c] sm:$0xff]
    %v269 = vld [vmem:[#allocation5 + $0x344] sm:$0xf]
    %v270 = vld [vmem:[#allocation5 + $0x348] sm:$0xff]
    %v271 = vld [vmem:[#allocation5 + $0x350] sm:$0xf]
    %v272 = vld [vmem:[#allocation5 + $0x354] sm:$0xff]
    %v273 = vld [vmem:[#allocation5 + $0x35c] sm:$0xf]
    %v274 = vld [vmem:[#allocation5 + $0x360] sm:$0xff]
    %v275 = vld [vmem:[#allocation5 + $0x368] sm:$0xf]
    %v276 = vld [vmem:[#allocation5 + $0x36c] sm:$0xff]
    %v277 = vld [vmem:[#allocation5 + $0x374] sm:$0xf]
    %v278 = vld [vmem:[#allocation5 + $0x378] sm:$0xff]
    %v279 = vld [vmem:[#allocation5 + $0x380] sm:$0xf]
    %v280 = vld [vmem:[#allocation5 + $0x384] sm:$0xff]
    %v281 = vld [vmem:[#allocation5 + $0x38c] sm:$0xf]
    %v282 = vld [vmem:[#allocation5 + $0x390] sm:$0xff]
    %v283 = vld [vmem:[#allocation5 + $0x398] sm:$0xf]
    %v284 = vld [vmem:[#allocation5 + $0x39c] sm:$0xff]
    %v285 = vld [vmem:[#allocation5 + $0x3a4] sm:$0xf]
    %v286 = vld [vmem:[#allocation5 + $0x3a8] sm:$0xff]
    %v287 = vld [vmem:[#allocation5 + $0x3b0] sm:$0xf]
    %v288 = vld [vmem:[#allocation5 + $0x3b4] sm:$0xff]
    %v289 = vld [vmem:[#allocation5 + $0x3bc] sm:$0xf]
    %v290 = vld [vmem:[#allocation5 + $0x3c0] sm:$0xff]
    %v291 = vld [vmem:[#allocation5 + $0x3c8] sm:$0xf]
    %v292 = vld [vmem:[#allocation5 + $0x3cc] sm:$0xff]
    %v293 = vld [vmem:[#allocation5 + $0x3d4] sm:$0xf]
    %v294 = vld [vmem:[#allocation5 + $0x3d8] sm:$0xff]
    %v295 = vld [vmem:[#allocation5 + $0x3e0] sm:$0xf]
    %v296 = vld [vmem:[#allocation5 + $0x3e4] sm:$0xff]
    %v297 = vld [vmem:[#allocation5 + $0x3ec] sm:$0xf]
    %v298 = vld [vmem:[#allocation5 + $0x3f0] sm:$0xff]
    %v299 = vld [vmem:[#allocation5 + $0x3f8] sm:$0xf]
    %v300 = vld [vmem:[#allocation5 + $0x3fc] sm:$0xff]
    %v301 = vld [vmem:[#allocation5 + $0x404] sm:$0xf]
    %v302 = vld [vmem:[#allocation5 + $0x408] sm:$0xff]
    %v303 = vld [vmem:[#allocation5 + $0x410] sm:$0xf]
    %v304 = vld [vmem:[#allocation5 + $0x414] sm:$0xff]
    %v305 = vld [vmem:[#allocation5 + $0x41c] sm:$0xf]
    %v306 = vld [vmem:[#allocation5 + $0x420] sm:$0xff]
    %v307 = vld [vmem:[#allocation5 + $0x428] sm:$0xf]
    %v308 = vld [vmem:[#allocation5 + $0x42c] sm:$0xff]
    %v309 = vld [vmem:[#allocation5 + $0x434] sm:$0xf]
    %v310 = vld [vmem:[#allocation5 + $0x438] sm:$0xff]
    %v311 = vld [vmem:[#allocation5 + $0x440] sm:$0xf]
    %v312 = vld [vmem:[#allocation5 + $0x444] sm:$0xff]
    %v313 = vld [vmem:[#allocation5 + $0x44c] sm:$0xf]
    %v314 = vld [vmem:[#allocation5 + $0x450] sm:$0xff]
    %v315 = vld [vmem:[#allocation5 + $0x458] sm:$0xf]
    %v316 = vld [vmem:[#allocation5 + $0x45c] sm:$0xff]
    %v317 = vld [vmem:[#allocation5 + $0x464] sm:$0xf]
    %v318 = vld [vmem:[#allocation5 + $0x468] sm:$0xff]
    %v319 = vld [vmem:[#allocation5 + $0x470] sm:$0xf]
    %v320 = vld [vmem:[#allocation5 + $0x474] sm:$0xff]
    %v321 = vld [vmem:[#allocation5 + $0x47c] sm:$0xf]
    %v322 = vld [vmem:[#allocation5 + $0x480] sm:$0xff]
    %v323 = vld [vmem:[#allocation5 + $0x488] sm:$0xf]
    %v324 = vld [vmem:[#allocation5 + $0x48c] sm:$0xff]
    %v325 = vld [vmem:[#allocation5 + $0x494] sm:$0xf]
    %v326 = vld [vmem:[#allocation5 + $0x498] sm:$0xff]
    %v327 = vld [vmem:[#allocation5 + $0x4a0] sm:$0xf]
    %v328 = vld [vmem:[#allocation5 + $0x4a4] sm:$0xff]
    %v329 = vld [vmem:[#allocation5 + $0x4ac] sm:$0xf]
    %v330 = vld [vmem:[#allocation5 + $0x4b0] sm:$0xff]
    %v331 = vld [vmem:[#allocation5 + $0x4b8] sm:$0xf]
    %v332 = vld [vmem:[#allocation5 + $0x4bc] sm:$0xff]
    %v333 = vld [vmem:[#allocation5 + $0x4c4] sm:$0xf]
    %v334 = vld [vmem:[#allocation5 + $0x4c8] sm:$0xff]
    %v335 = vld [vmem:[#allocation5 + $0x4d0] sm:$0xf]
    %v336 = vld [vmem:[#allocation5 + $0x4d4] sm:$0xff]
    %v337 = vld [vmem:[#allocation5 + $0x4dc] sm:$0xf]
    %v338 = vld [vmem:[#allocation5 + $0x4e0] sm:$0xff]
    %v339 = vld [vmem:[#allocation5 + $0x4e8] sm:$0xf]
    %v340 = vld [vmem:[#allocation5 + $0x4ec] sm:$0xff]
    %v341 = vld [vmem:[#allocation5 + $0x4f4] sm:$0xf]
    %v342 = vld [vmem:[#allocation5 + $0x4f8] sm:$0xff]
    %v343 = vld [vmem:[#allocation5 + $0x500] sm:$0xf]
    %v344 = vld [vmem:[#allocation5 + $0x504] sm:$0xff]
    %v345 = vld [vmem:[#allocation5 + $0x50c] sm:$0xf]
    %v346 = vld [vmem:[#allocation5 + $0x510] sm:$0xff]
    %v347 = vld [vmem:[#allocation5 + $0x518] sm:$0xf]
    %v348 = vld [vmem:[#allocation5 + $0x51c] sm:$0xff]
    %v349 = vld [vmem:[#allocation5 + $0x524] sm:$0xf]
    %v350 = vld [vmem:[#allocation5 + $0x528] sm:$0xff]
    %v351 = vld [vmem:[#allocation5 + $0x530] sm:$0xf]
    %v352 = vld [vmem:[#allocation5 + $0x534] sm:$0xff]
    %v353 = vld [vmem:[#allocation5 + $0x53c] sm:$0xf]
    %v354 = vld [vmem:[%s2] sm:$0x7]
    %v356 = vlaneseq
    %v357 = vshrl.u32 %v356, 7
    %v358 = vsub.s32 0, %v357
    %v359 = vrot.slane %v354, %v358
    %v360 = vlaneseq
    %v361 = vshrl.u32 %v360, 7
    %v362 = vsub.s32 1, %v361
    %v363 = vrot.slane %v354, %v362
    %v364 = vlaneseq
    %v365 = vshrl.u32 %v364, 7
    %v366 = vsub.s32 2, %v365
    %v367 = vrot.slane %v354, %v366
    %v379 = vunpack.c.l.b16 %v122
    %v380 = vunpack.c.h.b16 %v122
    %v381 = vunpack.c.l.b16 %v123
    %v382 = vunpack.c.h.b16 %v123
    %v383 = vunpack.c.l.b16 %v124
    %v384 = vunpack.c.h.b16 %v124
    %v385 = vunpack.c.l.b16 %v125
    %v386 = vunpack.c.l.b16 %v126
    %v387 = vunpack.c.h.b16 %v126
    %v388 = vunpack.c.l.b16 %v127
    %v389 = vunpack.c.h.b16 %v127
    %v390 = vunpack.c.l.b16 %v128
    %v391 = vunpack.c.h.b16 %v128
    %v392 = vunpack.c.l.b16 %v129
    %v393 = vpack.c.b16 %v386, %v379
    %v394 = vpack.c.b16 %v387, %v380
    %v395 = vpack.c.b16 %v388, %v381
    %v396 = vpack.c.b16 %v389, %v382
    %v397 = vpack.c.b16 %v390, %v383
    %v398 = vpack.c.b16 %v391, %v384
    %v399 = vpack.c.b16 %v392, %v385
    %v631 = vunpack.c.l.b16 %v130
    %v632 = vunpack.c.h.b16 %v130
    %v633 = vunpack.c.l.b16 %v131
    %v634 = vunpack.c.l.b16 %v132
    %v635 = vunpack.c.h.b16 %v132
    %v636 = vunpack.c.l.b16 %v133
    %v637 = vunpack.c.l.b16 %v134
    %v638 = vunpack.c.h.b16 %v134
    %v639 = vunpack.c.l.b16 %v135
    %v640 = vunpack.c.l.b16 %v136
    %v641 = vunpack.c.h.b16 %v136
    %v642 = vunpack.c.l.b16 %v137
    %v643 = vunpack.c.l.b16 %v138
    %v644 = vunpack.c.h.b16 %v138
    %v645 = vunpack.c.l.b16 %v139
    %v646 = vunpack.c.l.b16 %v140
    %v647 = vunpack.c.h.b16 %v140
    %v648 = vunpack.c.l.b16 %v141
    %v649 = vunpack.c.l.b16 %v142
    %v650 = vunpack.c.h.b16 %v142
    %v651 = vunpack.c.l.b16 %v143
    %v652 = vunpack.c.l.b16 %v144
    %v653 = vunpack.c.h.b16 %v144
    %v654 = vunpack.c.l.b16 %v145
    %v655 = vunpack.c.l.b16 %v146
    %v656 = vunpack.c.h.b16 %v146
    %v657 = vunpack.c.l.b16 %v147
    %v658 = vunpack.c.l.b16 %v148
    %v659 = vunpack.c.h.b16 %v148
    %v660 = vunpack.c.l.b16 %v149
    %v661 = vunpack.c.l.b16 %v150
    %v662 = vunpack.c.h.b16 %v150
    %v663 = vunpack.c.l.b16 %v151
    %v664 = vunpack.c.l.b16 %v152
    %v665 = vunpack.c.h.b16 %v152
    %v666 = vunpack.c.l.b16 %v153
    %v667 = vunpack.c.l.b16 %v154
    %v668 = vunpack.c.h.b16 %v154
    %v669 = vunpack.c.l.b16 %v155
    %v670 = vunpack.c.l.b16 %v156
    %v671 = vunpack.c.h.b16 %v156
    %v672 = vunpack.c.l.b16 %v157
    %v673 = vunpack.c.l.b16 %v158
    %v674 = vunpack.c.h.b16 %v158
    %v675 = vunpack.c.l.b16 %v159
    %v676 = vunpack.c.l.b16 %v160
    %v677 = vunpack.c.h.b16 %v160
    %v678 = vunpack.c.l.b16 %v161
    %v679 = vunpack.c.l.b16 %v162
    %v680 = vunpack.c.h.b16 %v162
    %v681 = vunpack.c.l.b16 %v163
    %v682 = vunpack.c.l.b16 %v164
    %v683 = vunpack.c.h.b16 %v164
    %v684 = vunpack.c.l.b16 %v165
    %v685 = vunpack.c.l.b16 %v166
    %v686 = vunpack.c.h.b16 %v166
    %v687 = vunpack.c.l.b16 %v167
    %v688 = vunpack.c.l.b16 %v168
    %v689 = vunpack.c.h.b16 %v168
    %v690 = vunpack.c.l.b16 %v169
    %v691 = vunpack.c.l.b16 %v170
    %v692 = vunpack.c.h.b16 %v170
    %v693 = vunpack.c.l.b16 %v171
    %v694 = vunpack.c.l.b16 %v172
    %v695 = vunpack.c.h.b16 %v172
    %v696 = vunpack.c.l.b16 %v173
    %v697 = vunpack.c.l.b16 %v174
    %v698 = vunpack.c.h.b16 %v174
    %v699 = vunpack.c.l.b16 %v175
    %v700 = vunpack.c.l.b16 %v176
    %v701 = vunpack.c.h.b16 %v176
    %v702 = vunpack.c.l.b16 %v177
    %v703 = vunpack.c.l.b16 %v178
    %v704 = vunpack.c.h.b16 %v178
    %v705 = vunpack.c.l.b16 %v179
    %v706 = vunpack.c.l.b16 %v180
    %v707 = vunpack.c.h.b16 %v180
    %v708 = vunpack.c.l.b16 %v181
    %v709 = vunpack.c.l.b16 %v182
    %v710 = vunpack.c.h.b16 %v182
    %v711 = vunpack.c.l.b16 %v183
    %v712 = vunpack.c.l.b16 %v184
    %v713 = vunpack.c.h.b16 %v184
    %v714 = vunpack.c.l.b16 %v185
    %v715 = vunpack.c.l.b16 %v186
    %v716 = vunpack.c.h.b16 %v186
    %v717 = vunpack.c.l.b16 %v187
    %v718 = vunpack.c.l.b16 %v188
    %v719 = vunpack.c.h.b16 %v188
    %v720 = vunpack.c.l.b16 %v189
    %v721 = vunpack.c.l.b16 %v190
    %v722 = vunpack.c.h.b16 %v190
    %v723 = vunpack.c.l.b16 %v191
    %v724 = vunpack.c.l.b16 %v192
    %v725 = vunpack.c.h.b16 %v192
    %v726 = vunpack.c.l.b16 %v193
    %v727 = vunpack.c.l.b16 %v194
    %v728 = vunpack.c.h.b16 %v194
    %v729 = vunpack.c.l.b16 %v195
    %v730 = vunpack.c.l.b16 %v196
    %v731 = vunpack.c.h.b16 %v196
    %v732 = vunpack.c.l.b16 %v197
    %v733 = vunpack.c.l.b16 %v198
    %v734 = vunpack.c.h.b16 %v198
    %v735 = vunpack.c.l.b16 %v199
    %v736 = vunpack.c.l.b16 %v200
    %v737 = vunpack.c.h.b16 %v200
    %v738 = vunpack.c.l.b16 %v201
    %v739 = vunpack.c.l.b16 %v202
    %v740 = vunpack.c.h.b16 %v202
    %v741 = vunpack.c.l.b16 %v203
    %v742 = vunpack.c.l.b16 %v204
    %v743 = vunpack.c.h.b16 %v204
    %v744 = vunpack.c.l.b16 %v205
    %v745 = vunpack.c.l.b16 %v206
    %v746 = vunpack.c.h.b16 %v206
    %v747 = vunpack.c.l.b16 %v207
    %v748 = vunpack.c.l.b16 %v208
    %v749 = vunpack.c.h.b16 %v208
    %v750 = vunpack.c.l.b16 %v209
    %v751 = vunpack.c.l.b16 %v210
    %v752 = vunpack.c.h.b16 %v210
    %v753 = vunpack.c.l.b16 %v211
    %v754 = vunpack.c.l.b16 %v212
    %v755 = vunpack.c.h.b16 %v212
    %v756 = vunpack.c.l.b16 %v213
    %v757 = vunpack.c.l.b16 %v214
    %v758 = vunpack.c.h.b16 %v214
    %v759 = vunpack.c.l.b16 %v215
    %v760 = vunpack.c.l.b16 %v216
    %v761 = vunpack.c.h.b16 %v216
    %v762 = vunpack.c.l.b16 %v217
    %v763 = vunpack.c.l.b16 %v218
    %v764 = vunpack.c.h.b16 %v218
    %v765 = vunpack.c.l.b16 %v219
    %v766 = vunpack.c.l.b16 %v220
    %v767 = vunpack.c.h.b16 %v220
    %v768 = vunpack.c.l.b16 %v221
    %v769 = vunpack.c.l.b16 %v222
    %v770 = vunpack.c.h.b16 %v222
    %v771 = vunpack.c.l.b16 %v223
    %v772 = vunpack.c.l.b16 %v224
    %v773 = vunpack.c.h.b16 %v224
    %v774 = vunpack.c.l.b16 %v225
    %v775 = vunpack.c.l.b16 %v226
    %v776 = vunpack.c.h.b16 %v226
    %v777 = vunpack.c.l.b16 %v227
    %v778 = vunpack.c.l.b16 %v228
    %v779 = vunpack.c.h.b16 %v228
    %v780 = vunpack.c.l.b16 %v229
    %v781 = vunpack.c.l.b16 %v230
    %v782 = vunpack.c.h.b16 %v230
    %v783 = vunpack.c.l.b16 %v231
    %v784 = vunpack.c.l.b16 %v232
    %v785 = vunpack.c.h.b16 %v232
    %v786 = vunpack.c.l.b16 %v233
    %v787 = vunpack.c.l.b16 %v234
    %v788 = vunpack.c.h.b16 %v234
    %v789 = vunpack.c.l.b16 %v235
    %v790 = vunpack.c.l.b16 %v236
    %v791 = vunpack.c.h.b16 %v236
    %v792 = vunpack.c.l.b16 %v237
    %v793 = vunpack.c.l.b16 %v238
    %v794 = vunpack.c.h.b16 %v238
    %v795 = vunpack.c.l.b16 %v239
    %v796 = vunpack.c.l.b16 %v240
    %v797 = vunpack.c.h.b16 %v240
    %v798 = vunpack.c.l.b16 %v241
    %v799 = vunpack.c.l.b16 %v242
    %v800 = vunpack.c.h.b16 %v242
    %v801 = vunpack.c.l.b16 %v243
    %v802 = vunpack.c.l.b16 %v244
    %v803 = vunpack.c.h.b16 %v244
    %v804 = vunpack.c.l.b16 %v245
    %v805 = vunpack.c.l.b16 %v246
    %v806 = vunpack.c.h.b16 %v246
    %v807 = vunpack.c.l.b16 %v247
    %v808 = vunpack.c.l.b16 %v248
    %v809 = vunpack.c.h.b16 %v248
    %v810 = vunpack.c.l.b16 %v249
    %v811 = vunpack.c.l.b16 %v250
    %v812 = vunpack.c.h.b16 %v250
    %v813 = vunpack.c.l.b16 %v251
    %v814 = vunpack.c.l.b16 %v252
    %v815 = vunpack.c.h.b16 %v252
    %v816 = vunpack.c.l.b16 %v253
    %v817 = vunpack.c.l.b16 %v254
    %v818 = vunpack.c.h.b16 %v254
    %v819 = vunpack.c.l.b16 %v255
    %v820 = vunpack.c.l.b16 %v256
    %v821 = vunpack.c.h.b16 %v256
    %v822 = vunpack.c.l.b16 %v257
    %v823 = vunpack.c.l.b16 %v258
    %v824 = vunpack.c.h.b16 %v258
    %v825 = vunpack.c.l.b16 %v259
    %v826 = vunpack.c.l.b16 %v260
    %v827 = vunpack.c.h.b16 %v260
    %v828 = vunpack.c.l.b16 %v261
    %v829 = vunpack.c.l.b16 %v262
    %v830 = vunpack.c.h.b16 %v262
    %v831 = vunpack.c.l.b16 %v263
    %v832 = vunpack.c.l.b16 %v264
    %v833 = vunpack.c.h.b16 %v264
    %v834 = vunpack.c.l.b16 %v265
    %v835 = vunpack.c.l.b16 %v266
    %v836 = vunpack.c.h.b16 %v266
    %v837 = vunpack.c.l.b16 %v267
    %v838 = vunpack.c.l.b16 %v268
    %v839 = vunpack.c.h.b16 %v268
    %v840 = vunpack.c.l.b16 %v269
    %v841 = vunpack.c.l.b16 %v270
    %v842 = vunpack.c.h.b16 %v270
    %v843 = vunpack.c.l.b16 %v271
    %v844 = vunpack.c.l.b16 %v272
    %v845 = vunpack.c.h.b16 %v272
    %v846 = vunpack.c.l.b16 %v273
    %v847 = vunpack.c.l.b16 %v274
    %v848 = vunpack.c.h.b16 %v274
    %v849 = vunpack.c.l.b16 %v275
    %v850 = vunpack.c.l.b16 %v276
    %v851 = vunpack.c.h.b16 %v276
    %v852 = vunpack.c.l.b16 %v277
    %v853 = vunpack.c.l.b16 %v278
    %v854 = vunpack.c.h.b16 %v278
    %v855 = vunpack.c.l.b16 %v279
    %v856 = vunpack.c.l.b16 %v280
    %v857 = vunpack.c.h.b16 %v280
    %v858 = vunpack.c.l.b16 %v281
    %v859 = vunpack.c.l.b16 %v282
    %v860 = vunpack.c.h.b16 %v282
    %v861 = vunpack.c.l.b16 %v283
    %v862 = vunpack.c.l.b16 %v284
    %v863 = vunpack.c.h.b16 %v284
    %v864 = vunpack.c.l.b16 %v285
    %v865 = vunpack.c.l.b16 %v286
    %v866 = vunpack.c.h.b16 %v286
    %v867 = vunpack.c.l.b16 %v287
    %v868 = vunpack.c.l.b16 %v288
    %v869 = vunpack.c.h.b16 %v288
    %v870 = vunpack.c.l.b16 %v289
    %v871 = vunpack.c.l.b16 %v290
    %v872 = vunpack.c.h.b16 %v290
    %v873 = vunpack.c.l.b16 %v291
    %v874 = vunpack.c.l.b16 %v292
    %v875 = vunpack.c.h.b16 %v292
    %v876 = vunpack.c.l.b16 %v293
    %v877 = vunpack.c.l.b16 %v294
    %v878 = vunpack.c.h.b16 %v294
    %v879 = vunpack.c.l.b16 %v295
    %v880 = vunpack.c.l.b16 %v296
    %v881 = vunpack.c.h.b16 %v296
    %v882 = vunpack.c.l.b16 %v297
    %v883 = vunpack.c.l.b16 %v298
    %v884 = vunpack.c.h.b16 %v298
    %v885 = vunpack.c.l.b16 %v299
    %v886 = vunpack.c.l.b16 %v300
    %v887 = vunpack.c.h.b16 %v300
    %v888 = vunpack.c.l.b16 %v301
    %v889 = vunpack.c.l.b16 %v302
    %v890 = vunpack.c.h.b16 %v302
    %v891 = vunpack.c.l.b16 %v303
    %v892 = vunpack.c.l.b16 %v304
    %v893 = vunpack.c.h.b16 %v304
    %v894 = vunpack.c.l.b16 %v305
    %v895 = vunpack.c.l.b16 %v306
    %v896 = vunpack.c.h.b16 %v306
    %v897 = vunpack.c.l.b16 %v307
    %v898 = vunpack.c.l.b16 %v308
    %v899 = vunpack.c.h.b16 %v308
    %v900 = vunpack.c.l.b16 %v309
    %v901 = vunpack.c.l.b16 %v310
    %v902 = vunpack.c.h.b16 %v310
    %v903 = vunpack.c.l.b16 %v311
    %v904 = vunpack.c.l.b16 %v312
    %v905 = vunpack.c.h.b16 %v312
    %v906 = vunpack.c.l.b16 %v313
    %v907 = vunpack.c.l.b16 %v314
    %v908 = vunpack.c.h.b16 %v314
    %v909 = vunpack.c.l.b16 %v315
    %v910 = vunpack.c.l.b16 %v316
    %v911 = vunpack.c.h.b16 %v316
    %v912 = vunpack.c.l.b16 %v317
    %v913 = vunpack.c.l.b16 %v318
    %v914 = vunpack.c.h.b16 %v318
    %v915 = vunpack.c.l.b16 %v319
    %v916 = vunpack.c.l.b16 %v320
    %v917 = vunpack.c.h.b16 %v320
    %v918 = vunpack.c.l.b16 %v321
    %v919 = vunpack.c.l.b16 %v322
    %v920 = vunpack.c.h.b16 %v322
    %v921 = vunpack.c.l.b16 %v323
    %v922 = vunpack.c.l.b16 %v324
    %v923 = vunpack.c.h.b16 %v324
    %v924 = vunpack.c.l.b16 %v325
    %v925 = vunpack.c.l.b16 %v326
    %v926 = vunpack.c.h.b16 %v326
    %v927 = vunpack.c.l.b16 %v327
    %v928 = vunpack.c.l.b16 %v328
    %v929 = vunpack.c.h.b16 %v328
    %v930 = vunpack.c.l.b16 %v329
    %v931 = vunpack.c.l.b16 %v330
    %v932 = vunpack.c.h.b16 %v330
    %v933 = vunpack.c.l.b16 %v331
    %v934 = vunpack.c.l.b16 %v332
    %v935 = vunpack.c.h.b16 %v332
    %v936 = vunpack.c.l.b16 %v333
    %v937 = vunpack.c.l.b16 %v334
    %v938 = vunpack.c.h.b16 %v334
    %v939 = vunpack.c.l.b16 %v335
    %v940 = vunpack.c.l.b16 %v336
    %v941 = vunpack.c.h.b16 %v336
    %v942 = vunpack.c.l.b16 %v337
    %v943 = vunpack.c.l.b16 %v338
    %v944 = vunpack.c.h.b16 %v338
    %v945 = vunpack.c.l.b16 %v339
    %v946 = vunpack.c.l.b16 %v340
    %v947 = vunpack.c.h.b16 %v340
    %v948 = vunpack.c.l.b16 %v341
    %v949 = vunpack.c.l.b16 %v342
    %v950 = vunpack.c.h.b16 %v342
    %v951 = vunpack.c.l.b16 %v343
    %v952 = vunpack.c.l.b16 %v344
    %v953 = vunpack.c.h.b16 %v344
    %v954 = vunpack.c.l.b16 %v345
    %v955 = vunpack.c.l.b16 %v346
    %v956 = vunpack.c.h.b16 %v346
    %v957 = vunpack.c.l.b16 %v347
    %v958 = vunpack.c.l.b16 %v348
    %v959 = vunpack.c.h.b16 %v348
    %v960 = vunpack.c.l.b16 %v349
    %v961 = vunpack.c.l.b16 %v350
    %v962 = vunpack.c.h.b16 %v350
    %v963 = vunpack.c.l.b16 %v351
    %v964 = vunpack.c.l.b16 %v352
    %v965 = vunpack.c.h.b16 %v352
    %v966 = vunpack.c.l.b16 %v353
    %v967 = vpack.c.b16 %v634, %v631
    %v968 = vpack.c.b16 %v635, %v632
    %v969 = vpack.c.b16 %v636, %v633
    %v970 = vpack.c.b16 %v640, %v637
    %v971 = vpack.c.b16 %v641, %v638
    %v972 = vpack.c.b16 %v642, %v639
    %v973 = vpack.c.b16 %v646, %v643
    %v974 = vpack.c.b16 %v647, %v644
    %v975 = vpack.c.b16 %v648, %v645
    %v976 = vpack.c.b16 %v652, %v649
    %v977 = vpack.c.b16 %v653, %v650
    %v978 = vpack.c.b16 %v654, %v651
    %v979 = vpack.c.b16 %v658, %v655
    %v980 = vpack.c.b16 %v659, %v656
    %v981 = vpack.c.b16 %v660, %v657
    %v982 = vpack.c.b16 %v664, %v661
    %v983 = vpack.c.b16 %v665, %v662
    %v984 = vpack.c.b16 %v666, %v663
    %v985 = vpack.c.b16 %v670, %v667
    %v986 = vpack.c.b16 %v671, %v668
    %v987 = vpack.c.b16 %v672, %v669
    %v988 = vpack.c.b16 %v676, %v673
    %v989 = vpack.c.b16 %v677, %v674
    %v990 = vpack.c.b16 %v678, %v675
    %v991 = vpack.c.b16 %v682, %v679
    %v992 = vpack.c.b16 %v683, %v680
    %v993 = vpack.c.b16 %v684, %v681
    %v994 = vpack.c.b16 %v688, %v685
    %v995 = vpack.c.b16 %v689, %v686
    %v996 = vpack.c.b16 %v690, %v687
    %v997 = vpack.c.b16 %v694, %v691
    %v998 = vpack.c.b16 %v695, %v692
    %v999 = vpack.c.b16 %v696, %v693
    %v1000 = vpack.c.b16 %v700, %v697
    %v1001 = vpack.c.b16 %v701, %v698
    %v1002 = vpack.c.b16 %v702, %v699
    %v1003 = vpack.c.b16 %v706, %v703
    %v1004 = vpack.c.b16 %v707, %v704
    %v1005 = vpack.c.b16 %v708, %v705
    %v1006 = vpack.c.b16 %v712, %v709
    %v1007 = vpack.c.b16 %v713, %v710
    %v1008 = vpack.c.b16 %v714, %v711
    %v1009 = vpack.c.b16 %v718, %v715
    %v1010 = vpack.c.b16 %v719, %v716
    %v1011 = vpack.c.b16 %v720, %v717
    %v1012 = vpack.c.b16 %v724, %v721
    %v1013 = vpack.c.b16 %v725, %v722
    %v1014 = vpack.c.b16 %v726, %v723
    %v1015 = vpack.c.b16 %v730, %v727
    %v1016 = vpack.c.b16 %v731, %v728
    %v1017 = vpack.c.b16 %v732, %v729
    %v1018 = vpack.c.b16 %v736, %v733
    %v1019 = vpack.c.b16 %v737, %v734
    %v1020 = vpack.c.b16 %v738, %v735
    %v1021 = vpack.c.b16 %v742, %v739
    %v1022 = vpack.c.b16 %v743, %v740
    %v1023 = vpack.c.b16 %v744, %v741
    %v1024 = vpack.c.b16 %v748, %v745
    %v1025 = vpack.c.b16 %v749, %v746
    %v1026 = vpack.c.b16 %v750, %v747
    %v1027 = vpack.c.b16 %v754, %v751
    %v1028 = vpack.c.b16 %v755, %v752
    %v1029 = vpack.c.b16 %v756, %v753
    %v1030 = vpack.c.b16 %v760, %v757
    %v1031 = vpack.c.b16 %v761, %v758
    %v1032 = vpack.c.b16 %v762, %v759
    %v1033 = vpack.c.b16 %v766, %v763
    %v1034 = vpack.c.b16 %v767, %v764
    %v1035 = vpack.c.b16 %v768, %v765
    %v1036 = vpack.c.b16 %v772, %v769
    %v1037 = vpack.c.b16 %v773, %v770
    %v1038 = vpack.c.b16 %v774, %v771
    %v1039 = vpack.c.b16 %v778, %v775
    %v1040 = vpack.c.b16 %v779, %v776
    %v1041 = vpack.c.b16 %v780, %v777
    %v1042 = vpack.c.b16 %v784, %v781
    %v1043 = vpack.c.b16 %v785, %v782
    %v1044 = vpack.c.b16 %v786, %v783
    %v1045 = vpack.c.b16 %v790, %v787
    %v1046 = vpack.c.b16 %v791, %v788
    %v1047 = vpack.c.b16 %v792, %v789
    %v1048 = vpack.c.b16 %v796, %v793
    %v1049 = vpack.c.b16 %v797, %v794
    %v1050 = vpack.c.b16 %v798, %v795
    %v1051 = vpack.c.b16 %v802, %v799
    %v1052 = vpack.c.b16 %v803, %v800
    %v1053 = vpack.c.b16 %v804, %v801
    %v1054 = vpack.c.b16 %v808, %v805
    %v1055 = vpack.c.b16 %v809, %v806
    %v1056 = vpack.c.b16 %v810, %v807
    %v1057 = vpack.c.b16 %v814, %v811
    %v1058 = vpack.c.b16 %v815, %v812
    %v1059 = vpack.c.b16 %v816, %v813
    %v1060 = vpack.c.b16 %v820, %v817
    %v1061 = vpack.c.b16 %v821, %v818
    %v1062 = vpack.c.b16 %v822, %v819
    %v1063 = vpack.c.b16 %v826, %v823
    %v1064 = vpack.c.b16 %v827, %v824
    %v1065 = vpack.c.b16 %v828, %v825
    %v1066 = vpack.c.b16 %v832, %v829
    %v1067 = vpack.c.b16 %v833, %v830
    %v1068 = vpack.c.b16 %v834, %v831
    %v1069 = vpack.c.b16 %v838, %v835
    %v1070 = vpack.c.b16 %v839, %v836
    %v1071 = vpack.c.b16 %v840, %v837
    %v1072 = vpack.c.b16 %v844, %v841
    %v1073 = vpack.c.b16 %v845, %v842
    %v1074 = vpack.c.b16 %v846, %v843
    %v1075 = vpack.c.b16 %v850, %v847
    %v1076 = vpack.c.b16 %v851, %v848
    %v1077 = vpack.c.b16 %v852, %v849
    %v1078 = vpack.c.b16 %v856, %v853
    %v1079 = vpack.c.b16 %v857, %v854
    %v1080 = vpack.c.b16 %v858, %v855
    %v1081 = vpack.c.b16 %v862, %v859
    %v1082 = vpack.c.b16 %v863, %v860
    %v1083 = vpack.c.b16 %v864, %v861
    %v1084 = vpack.c.b16 %v868, %v865
    %v1085 = vpack.c.b16 %v869, %v866
    %v1086 = vpack.c.b16 %v870, %v867
    %v1087 = vpack.c.b16 %v874, %v871
    %v1088 = vpack.c.b16 %v875, %v872
    %v1089 = vpack.c.b16 %v876, %v873
    %v1090 = vpack.c.b16 %v880, %v877
    %v1091 = vpack.c.b16 %v881, %v878
    %v1092 = vpack.c.b16 %v882, %v879
    %v1093 = vpack.c.b16 %v886, %v883
    %v1094 = vpack.c.b16 %v887, %v884
    %v1095 = vpack.c.b16 %v888, %v885
    %v1096 = vpack.c.b16 %v892, %v889
    %v1097 = vpack.c.b16 %v893, %v890
    %v1098 = vpack.c.b16 %v894, %v891
    %v1099 = vpack.c.b16 %v898, %v895
    %v1100 = vpack.c.b16 %v899, %v896
    %v1101 = vpack.c.b16 %v900, %v897
    %v1102 = vpack.c.b16 %v904, %v901
    %v1103 = vpack.c.b16 %v905, %v902
    %v1104 = vpack.c.b16 %v906, %v903
    %v1105 = vpack.c.b16 %v910, %v907
    %v1106 = vpack.c.b16 %v911, %v908
    %v1107 = vpack.c.b16 %v912, %v909
    %v1108 = vpack.c.b16 %v916, %v913
    %v1109 = vpack.c.b16 %v917, %v914
    %v1110 = vpack.c.b16 %v918, %v915
    %v1111 = vpack.c.b16 %v922, %v919
    %v1112 = vpack.c.b16 %v923, %v920
    %v1113 = vpack.c.b16 %v924, %v921
    %v1114 = vpack.c.b16 %v928, %v925
    %v1115 = vpack.c.b16 %v929, %v926
    %v1116 = vpack.c.b16 %v930, %v927
    %v1117 = vpack.c.b16 %v934, %v931
    %v1118 = vpack.c.b16 %v935, %v932
    %v1119 = vpack.c.b16 %v936, %v933
    %v1120 = vpack.c.b16 %v940, %v937
    %v1121 = vpack.c.b16 %v941, %v938
    %v1122 = vpack.c.b16 %v942, %v939
    %v1123 = vpack.c.b16 %v946, %v943
    %v1124 = vpack.c.b16 %v947, %v944
    %v1125 = vpack.c.b16 %v948, %v945
    %v1126 = vpack.c.b16 %v952, %v949
    %v1127 = vpack.c.b16 %v953, %v950
    %v1128 = vpack.c.b16 %v954, %v951
    %v1129 = vpack.c.b16 %v958, %v955
    %v1130 = vpack.c.b16 %v959, %v956
    %v1131 = vpack.c.b16 %v960, %v957
    %v1132 = vpack.c.b16 %v964, %v961
    %v1133 = vpack.c.b16 %v965, %v962
    %v1134 = vpack.c.b16 %v966, %v963
    %1303 = vmatprep.subr.bf16.mxu0 %v968
    %1304 = vmatpush1.bf16.msra.mxu0 %v967
    %1305 = vmatprep.subr.bf16.mxu0 %v971
    %1306 = vmatpush1.bf16.msra.mxu0 %v970
    %1307 = vmatprep.subr.bf16.mxu0 %v974
    %1308 = vmatpush1.bf16.msra.mxu0 %v973
    %1309 = vmatprep.subr.bf16.mxu0 %v977
    %1310 = vmatpush1.bf16.msra.mxu0 %v976
    %1311 = vmatprep.subr.bf16.mxu0 %v980
    %1312 = vmatpush1.bf16.msra.mxu0 %v979
    %1313 = vmatprep.subr.bf16.mxu0 %v983
    %1314 = vmatpush1.bf16.msra.mxu0 %v982
    %1315 = vmatprep.subr.bf16.mxu0 %v986
    %1316 = vmatpush1.bf16.msra.mxu0 %v985
    %1317 = vmatprep.subr.bf16.mxu0 %v989
    %1318 = vmatpush1.bf16.msra.mxu0 %v988
    %1319 = vmatprep.subr.bf16.mxu0 %v992
    %1320 = vmatpush1.bf16.msra.mxu0 %v991
    %1321 = vmatprep.subr.bf16.mxu0 %v995
    %1322 = vmatpush1.bf16.msra.mxu0 %v994
    %1323 = vmatprep.subr.bf16.mxu0 %v998
    %1324 = vmatpush1.bf16.msra.mxu0 %v997
    %1325 = vmatprep.subr.bf16.mxu0 %v1001
    %1326 = vmatpush1.bf16.msra.mxu0 %v1000
    %1327 = vmatprep.subr.bf16.mxu0 %v1004
    %1328 = vmatpush1.bf16.msra.mxu0 %v1003
    %1329 = vmatprep.subr.bf16.mxu0 %v1007
    %1330 = vmatpush1.bf16.msra.mxu0 %v1006
    %1331 = vmatprep.subr.bf16.mxu0 %v1010
    %1332 = vmatpush1.bf16.msra.mxu0 %v1009
    %1333 = vmatprep.subr.bf16.mxu0 %v1013
    %1334 = vmatpush1.bf16.msra.mxu0 %v1012
    %1335 = vmatprep.mubr.bf16.mxu0 %v394
    %1336 = vmatmul.mubr.bf16.gmra.mrb[0].mxu0 %v393
    %v1337 = vpop.f32.mrb[0].mxu0
    %v1338 = vadd.f32 %v359, %v1337
    %v1339 = vpop.f32.mrb[0].mxu0
    %v1340 = vadd.f32 %v363, %v1339
    %v1341 = vpop.f32.mrb[0].mxu0
    %v1342 = vadd.f32 %v359, %v1341
    %v1343 = vpop.f32.mrb[0].mxu0
    %v1344 = vadd.f32 %v363, %v1343
    %1345 = vdwg.mxu0
    %1346 = vmatprep.subr.bf16.mxu0 %v1016
    %1347 = vmatpush1.bf16.msra.mxu0 %v1015
    %1348 = vmatprep.subr.bf16.mxu0 %v1019
    %1349 = vmatpush1.bf16.msra.mxu0 %v1018
    %1350 = vmatprep.subr.bf16.mxu0 %v1022
    %1351 = vmatpush1.bf16.msra.mxu0 %v1021
    %1352 = vmatprep.subr.bf16.mxu0 %v1025
    %1353 = vmatpush1.bf16.msra.mxu0 %v1024
    %1354 = vmatprep.subr.bf16.mxu0 %v1028
    %1355 = vmatpush1.bf16.msra.mxu0 %v1027
    %1356 = vmatprep.subr.bf16.mxu0 %v1031
    %1357 = vmatpush1.bf16.msra.mxu0 %v1030
    %1358 = vmatprep.subr.bf16.mxu0 %v1034
    %1359 = vmatpush1.bf16.msra.mxu0 %v1033
    %1360 = vmatprep.subr.bf16.mxu0 %v1037
    %1361 = vmatpush1.bf16.msra.mxu0 %v1036
    %1362 = vmatprep.subr.bf16.mxu0 %v1040
    %1363 = vmatpush1.bf16.msra.mxu0 %v1039
    %1364 = vmatprep.subr.bf16.mxu0 %v1043
    %1365 = vmatpush1.bf16.msra.mxu0 %v1042
    %1366 = vmatprep.subr.bf16.mxu0 %v1046
    %1367 = vmatpush1.bf16.msra.mxu0 %v1045
    %1368 = vmatprep.subr.bf16.mxu0 %v1049
    %1369 = vmatpush1.bf16.msra.mxu0 %v1048
    %1370 = vmatprep.subr.bf16.mxu0 %v1052
    %1371 = vmatpush1.bf16.msra.mxu0 %v1051
    %1372 = vmatprep.subr.bf16.mxu0 %v1055
    %1373 = vmatpush1.bf16.msra.mxu0 %v1054
    %1374 = vmatprep.subr.bf16.mxu0 %v1058
    %1375 = vmatpush1.bf16.msra.mxu0 %v1057
    %1376 = vmatprep.subr.bf16.mxu0 %v1061
    %1377 = vmatpush1.bf16.msra.mxu0 %v1060
    %1378 = vmatprep.mubr.bf16.mxu0 %v396
    %1379 = vmatmul.mubr.bf16.gmra.mrb[0].mxu0 %v395
    %v1380 = vpop.f32.mrb[0].mxu0
    %v1381 = vadd.f32 %v1338, %v1380
    %v1382 = vpop.f32.mrb[0].mxu0
    %v1383 = vadd.f32 %v1340, %v1382
    %v1384 = vpop.f32.mrb[0].mxu0
    %v1385 = vadd.f32 %v1342, %v1384
    %v1386 = vpop.f32.mrb[0].mxu0
    %v1387 = vadd.f32 %v1344, %v1386
    %1388 = vdwg.mxu0
    %1389 = vmatprep.subr.bf16.mxu0 %v1064
    %1390 = vmatpush1.bf16.msra.mxu0 %v1063
    %1391 = vmatprep.subr.bf16.mxu0 %v1067
    %1392 = vmatpush1.bf16.msra.mxu0 %v1066
    %1393 = vmatprep.subr.bf16.mxu0 %v1070
    %1394 = vmatpush1.bf16.msra.mxu0 %v1069
    %1395 = vmatprep.subr.bf16.mxu0 %v1073
    %1396 = vmatpush1.bf16.msra.mxu0 %v1072
    %1397 = vmatprep.subr.bf16.mxu0 %v1076
    %1398 = vmatpush1.bf16.msra.mxu0 %v1075
    %1399 = vmatprep.subr.bf16.mxu0 %v1079
    %1400 = vmatpush1.bf16.msra.mxu0 %v1078
    %1401 = vmatprep.subr.bf16.mxu0 %v1082
    %1402 = vmatpush1.bf16.msra.mxu0 %v1081
    %1403 = vmatprep.subr.bf16.mxu0 %v1085
    %1404 = vmatpush1.bf16.msra.mxu0 %v1084
    %1405 = vmatprep.subr.bf16.mxu0 %v1088
    %1406 = vmatpush1.bf16.msra.mxu0 %v1087
    %1407 = vmatprep.subr.bf16.mxu0 %v1091
    %1408 = vmatpush1.bf16.msra.mxu0 %v1090
    %1409 = vmatprep.subr.bf16.mxu0 %v1094
    %1410 = vmatpush1.bf16.msra.mxu0 %v1093
    %1411 = vmatprep.subr.bf16.mxu0 %v1097
    %1412 = vmatpush1.bf16.msra.mxu0 %v1096
    %1413 = vmatprep.subr.bf16.mxu0 %v1100
    %1414 = vmatpush1.bf16.msra.mxu0 %v1099
    %1415 = vmatprep.subr.bf16.mxu0 %v1103
    %1416 = vmatpush1.bf16.msra.mxu0 %v1102
    %1417 = vmatprep.subr.bf16.mxu0 %v1106
    %1418 = vmatpush1.bf16.msra.mxu0 %v1105
    %1419 = vmatprep.subr.bf16.mxu0 %v1109
    %1420 = vmatpush1.bf16.msra.mxu0 %v1108
    %1421 = vmatprep.mubr.bf16.mxu0 %v398
    %1422 = vmatmul.mubr.bf16.gmra.mrb[0].mxu0 %v397
    %v1423 = vpop.f32.mrb[0].mxu0
    %v1424 = vadd.f32 %v1381, %v1423
    %v1425 = vpop.f32.mrb[0].mxu0
    %v1426 = vadd.f32 %v1383, %v1425
    %v1427 = vpop.f32.mrb[0].mxu0
    %v1428 = vadd.f32 %v1385, %v1427
    %v1429 = vpop.f32.mrb[0].mxu0
    %v1430 = vadd.f32 %v1387, %v1429
    %1431 = vdwg.mxu0
    %1432 = vmatprep.subr.bf16.mxu0 %v1112
    %1433 = vmatpush1.bf16.msra.mxu0 %v1111
    %1434 = vmatprep.subr.bf16.mxu0 %v1115
    %1435 = vmatpush1.bf16.msra.mxu0 %v1114
    %1436 = vmatprep.subr.bf16.mxu0 %v1118
    %1437 = vmatpush1.bf16.msra.mxu0 %v1117
    %1438 = vmatprep.subr.bf16.mxu0 %v1121
    %1439 = vmatpush1.bf16.msra.mxu0 %v1120
    %1440 = vmatprep.subr.bf16.mxu0 %v1124
    %1441 = vmatpush1.bf16.msra.mxu0 %v1123
    %1442 = vmatprep.subr.bf16.mxu0 %v1127
    %1443 = vmatpush1.bf16.msra.mxu0 %v1126
    %1444 = vmatprep.subr.bf16.mxu0 %v1130
    %1445 = vmatpush1.bf16.msra.mxu0 %v1129
    %1446 = vmatprep.subr.bf16.mxu0 %v1133
    %1447 = vmatpush1.bf16.msra.mxu0 %v1132
    %1448 = vmatprep.subr.bf16.mxu0 0
    %1449 = vmatpush1.bf16.msra.mxu0 0
    %1450 = vmatprep.subr.bf16.mxu0 0
    %1451 = vmatpush1.bf16.msra.mxu0 0
    %1452 = vmatprep.subr.bf16.mxu0 0
    %1453 = vmatpush1.bf16.msra.mxu0 0
    %1454 = vmatprep.subr.bf16.mxu0 0
    %1455 = vmatpush1.bf16.msra.mxu0 0
    %1456 = vmatprep.subr.bf16.mxu0 0
    %1457 = vmatpush1.bf16.msra.mxu0 0
    %1458 = vmatprep.subr.bf16.mxu0 0
    %1459 = vmatpush1.bf16.msra.mxu0 0
    %1460 = vmatprep.subr.bf16.mxu0 0
    %1461 = vmatpush1.bf16.msra.mxu0 0
    %1462 = vmatprep.subr.bf16.mxu0 0
    %1463 = vmatpush1.bf16.msra.mxu0 0
    %1464 = vmatprep.mubr.bf16.mxu0 0
    %1465 = vmatmul.mubr.bf16.gmra.mrb[0].mxu0 %v399
    %v1466 = vpop.f32.mrb[0].mxu0
    %v1467 = vadd.f32 %v1424, %v1466
    %v1468 = vpop.f32.mrb[0].mxu0
    %v1469 = vadd.f32 %v1426, %v1468
    %v1470 = vpop.f32.mrb[0].mxu0
    %v1471 = vadd.f32 %v1428, %v1470
    %v1472 = vpop.f32.mrb[0].mxu0
    %v1473 = vadd.f32 %v1430, %v1472
    %1474 = vdwg.mxu0
    %1475 = vmatprep.subr.bf16.mxu0 0
    %1476 = vmatpush1.bf16.msra.mxu0 %v969
    %1477 = vmatprep.subr.bf16.mxu0 0
    %1478 = vmatpush1.bf16.msra.mxu0 %v972
    %1479 = vmatprep.subr.bf16.mxu0 0
    %1480 = vmatpush1.bf16.msra.mxu0 %v975
    %1481 = vmatprep.subr.bf16.mxu0 0
    %1482 = vmatpush1.bf16.msra.mxu0 %v978
    %1483 = vmatprep.subr.bf16.mxu0 0
    %1484 = vmatpush1.bf16.msra.mxu0 %v981
    %1485 = vmatprep.subr.bf16.mxu0 0
    %1486 = vmatpush1.bf16.msra.mxu0 %v984
    %1487 = vmatprep.subr.bf16.mxu0 0
    %1488 = vmatpush1.bf16.msra.mxu0 %v987
    %1489 = vmatprep.subr.bf16.mxu0 0
    %1490 = vmatpush1.bf16.msra.mxu0 %v990
    %1491 = vmatprep.subr.bf16.mxu0 0
    %1492 = vmatpush1.bf16.msra.mxu0 %v993
    %1493 = vmatprep.subr.bf16.mxu0 0
    %1494 = vmatpush1.bf16.msra.mxu0 %v996
    %1495 = vmatprep.subr.bf16.mxu0 0
    %1496 = vmatpush1.bf16.msra.mxu0 %v999
    %1497 = vmatprep.subr.bf16.mxu0 0
    %1498 = vmatpush1.bf16.msra.mxu0 %v1002
    %1499 = vmatprep.subr.bf16.mxu0 0
    %1500 = vmatpush1.bf16.msra.mxu0 %v1005
    %1501 = vmatprep.subr.bf16.mxu0 0
    %1502 = vmatpush1.bf16.msra.mxu0 %v1008
    %1503 = vmatprep.subr.bf16.mxu0 0
    %1504 = vmatpush1.bf16.msra.mxu0 %v1011
    %1505 = vmatprep.subr.bf16.mxu0 0
    %1506 = vmatpush1.bf16.msra.mxu0 %v1014
    %1507 = vmatprep.mubr.bf16.mxu0 %v394
    %1508 = vmatmul.mubr.bf16.gmra.mrb[0].mxu0 %v393
    %v1509 = vpop.f32.mrb[0].mxu0
    %v1510 = vadd.f32 %v367, %v1509
    %v1511 = vpop.f32.mrb[0].mxu0
    %v1512 = vpop.f32.mrb[0].mxu0
    %v1513 = vadd.f32 %v367, %v1512
    %v1514 = vpop.f32.mrb[0].mxu0
    %1515 = vdwg.mxu0
    %1516 = vmatprep.subr.bf16.mxu0 0
    %1517 = vmatpush1.bf16.msra.mxu0 %v1017
    %1518 = vmatprep.subr.bf16.mxu0 0
    %1519 = vmatpush1.bf16.msra.mxu0 %v1020
    %1520 = vmatprep.subr.bf16.mxu0 0
    %1521 = vmatpush1.bf16.msra.mxu0 %v1023
    %1522 = vmatprep.subr.bf16.mxu0 0
    %1523 = vmatpush1.bf16.msra.mxu0 %v1026
    %1524 = vmatprep.subr.bf16.mxu0 0
    %1525 = vmatpush1.bf16.msra.mxu0 %v1029
    %1526 = vmatprep.subr.bf16.mxu0 0
    %1527 = vmatpush1.bf16.msra.mxu0 %v1032
    %1528 = vmatprep.subr.bf16.mxu0 0
    %1529 = vmatpush1.bf16.msra.mxu0 %v1035
    %1530 = vmatprep.subr.bf16.mxu0 0
    %1531 = vmatpush1.bf16.msra.mxu0 %v1038
    %1532 = vmatprep.subr.bf16.mxu0 0
    %1533 = vmatpush1.bf16.msra.mxu0 %v1041
    %1534 = vmatprep.subr.bf16.mxu0 0
    %1535 = vmatpush1.bf16.msra.mxu0 %v1044
    %1536 = vmatprep.subr.bf16.mxu0 0
    %1537 = vmatpush1.bf16.msra.mxu0 %v1047
    %1538 = vmatprep.subr.bf16.mxu0 0
    %1539 = vmatpush1.bf16.msra.mxu0 %v1050
    %1540 = vmatprep.subr.bf16.mxu0 0
    %1541 = vmatpush1.bf16.msra.mxu0 %v1053
    %1542 = vmatprep.subr.bf16.mxu0 0
    %1543 = vmatpush1.bf16.msra.mxu0 %v1056
    %1544 = vmatprep.subr.bf16.mxu0 0
    %1545 = vmatpush1.bf16.msra.mxu0 %v1059
    %1546 = vmatprep.subr.bf16.mxu0 0
    %1547 = vmatpush1.bf16.msra.mxu0 %v1062
    %1548 = vmatprep.mubr.bf16.mxu0 %v396
    %1549 = vmatmul.mubr.bf16.gmra.mrb[0].mxu0 %v395
    %v1550 = vpop.f32.mrb[0].mxu0
    %v1551 = vadd.f32 %v1510, %v1550
    %v1552 = vpop.f32.mrb[0].mxu0
    %v1553 = vpop.f32.mrb[0].mxu0
    %v1554 = vadd.f32 %v1513, %v1553
    %v1555 = vpop.f32.mrb[0].mxu0
    %1556 = vdwg.mxu0
    %1557 = vmatprep.subr.bf16.mxu0 0
    %1558 = vmatpush1.bf16.msra.mxu0 %v1065
    %1559 = vmatprep.subr.bf16.mxu0 0
    %1560 = vmatpush1.bf16.msra.mxu0 %v1068
    %1561 = vmatprep.subr.bf16.mxu0 0
    %1562 = vmatpush1.bf16.msra.mxu0 %v1071
    %1563 = vmatprep.subr.bf16.mxu0 0
    %1564 = vmatpush1.bf16.msra.mxu0 %v1074
    %1565 = vmatprep.subr.bf16.mxu0 0
    %1566 = vmatpush1.bf16.msra.mxu0 %v1077
    %1567 = vmatprep.subr.bf16.mxu0 0
    %1568 = vmatpush1.bf16.msra.mxu0 %v1080
    %1569 = vmatprep.subr.bf16.mxu0 0
    %1570 = vmatpush1.bf16.msra.mxu0 %v1083
    %1571 = vmatprep.subr.bf16.mxu0 0
    %1572 = vmatpush1.bf16.msra.mxu0 %v1086
    %1573 = vmatprep.subr.bf16.mxu0 0
    %1574 = vmatpush1.bf16.msra.mxu0 %v1089
    %1575 = vmatprep.subr.bf16.mxu0 0
    %1576 = vmatpush1.bf16.msra.mxu0 %v1092
    %1577 = vmatprep.subr.bf16.mxu0 0
    %1578 = vmatpush1.bf16.msra.mxu0 %v1095
    %1579 = vmatprep.subr.bf16.mxu0 0
    %1580 = vmatpush1.bf16.msra.mxu0 %v1098
    %1581 = vmatprep.subr.bf16.mxu0 0
    %1582 = vmatpush1.bf16.msra.mxu0 %v1101
    %1583 = vmatprep.subr.bf16.mxu0 0
    %1584 = vmatpush1.bf16.msra.mxu0 %v1104
    %1585 = vmatprep.subr.bf16.mxu0 0
    %1586 = vmatpush1.bf16.msra.mxu0 %v1107
    %1587 = vmatprep.subr.bf16.mxu0 0
    %1588 = vmatpush1.bf16.msra.mxu0 %v1110
    %1589 = vmatprep.mubr.bf16.mxu0 %v398
    %1590 = vmatmul.mubr.bf16.gmra.mrb[0].mxu0 %v397
    %v1591 = vpop.f32.mrb[0].mxu0
    %v1592 = vadd.f32 %v1551, %v1591
    %v1593 = vpop.f32.mrb[0].mxu0
    %v1594 = vpop.f32.mrb[0].mxu0
    %v1595 = vadd.f32 %v1554, %v1594
    %v1596 = vpop.f32.mrb[0].mxu0
    %1597 = vdwg.mxu0
    %1598 = vmatprep.subr.bf16.mxu0 0
    %1599 = vmatpush1.bf16.msra.mxu0 %v1113
    %1600 = vmatprep.subr.bf16.mxu0 0
    %1601 = vmatpush1.bf16.msra.mxu0 %v1116
    %1602 = vmatprep.subr.bf16.mxu0 0
    %1603 = vmatpush1.bf16.msra.mxu0 %v1119
    %1604 = vmatprep.subr.bf16.mxu0 0
    %1605 = vmatpush1.bf16.msra.mxu0 %v1122
    %1606 = vmatprep.subr.bf16.mxu0 0
    %1607 = vmatpush1.bf16.msra.mxu0 %v1125
    %1608 = vmatprep.subr.bf16.mxu0 0
    %1609 = vmatpush1.bf16.msra.mxu0 %v1128
    %1610 = vmatprep.subr.bf16.mxu0 0
    %1611 = vmatpush1.bf16.msra.mxu0 %v1131
    %1612 = vmatprep.subr.bf16.mxu0 0
    %1613 = vmatpush1.bf16.msra.mxu0 %v1134
    %1614 = vmatprep.subr.bf16.mxu0 0
    %1615 = vmatpush1.bf16.msra.mxu0 0
    %1616 = vmatprep.subr.bf16.mxu0 0
    %1617 = vmatpush1.bf16.msra.mxu0 0
    %1618 = vmatprep.subr.bf16.mxu0 0
    %1619 = vmatpush1.bf16.msra.mxu0 0
    %1620 = vmatprep.subr.bf16.mxu0 0
    %1621 = vmatpush1.bf16.msra.mxu0 0
    %1622 = vmatprep.subr.bf16.mxu0 0
    %1623 = vmatpush1.bf16.msra.mxu0 0
    %1624 = vmatprep.subr.bf16.mxu0 0
    %1625 = vmatpush1.bf16.msra.mxu0 0
    %1626 = vmatprep.subr.bf16.mxu0 0
    %1627 = vmatpush1.bf16.msra.mxu0 0
    %1628 = vmatprep.subr.bf16.mxu0 0
    %1629 = vmatpush1.bf16.msra.mxu0 0
    %1630 = vmatprep.mubr.bf16.mxu0 0
    %1631 = vmatmul.mubr.bf16.gmra.mrb[0].mxu0 %v399
    %v1632 = vpop.f32.mrb[0].mxu0
    %v1633 = vadd.f32 %v1592, %v1632
    %v1634 = vpop.f32.mrb[0].mxu0
    %v1635 = vpop.f32.mrb[0].mxu0
    %v1636 = vadd.f32 %v1595, %v1635
    %v1637 = vpop.f32.mrb[0].mxu0
    %1638 = vdwg.mxu0
    %v1639 = vmax.f32 %v1467, 0.0
    %v1640 = vmax.f32 %v1469, 0.0
    %v1641 = vmax.f32 %v1633, 0.0
    %v1642 = vmax.f32 %v1471, 0.0
    %v1643 = vmax.f32 %v1473, 0.0
    %v1644 = vmax.f32 %v1636, 0.0
    %v1645 = vpack.c.bf16 %v1642, %v1639
    %v1646 = vpack.c.bf16 %v1643, %v1640
    %v1647 = vpack.c.bf16 %v1644, %v1641
    %v1648 = vld [vmem:[#allocation7] sm:$0xff]
    %v1649 = vld [vmem:[#allocation7 + $0x8] sm:$0xf]
    %v1650 = vld [vmem:[#allocation7 + $0xc] sm:$0xff]
    %v1651 = vld [vmem:[#allocation7 + $0x14] sm:$0xf]
    %v1652 = vld [vmem:[#allocation7 + $0x18] sm:$0xff]
    %v1653 = vld [vmem:[#allocation7 + $0x20] sm:$0xf]
    %v1654 = vld [vmem:[#allocation7 + $0x24] sm:$0xff]
    %v1655 = vld [vmem:[#allocation7 + $0x2c] sm:$0xf]
    %v1656 = vld [vmem:[#allocation7 + $0x30] sm:$0xff]
    %v1657 = vld [vmem:[#allocation7 + $0x38] sm:$0xf]
    %v1658 = vld [vmem:[#allocation7 + $0x3c] sm:$0xff]
    %v1659 = vld [vmem:[#allocation7 + $0x44] sm:$0xf]
    %v1660 = vld [vmem:[#allocation7 + $0x48] sm:$0xff]
    %v1661 = vld [vmem:[#allocation7 + $0x50] sm:$0xf]
    %v1662 = vld [vmem:[#allocation7 + $0x54] sm:$0xff]
    %v1663 = vld [vmem:[#allocation7 + $0x5c] sm:$0xf]
    %v1664 = vld [vmem:[#allocation7 + $0x60] sm:$0xff]
    %v1665 = vld [vmem:[#allocation7 + $0x68] sm:$0xf]
    %v1666 = vld [vmem:[#allocation7 + $0x6c] sm:$0xff]
    %v1667 = vld [vmem:[#allocation7 + $0x74] sm:$0xf]
    %v1668 = vld [vmem:[#allocation7 + $0x78] sm:$0xff]
    %v1669 = vld [vmem:[#allocation7 + $0x80] sm:$0xf]
    %v1670 = vld [vmem:[#allocation7 + $0x84] sm:$0xff]
    %v1671 = vld [vmem:[#allocation7 + $0x8c] sm:$0xf]
    %v1672 = vld [vmem:[#allocation7 + $0x90] sm:$0xff]
    %v1673 = vld [vmem:[#allocation7 + $0x98] sm:$0xf]
    %v1674 = vld [vmem:[#allocation7 + $0x9c] sm:$0xff]
    %v1675 = vld [vmem:[#allocation7 + $0xa4] sm:$0xf]
    %v1676 = vld [vmem:[#allocation7 + $0xa8] sm:$0xff]
    %v1677 = vld [vmem:[#allocation7 + $0xb0] sm:$0xf]
    %v1678 = vld [vmem:[#allocation7 + $0xb4] sm:$0xff]
    %v1679 = vld [vmem:[#allocation7 + $0xbc] sm:$0xf]
    %v1680 = vld [vmem:[#allocation7 + $0xc0] sm:$0xff]
    %v1681 = vld [vmem:[#allocation7 + $0xc8] sm:$0xf]
    %v1682 = vld [vmem:[#allocation7 + $0xcc] sm:$0xff]
    %v1683 = vld [vmem:[#allocation7 + $0xd4] sm:$0xf]
    %v1684 = vld [vmem:[#allocation7 + $0xd8] sm:$0xff]
    %v1685 = vld [vmem:[#allocation7 + $0xe0] sm:$0xf]
    %v1686 = vld [vmem:[#allocation7 + $0xe4] sm:$0xff]
    %v1687 = vld [vmem:[#allocation7 + $0xec] sm:$0xf]
    %v1688 = vld [vmem:[#allocation7 + $0xf0] sm:$0xff]
    %v1689 = vld [vmem:[#allocation7 + $0xf8] sm:$0xf]
    %v1690 = vld [vmem:[#allocation7 + $0xfc] sm:$0xff]
    %v1691 = vld [vmem:[#allocation7 + $0x104] sm:$0xf]
    %v1692 = vld [vmem:[#allocation7 + $0x108] sm:$0xff]
    %v1693 = vld [vmem:[#allocation7 + $0x110] sm:$0xf]
    %v1694 = vld [vmem:[#allocation7 + $0x114] sm:$0xff]
    %v1695 = vld [vmem:[#allocation7 + $0x11c] sm:$0xf]
    %v1696 = vld [vmem:[#allocation7 + $0x120] sm:$0xff]
    %v1697 = vld [vmem:[#allocation7 + $0x128] sm:$0xf]
    %v1698 = vld [vmem:[#allocation7 + $0x12c] sm:$0xff]
    %v1699 = vld [vmem:[#allocation7 + $0x134] sm:$0xf]
    %v1700 = vld [vmem:[#allocation7 + $0x138] sm:$0xff]
    %v1701 = vld [vmem:[#allocation7 + $0x140] sm:$0xf]
    %v1702 = vld [vmem:[#allocation7 + $0x144] sm:$0xff]
    %v1703 = vld [vmem:[#allocation7 + $0x14c] sm:$0xf]
    %v1704 = vld [vmem:[#allocation7 + $0x150] sm:$0xff]
    %v1705 = vld [vmem:[#allocation7 + $0x158] sm:$0xf]
    %v1706 = vld [vmem:[#allocation7 + $0x15c] sm:$0xff]
    %v1707 = vld [vmem:[#allocation7 + $0x164] sm:$0xf]
    %v1708 = vld [vmem:[#allocation7 + $0x168] sm:$0xff]
    %v1709 = vld [vmem:[#allocation7 + $0x170] sm:$0xf]
    %v1710 = vld [vmem:[#allocation7 + $0x174] sm:$0xff]
    %v1711 = vld [vmem:[#allocation7 + $0x17c] sm:$0xf]
    %v1712 = vld [vmem:[#allocation7 + $0x180] sm:$0xff]
    %v1713 = vld [vmem:[#allocation7 + $0x188] sm:$0xf]
    %v1714 = vld [vmem:[#allocation7 + $0x18c] sm:$0xff]
    %v1715 = vld [vmem:[#allocation7 + $0x194] sm:$0xf]
    %v1716 = vld [vmem:[#allocation7 + $0x198] sm:$0xff]
    %v1717 = vld [vmem:[#allocation7 + $0x1a0] sm:$0xf]
    %v1718 = vld [vmem:[#allocation7 + $0x1a4] sm:$0xff]
    %v1719 = vld [vmem:[#allocation7 + $0x1ac] sm:$0xf]
    %v1720 = vld [vmem:[#allocation7 + $0x1b0] sm:$0xff]
    %v1721 = vld [vmem:[#allocation7 + $0x1b8] sm:$0xf]
    %v1722 = vld [vmem:[#allocation7 + $0x1bc] sm:$0xff]
    %v1723 = vld [vmem:[#allocation7 + $0x1c4] sm:$0xf]
    %v1724 = vld [vmem:[#allocation7 + $0x1c8] sm:$0xff]
    %v1725 = vld [vmem:[#allocation7 + $0x1d0] sm:$0xf]
    %v1726 = vld [vmem:[#allocation7 + $0x1d4] sm:$0xff]
    %v1727 = vld [vmem:[#allocation7 + $0x1dc] sm:$0xf]
    %v1728 = vld [vmem:[#allocation7 + $0x1e0] sm:$0xff]
    %v1729 = vld [vmem:[#allocation7 + $0x1e8] sm:$0xf]
    %v1730 = vld [vmem:[#allocation7 + $0x1ec] sm:$0xff]
    %v1731 = vld [vmem:[#allocation7 + $0x1f4] sm:$0xf]
    %v1732 = vld [vmem:[#allocation7 + $0x1f8] sm:$0xff]
    %v1733 = vld [vmem:[#allocation7 + $0x200] sm:$0xf]
    %v1734 = vld [vmem:[#allocation7 + $0x204] sm:$0xff]
    %v1735 = vld [vmem:[#allocation7 + $0x20c] sm:$0xf]
    %v1736 = vld [vmem:[#allocation7 + $0x210] sm:$0xff]
    %v1737 = vld [vmem:[#allocation7 + $0x218] sm:$0xf]
    %v1738 = vld [vmem:[#allocation7 + $0x21c] sm:$0xff]
    %v1739 = vld [vmem:[#allocation7 + $0x224] sm:$0xf]
    %v1740 = vld [vmem:[#allocation7 + $0x228] sm:$0xff]
    %v1741 = vld [vmem:[#allocation7 + $0x230] sm:$0xf]
    %v1742 = vld [vmem:[#allocation7 + $0x234] sm:$0xff]
    %v1743 = vld [vmem:[#allocation7 + $0x23c] sm:$0xf]
    %v1744 = vld [vmem:[%s4] sm:$0x7]
    %v1746 = vlaneseq
    %v1747 = vshrl.u32 %v1746, 7
    %v1748 = vsub.s32 0, %v1747
    %v1749 = vrot.slane %v1744, %v1748
    %v1750 = vlaneseq
    %v1751 = vshrl.u32 %v1750, 7
    %v1752 = vsub.s32 1, %v1751
    %v1753 = vrot.slane %v1744, %v1752
    %v1754 = vlaneseq
    %v1755 = vshrl.u32 %v1754, 7
    %v1756 = vsub.s32 2, %v1755
    %v1757 = vrot.slane %v1744, %v1756
    %v1857 = vunpack.c.l.b16 %v1648
    %v1858 = vunpack.c.h.b16 %v1648
    %v1859 = vunpack.c.l.b16 %v1649
    %v1860 = vunpack.c.l.b16 %v1650
    %v1861 = vunpack.c.h.b16 %v1650
    %v1862 = vunpack.c.l.b16 %v1651
    %v1863 = vunpack.c.l.b16 %v1652
    %v1864 = vunpack.c.h.b16 %v1652
    %v1865 = vunpack.c.l.b16 %v1653
    %v1866 = vunpack.c.l.b16 %v1654
    %v1867 = vunpack.c.h.b16 %v1654
    %v1868 = vunpack.c.l.b16 %v1655
    %v1869 = vunpack.c.l.b16 %v1656
    %v1870 = vunpack.c.h.b16 %v1656
    %v1871 = vunpack.c.l.b16 %v1657
    %v1872 = vunpack.c.l.b16 %v1658
    %v1873 = vunpack.c.h.b16 %v1658
    %v1874 = vunpack.c.l.b16 %v1659
    %v1875 = vunpack.c.l.b16 %v1660
    %v1876 = vunpack.c.h.b16 %v1660
    %v1877 = vunpack.c.l.b16 %v1661
    %v1878 = vunpack.c.l.b16 %v1662
    %v1879 = vunpack.c.h.b16 %v1662
    %v1880 = vunpack.c.l.b16 %v1663
    %v1881 = vunpack.c.l.b16 %v1664
    %v1882 = vunpack.c.h.b16 %v1664
    %v1883 = vunpack.c.l.b16 %v1665
    %v1884 = vunpack.c.l.b16 %v1666
    %v1885 = vunpack.c.h.b16 %v1666
    %v1886 = vunpack.c.l.b16 %v1667
    %v1887 = vunpack.c.l.b16 %v1668
    %v1888 = vunpack.c.h.b16 %v1668
    %v1889 = vunpack.c.l.b16 %v1669
    %v1890 = vunpack.c.l.b16 %v1670
    %v1891 = vunpack.c.h.b16 %v1670
    %v1892 = vunpack.c.l.b16 %v1671
    %v1893 = vunpack.c.l.b16 %v1672
    %v1894 = vunpack.c.h.b16 %v1672
    %v1895 = vunpack.c.l.b16 %v1673
    %v1896 = vunpack.c.l.b16 %v1674
    %v1897 = vunpack.c.h.b16 %v1674
    %v1898 = vunpack.c.l.b16 %v1675
    %v1899 = vunpack.c.l.b16 %v1676
    %v1900 = vunpack.c.h.b16 %v1676
    %v1901 = vunpack.c.l.b16 %v1677
    %v1902 = vunpack.c.l.b16 %v1678
    %v1903 = vunpack.c.h.b16 %v1678
    %v1904 = vunpack.c.l.b16 %v1679
    %v1905 = vunpack.c.l.b16 %v1680
    %v1906 = vunpack.c.h.b16 %v1680
    %v1907 = vunpack.c.l.b16 %v1681
    %v1908 = vunpack.c.l.b16 %v1682
    %v1909 = vunpack.c.h.b16 %v1682
    %v1910 = vunpack.c.l.b16 %v1683
    %v1911 = vunpack.c.l.b16 %v1684
    %v1912 = vunpack.c.h.b16 %v1684
    %v1913 = vunpack.c.l.b16 %v1685
    %v1914 = vunpack.c.l.b16 %v1686
    %v1915 = vunpack.c.h.b16 %v1686
    %v1916 = vunpack.c.l.b16 %v1687
    %v1917 = vunpack.c.l.b16 %v1688
    %v1918 = vunpack.c.h.b16 %v1688
    %v1919 = vunpack.c.l.b16 %v1689
    %v1920 = vunpack.c.l.b16 %v1690
    %v1921 = vunpack.c.h.b16 %v1690
    %v1922 = vunpack.c.l.b16 %v1691
    %v1923 = vunpack.c.l.b16 %v1692
    %v1924 = vunpack.c.h.b16 %v1692
    %v1925 = vunpack.c.l.b16 %v1693
    %v1926 = vunpack.c.l.b16 %v1694
    %v1927 = vunpack.c.h.b16 %v1694
    %v1928 = vunpack.c.l.b16 %v1695
    %v1929 = vunpack.c.l.b16 %v1696
    %v1930 = vunpack.c.h.b16 %v1696
    %v1931 = vunpack.c.l.b16 %v1697
    %v1932 = vunpack.c.l.b16 %v1698
    %v1933 = vunpack.c.h.b16 %v1698
    %v1934 = vunpack.c.l.b16 %v1699
    %v1935 = vunpack.c.l.b16 %v1700
    %v1936 = vunpack.c.h.b16 %v1700
    %v1937 = vunpack.c.l.b16 %v1701
    %v1938 = vunpack.c.l.b16 %v1702
    %v1939 = vunpack.c.h.b16 %v1702
    %v1940 = vunpack.c.l.b16 %v1703
    %v1941 = vunpack.c.l.b16 %v1704
    %v1942 = vunpack.c.h.b16 %v1704
    %v1943 = vunpack.c.l.b16 %v1705
    %v1944 = vunpack.c.l.b16 %v1706
    %v1945 = vunpack.c.h.b16 %v1706
    %v1946 = vunpack.c.l.b16 %v1707
    %v1947 = vunpack.c.l.b16 %v1708
    %v1948 = vunpack.c.h.b16 %v1708
    %v1949 = vunpack.c.l.b16 %v1709
    %v1950 = vunpack.c.l.b16 %v1710
    %v1951 = vunpack.c.h.b16 %v1710
    %v1952 = vunpack.c.l.b16 %v1711
    %v1953 = vunpack.c.l.b16 %v1712
    %v1954 = vunpack.c.h.b16 %v1712
    %v1955 = vunpack.c.l.b16 %v1713
    %v1956 = vunpack.c.l.b16 %v1714
    %v1957 = vunpack.c.h.b16 %v1714
    %v1958 = vunpack.c.l.b16 %v1715
    %v1959 = vunpack.c.l.b16 %v1716
    %v1960 = vunpack.c.h.b16 %v1716
    %v1961 = vunpack.c.l.b16 %v1717
    %v1962 = vunpack.c.l.b16 %v1718
    %v1963 = vunpack.c.h.b16 %v1718
    %v1964 = vunpack.c.l.b16 %v1719
    %v1965 = vunpack.c.l.b16 %v1720
    %v1966 = vunpack.c.h.b16 %v1720
    %v1967 = vunpack.c.l.b16 %v1721
    %v1968 = vunpack.c.l.b16 %v1722
    %v1969 = vunpack.c.h.b16 %v1722
    %v1970 = vunpack.c.l.b16 %v1723
    %v1971 = vunpack.c.l.b16 %v1724
    %v1972 = vunpack.c.h.b16 %v1724
    %v1973 = vunpack.c.l.b16 %v1725
    %v1974 = vunpack.c.l.b16 %v1726
    %v1975 = vunpack.c.h.b16 %v1726
    %v1976 = vunpack.c.l.b16 %v1727
    %v1977 = vunpack.c.l.b16 %v1728
    %v1978 = vunpack.c.h.b16 %v1728
    %v1979 = vunpack.c.l.b16 %v1729
    %v1980 = vunpack.c.l.b16 %v1730
    %v1981 = vunpack.c.h.b16 %v1730
    %v1982 = vunpack.c.l.b16 %v1731
    %v1983 = vunpack.c.l.b16 %v1732
    %v1984 = vunpack.c.h.b16 %v1732
    %v1985 = vunpack.c.l.b16 %v1733
    %v1986 = vunpack.c.l.b16 %v1734
    %v1987 = vunpack.c.h.b16 %v1734
    %v1988 = vunpack.c.l.b16 %v1735
    %v1989 = vunpack.c.l.b16 %v1736
    %v1990 = vunpack.c.h.b16 %v1736
    %v1991 = vunpack.c.l.b16 %v1737
    %v1992 = vunpack.c.l.b16 %v1738
    %v1993 = vunpack.c.h.b16 %v1738
    %v1994 = vunpack.c.l.b16 %v1739
    %v1995 = vunpack.c.l.b16 %v1740
    %v1996 = vunpack.c.h.b16 %v1740
    %v1997 = vunpack.c.l.b16 %v1741
    %v1998 = vunpack.c.l.b16 %v1742
    %v1999 = vunpack.c.h.b16 %v1742
    %v2000 = vunpack.c.l.b16 %v1743
    %v2001 = vpack.c.b16 %v1860, %v1857
    %v2002 = vpack.c.b16 %v1861, %v1858
    %v2003 = vpack.c.b16 %v1862, %v1859
    %v2004 = vpack.c.b16 %v1866, %v1863
    %v2005 = vpack.c.b16 %v1867, %v1864
    %v2006 = vpack.c.b16 %v1868, %v1865
    %v2007 = vpack.c.b16 %v1872, %v1869
    %v2008 = vpack.c.b16 %v1873, %v1870
    %v2009 = vpack.c.b16 %v1874, %v1871
    %v2010 = vpack.c.b16 %v1878, %v1875
    %v2011 = vpack.c.b16 %v1879, %v1876
    %v2012 = vpack.c.b16 %v1880, %v1877
    %v2013 = vpack.c.b16 %v1884, %v1881
    %v2014 = vpack.c.b16 %v1885, %v1882
    %v2015 = vpack.c.b16 %v1886, %v1883
    %v2016 = vpack.c.b16 %v1890, %v1887
    %v2017 = vpack.c.b16 %v1891, %v1888
    %v2018 = vpack.c.b16 %v1892, %v1889
    %v2019 = vpack.c.b16 %v1896, %v1893
    %v2020 = vpack.c.b16 %v1897, %v1894
    %v2021 = vpack.c.b16 %v1898, %v1895
    %v2022 = vpack.c.b16 %v1902, %v1899
    %v2023 = vpack.c.b16 %v1903, %v1900
    %v2024 = vpack.c.b16 %v1904, %v1901
    %v2025 = vpack.c.b16 %v1908, %v1905
    %v2026 = vpack.c.b16 %v1909, %v1906
    %v2027 = vpack.c.b16 %v1910, %v1907
    %v2028 = vpack.c.b16 %v1914, %v1911
    %v2029 = vpack.c.b16 %v1915, %v1912
    %v2030 = vpack.c.b16 %v1916, %v1913
    %v2031 = vpack.c.b16 %v1920, %v1917
    %v2032 = vpack.c.b16 %v1921, %v1918
    %v2033 = vpack.c.b16 %v1922, %v1919
    %v2034 = vpack.c.b16 %v1926, %v1923
    %v2035 = vpack.c.b16 %v1927, %v1924
    %v2036 = vpack.c.b16 %v1928, %v1925
    %v2037 = vpack.c.b16 %v1932, %v1929
    %v2038 = vpack.c.b16 %v1933, %v1930
    %v2039 = vpack.c.b16 %v1934, %v1931
    %v2040 = vpack.c.b16 %v1938, %v1935
    %v2041 = vpack.c.b16 %v1939, %v1936
    %v2042 = vpack.c.b16 %v1940, %v1937
    %v2043 = vpack.c.b16 %v1944, %v1941
    %v2044 = vpack.c.b16 %v1945, %v1942
    %v2045 = vpack.c.b16 %v1946, %v1943
    %v2046 = vpack.c.b16 %v1950, %v1947
    %v2047 = vpack.c.b16 %v1951, %v1948
    %v2048 = vpack.c.b16 %v1952, %v1949
    %v2049 = vpack.c.b16 %v1956, %v1953
    %v2050 = vpack.c.b16 %v1957, %v1954
    %v2051 = vpack.c.b16 %v1958, %v1955
    %v2052 = vpack.c.b16 %v1962, %v1959
    %v2053 = vpack.c.b16 %v1963, %v1960
    %v2054 = vpack.c.b16 %v1964, %v1961
    %v2055 = vpack.c.b16 %v1968, %v1965
    %v2056 = vpack.c.b16 %v1969, %v1966
    %v2057 = vpack.c.b16 %v1970, %v1967
    %v2058 = vpack.c.b16 %v1974, %v1971
    %v2059 = vpack.c.b16 %v1975, %v1972
    %v2060 = vpack.c.b16 %v1976, %v1973
    %v2061 = vpack.c.b16 %v1980, %v1977
    %v2062 = vpack.c.b16 %v1981, %v1978
    %v2063 = vpack.c.b16 %v1982, %v1979
    %v2064 = vpack.c.b16 %v1986, %v1983
    %v2065 = vpack.c.b16 %v1987, %v1984
    %v2066 = vpack.c.b16 %v1988, %v1985
    %v2067 = vpack.c.b16 %v1992, %v1989
    %v2068 = vpack.c.b16 %v1993, %v1990
    %v2069 = vpack.c.b16 %v1994, %v1991
    %v2070 = vpack.c.b16 %v1998, %v1995
    %v2071 = vpack.c.b16 %v1999, %v1996
    %v2072 = vpack.c.b16 %v2000, %v1997
    %2145 = vmatprep.subr.bf16.mxu0 %v2002
    %2146 = vmatpush1.bf16.msra.mxu0 %v2001
    %2147 = vmatprep.subr.bf16.mxu0 %v2005
    %2148 = vmatpush1.bf16.msra.mxu0 %v2004
    %2149 = vmatprep.subr.bf16.mxu0 %v2008
    %2150 = vmatpush1.bf16.msra.mxu0 %v2007
    %2151 = vmatprep.subr.bf16.mxu0 %v2011
    %2152 = vmatpush1.bf16.msra.mxu0 %v2010
    %2153 = vmatprep.subr.bf16.mxu0 %v2014
    %2154 = vmatpush1.bf16.msra.mxu0 %v2013
    %2155 = vmatprep.subr.bf16.mxu0 %v2017
    %2156 = vmatpush1.bf16.msra.mxu0 %v2016
    %2157 = vmatprep.subr.bf16.mxu0 %v2020
    %2158 = vmatpush1.bf16.msra.mxu0 %v2019
    %2159 = vmatprep.subr.bf16.mxu0 %v2023
    %2160 = vmatpush1.bf16.msra.mxu0 %v2022
    %2161 = vmatprep.subr.bf16.mxu0 %v2026
    %2162 = vmatpush1.bf16.msra.mxu0 %v2025
    %2163 = vmatprep.subr.bf16.mxu0 %v2029
    %2164 = vmatpush1.bf16.msra.mxu0 %v2028
    %2165 = vmatprep.subr.bf16.mxu0 %v2032
    %2166 = vmatpush1.bf16.msra.mxu0 %v2031
    %2167 = vmatprep.subr.bf16.mxu0 %v2035
    %2168 = vmatpush1.bf16.msra.mxu0 %v2034
    %2169 = vmatprep.subr.bf16.mxu0 %v2038
    %2170 = vmatpush1.bf16.msra.mxu0 %v2037
    %2171 = vmatprep.subr.bf16.mxu0 %v2041
    %2172 = vmatpush1.bf16.msra.mxu0 %v2040
    %2173 = vmatprep.subr.bf16.mxu0 %v2044
    %2174 = vmatpush1.bf16.msra.mxu0 %v2043
    %2175 = vmatprep.subr.bf16.mxu0 %v2047
    %2176 = vmatpush1.bf16.msra.mxu0 %v2046
    %2177 = vmatprep.mubr.bf16.mxu0 %v1646
    %2178 = vmatmul.mubr.bf16.gmra.mrb[0].mxu0 %v1645
    %v2179 = vpop.f32.mrb[0].mxu0
    %v2180 = vadd.f32 %v1749, %v2179
    %v2181 = vpop.f32.mrb[0].mxu0
    %v2182 = vadd.f32 %v1753, %v2181
    %v2183 = vpop.f32.mrb[0].mxu0
    %v2184 = vadd.f32 %v1749, %v2183
    %v2185 = vpop.f32.mrb[0].mxu0
    %v2186 = vadd.f32 %v1753, %v2185
    %2187 = vdwg.mxu0
    %2188 = vmatprep.subr.bf16.mxu0 %v2050
    %2189 = vmatpush1.bf16.msra.mxu0 %v2049
    %2190 = vmatprep.subr.bf16.mxu0 %v2053
    %2191 = vmatpush1.bf16.msra.mxu0 %v2052
    %2192 = vmatprep.subr.bf16.mxu0 %v2056
    %2193 = vmatpush1.bf16.msra.mxu0 %v2055
    %2194 = vmatprep.subr.bf16.mxu0 %v2059
    %2195 = vmatpush1.bf16.msra.mxu0 %v2058
    %2196 = vmatprep.subr.bf16.mxu0 %v2062
    %2197 = vmatpush1.bf16.msra.mxu0 %v2061
    %2198 = vmatprep.subr.bf16.mxu0 %v2065
    %2199 = vmatpush1.bf16.msra.mxu0 %v2064
    %2200 = vmatprep.subr.bf16.mxu0 %v2068
    %2201 = vmatpush1.bf16.msra.mxu0 %v2067
    %2202 = vmatprep.subr.bf16.mxu0 %v2071
    %2203 = vmatpush1.bf16.msra.mxu0 %v2070
    %2204 = vmatprep.subr.bf16.mxu0 0
    %2205 = vmatpush1.bf16.msra.mxu0 0
    %2206 = vmatprep.subr.bf16.mxu0 0
    %2207 = vmatpush1.bf16.msra.mxu0 0
    %2208 = vmatprep.subr.bf16.mxu0 0
    %2209 = vmatpush1.bf16.msra.mxu0 0
    %2210 = vmatprep.subr.bf16.mxu0 0
    %2211 = vmatpush1.bf16.msra.mxu0 0
    %2212 = vmatprep.subr.bf16.mxu0 0
    %2213 = vmatpush1.bf16.msra.mxu0 0
    %2214 = vmatprep.subr.bf16.mxu0 0
    %2215 = vmatpush1.bf16.msra.mxu0 0
    %2216 = vmatprep.subr.bf16.mxu0 0
    %2217 = vmatpush1.bf16.msra.mxu0 0
    %2218 = vmatprep.subr.bf16.mxu0 0
    %2219 = vmatpush1.bf16.msra.mxu0 0
    %2220 = vmatprep.mubr.bf16.mxu0 0
    %2221 = vmatmul.mubr.bf16.gmra.mrb[0].mxu0 %v1647
    %v2222 = vpop.f32.mrb[0].mxu0
    %v2223 = vadd.f32 %v2180, %v2222
    %v2224 = vpop.f32.mrb[0].mxu0
    %v2225 = vadd.f32 %v2182, %v2224
    %v2226 = vpop.f32.mrb[0].mxu0
    %v2227 = vadd.f32 %v2184, %v2226
    %v2228 = vpop.f32.mrb[0].mxu0
    %v2229 = vadd.f32 %v2186, %v2228
    %2230 = vdwg.mxu0
    %2231 = vmatprep.subr.bf16.mxu0 0
    %2232 = vmatpush1.bf16.msra.mxu0 %v2003
    %2233 = vmatprep.subr.bf16.mxu0 0
    %2234 = vmatpush1.bf16.msra.mxu0 %v2006
    %2235 = vmatprep.subr.bf16.mxu0 0
    %2236 = vmatpush1.bf16.msra.mxu0 %v2009
    %2237 = vmatprep.subr.bf16.mxu0 0
    %2238 = vmatpush1.bf16.msra.mxu0 %v2012
    %2239 = vmatprep.subr.bf16.mxu0 0
    %2240 = vmatpush1.bf16.msra.mxu0 %v2015
    %2241 = vmatprep.subr.bf16.mxu0 0
    %2242 = vmatpush1.bf16.msra.mxu0 %v2018
    %2243 = vmatprep.subr.bf16.mxu0 0
    %2244 = vmatpush1.bf16.msra.mxu0 %v2021
    %2245 = vmatprep.subr.bf16.mxu0 0
    %2246 = vmatpush1.bf16.msra.mxu0 %v2024
    %2247 = vmatprep.subr.bf16.mxu0 0
    %2248 = vmatpush1.bf16.msra.mxu0 %v2027
    %2249 = vmatprep.subr.bf16.mxu0 0
    %2250 = vmatpush1.bf16.msra.mxu0 %v2030
    %2251 = vmatprep.subr.bf16.mxu0 0
    %2252 = vmatpush1.bf16.msra.mxu0 %v2033
    %2253 = vmatprep.subr.bf16.mxu0 0
    %2254 = vmatpush1.bf16.msra.mxu0 %v2036
    %2255 = vmatprep.subr.bf16.mxu0 0
    %2256 = vmatpush1.bf16.msra.mxu0 %v2039
    %2257 = vmatprep.subr.bf16.mxu0 0
    %2258 = vmatpush1.bf16.msra.mxu0 %v2042
    %2259 = vmatprep.subr.bf16.mxu0 0
    %2260 = vmatpush1.bf16.msra.mxu0 %v2045
    %2261 = vmatprep.subr.bf16.mxu0 0
    %2262 = vmatpush1.bf16.msra.mxu0 %v2048
    %2263 = vmatprep.mubr.bf16.mxu0 %v1646
    %2264 = vmatmul.mubr.bf16.gmra.mrb[0].mxu0 %v1645
    %v2265 = vpop.f32.mrb[0].mxu0
    %v2266 = vadd.f32 %v1757, %v2265
    %v2267 = vpop.f32.mrb[0].mxu0
    %v2268 = vpop.f32.mrb[0].mxu0
    %v2269 = vadd.f32 %v1757, %v2268
    %v2270 = vpop.f32.mrb[0].mxu0
    %2271 = vdwg.mxu0
    %2272 = vmatprep.subr.bf16.mxu0 0
    %2273 = vmatpush1.bf16.msra.mxu0 %v2051
    %2274 = vmatprep.subr.bf16.mxu0 0
    %2275 = vmatpush1.bf16.msra.mxu0 %v2054
    %2276 = vmatprep.subr.bf16.mxu0 0
    %2277 = vmatpush1.bf16.msra.mxu0 %v2057
    %2278 = vmatprep.subr.bf16.mxu0 0
    %2279 = vmatpush1.bf16.msra.mxu0 %v2060
    %2280 = vmatprep.subr.bf16.mxu0 0
    %2281 = vmatpush1.bf16.msra.mxu0 %v2063
    %2282 = vmatprep.subr.bf16.mxu0 0
    %2283 = vmatpush1.bf16.msra.mxu0 %v2066
    %2284 = vmatprep.subr.bf16.mxu0 0
    %2285 = vmatpush1.bf16.msra.mxu0 %v2069
    %2286 = vmatprep.subr.bf16.mxu0 0
    %2287 = vmatpush1.bf16.msra.mxu0 %v2072
    %2288 = vmatprep.subr.bf16.mxu0 0
    %2289 = vmatpush1.bf16.msra.mxu0 0
    %2290 = vmatprep.subr.bf16.mxu0 0
    %2291 = vmatpush1.bf16.msra.mxu0 0
    %2292 = vmatprep.subr.bf16.mxu0 0
    %2293 = vmatpush1.bf16.msra.mxu0 0
    %2294 = vmatprep.subr.bf16.mxu0 0
    %2295 = vmatpush1.bf16.msra.mxu0 0
    %2296 = vmatprep.subr.bf16.mxu0 0
    %2297 = vmatpush1.bf16.msra.mxu0 0
    %2298 = vmatprep.subr.bf16.mxu0 0
    %2299 = vmatpush1.bf16.msra.mxu0 0
    %2300 = vmatprep.subr.bf16.mxu0 0
    %2301 = vmatpush1.bf16.msra.mxu0 0
    %2302 = vmatprep.subr.bf16.mxu0 0
    %2303 = vmatpush1.bf16.msra.mxu0 0
    %2304 = vmatprep.mubr.bf16.mxu0 0
    %2305 = vmatmul.mubr.bf16.gmra.mrb[0].mxu0 %v1647
    %v2306 = vpop.f32.mrb[0].mxu0
    %v2307 = vadd.f32 %v2266, %v2306
    %v2308 = vpop.f32.mrb[0].mxu0
    %v2309 = vpop.f32.mrb[0].mxu0
    %v2310 = vadd.f32 %v2269, %v2309
    %v2311 = vpop.f32.mrb[0].mxu0
    %2312 = vdwg.mxu0
    %v2313 = vmax.f32 %v2223, 0.0
    %v2314 = vmax.f32 %v2225, 0.0
    %v2315 = vmax.f32 %v2307, 0.0
    %v2316 = vmax.f32 %v2227, 0.0
    %v2317 = vmax.f32 %v2229, 0.0
    %v2318 = vmax.f32 %v2310, 0.0
    %v2319 = vpack.c.bf16 %v2316, %v2313
    %v2320 = vpack.c.bf16 %v2317, %v2314
    %v2321 = vpack.c.bf16 %v2318, %v2315
    %v2322 = vld [vmem:[#allocation8] sm:$0xff]
    %v2323 = vld [vmem:[#allocation8 + $0x8] sm:$0xf]
    %v2324 = vld [vmem:[#allocation8 + $0xc] sm:$0xff]
    %v2325 = vld [vmem:[#allocation8 + $0x14] sm:$0xf]
    %v2326 = vld [vmem:[#allocation8 + $0x18] sm:$0xff]
    %v2327 = vld [vmem:[#allocation8 + $0x20] sm:$0xf]
    %v2328 = vld [vmem:[#allocation8 + $0x24] sm:$0xff]
    %v2329 = vld [vmem:[#allocation8 + $0x2c] sm:$0xf]
    %v2330 = vld [vmem:[#allocation8 + $0x30] sm:$0xff]
    %v2331 = vld [vmem:[#allocation8 + $0x38] sm:$0xf]
    %v2332 = vld [vmem:[#allocation8 + $0x3c] sm:$0xff]
    %v2333 = vld [vmem:[#allocation8 + $0x44] sm:$0xf]
    %v2334 = vld [vmem:[#allocation8 + $0x48] sm:$0xff]
    %v2335 = vld [vmem:[#allocation8 + $0x50] sm:$0xf]
    %v2336 = vld [vmem:[#allocation8 + $0x54] sm:$0xff]
    %v2337 = vld [vmem:[#allocation8 + $0x5c] sm:$0xf]
    %v2338 = vld [vmem:[#allocation8 + $0x60] sm:$0xff]
    %v2339 = vld [vmem:[#allocation8 + $0x68] sm:$0xf]
    %v2340 = vld [vmem:[#allocation8 + $0x6c] sm:$0xff]
    %v2341 = vld [vmem:[#allocation8 + $0x74] sm:$0xf]
    %v2342 = vld [vmem:[#allocation8 + $0x78] sm:$0xff]
    %v2343 = vld [vmem:[#allocation8 + $0x80] sm:$0xf]
    %v2344 = vld [vmem:[#allocation8 + $0x84] sm:$0xff]
    %v2345 = vld [vmem:[#allocation8 + $0x8c] sm:$0xf]
    %v2346 = vld [vmem:[#allocation8 + $0x90] sm:$0xff]
    %v2347 = vld [vmem:[#allocation8 + $0x98] sm:$0xf]
    %v2348 = vld [vmem:[#allocation8 + $0x9c] sm:$0xff]
    %v2349 = vld [vmem:[#allocation8 + $0xa4] sm:$0xf]
    %v2350 = vld [vmem:[#allocation8 + $0xa8] sm:$0xff]
    %v2351 = vld [vmem:[#allocation8 + $0xb0] sm:$0xf]
    %v2352 = vld [vmem:[#allocation8 + $0xb4] sm:$0xff]
    %v2353 = vld [vmem:[#allocation8 + $0xbc] sm:$0xf]
    %v2354 = vld [vmem:[#allocation8 + $0xc0] sm:$0xff]
    %v2355 = vld [vmem:[#allocation8 + $0xc8] sm:$0xf]
    %v2356 = vld [vmem:[#allocation8 + $0xcc] sm:$0xff]
    %v2357 = vld [vmem:[#allocation8 + $0xd4] sm:$0xf]
    %v2358 = vld [vmem:[#allocation8 + $0xd8] sm:$0xff]
    %v2359 = vld [vmem:[#allocation8 + $0xe0] sm:$0xf]
    %v2360 = vld [vmem:[#allocation8 + $0xe4] sm:$0xff]
    %v2361 = vld [vmem:[#allocation8 + $0xec] sm:$0xf]
    %v2362 = vld [vmem:[#allocation8 + $0xf0] sm:$0xff]
    %v2363 = vld [vmem:[#allocation8 + $0xf8] sm:$0xf]
    %v2364 = vld [vmem:[#allocation8 + $0xfc] sm:$0xff]
    %v2365 = vld [vmem:[#allocation8 + $0x104] sm:$0xf]
    %v2366 = vld [vmem:[#allocation8 + $0x108] sm:$0xff]
    %v2367 = vld [vmem:[#allocation8 + $0x110] sm:$0xf]
    %v2368 = vld [vmem:[#allocation8 + $0x114] sm:$0xff]
    %v2369 = vld [vmem:[#allocation8 + $0x11c] sm:$0xf]
    %v2370 = vld [vmem:[#allocation8 + $0x120] sm:$0xff]
    %v2371 = vld [vmem:[#allocation8 + $0x128] sm:$0xf]
    %v2372 = vld [vmem:[#allocation8 + $0x12c] sm:$0xff]
    %v2373 = vld [vmem:[#allocation8 + $0x134] sm:$0xf]
    %v2374 = vld [vmem:[#allocation8 + $0x138] sm:$0xff]
    %v2375 = vld [vmem:[#allocation8 + $0x140] sm:$0xf]
    %v2376 = vld [vmem:[#allocation8 + $0x144] sm:$0xff]
    %v2377 = vld [vmem:[#allocation8 + $0x14c] sm:$0xf]
    %v2378 = vld [vmem:[#allocation8 + $0x150] sm:$0xff]
    %v2379 = vld [vmem:[#allocation8 + $0x158] sm:$0xf]
    %v2380 = vld [vmem:[#allocation8 + $0x15c] sm:$0xff]
    %v2381 = vld [vmem:[#allocation8 + $0x164] sm:$0xf]
    %v2382 = vld [vmem:[#allocation8 + $0x168] sm:$0xff]
    %v2383 = vld [vmem:[#allocation8 + $0x170] sm:$0xf]
    %v2384 = vld [vmem:[#allocation8 + $0x174] sm:$0xff]
    %v2385 = vld [vmem:[#allocation8 + $0x17c] sm:$0xf]
    %v2386 = vld [vmem:[#allocation8 + $0x180] sm:$0xff]
    %v2387 = vld [vmem:[#allocation8 + $0x188] sm:$0xf]
    %v2388 = vld [vmem:[#allocation8 + $0x18c] sm:$0xff]
    %v2389 = vld [vmem:[#allocation8 + $0x194] sm:$0xf]
    %v2390 = vld [vmem:[#allocation8 + $0x198] sm:$0xff]
    %v2391 = vld [vmem:[#allocation8 + $0x1a0] sm:$0xf]
    %v2392 = vld [vmem:[#allocation8 + $0x1a4] sm:$0xff]
    %v2393 = vld [vmem:[#allocation8 + $0x1ac] sm:$0xf]
    %v2394 = vld [vmem:[#allocation8 + $0x1b0] sm:$0xff]
    %v2395 = vld [vmem:[#allocation8 + $0x1b8] sm:$0xf]
    %v2396 = vld [vmem:[#allocation8 + $0x1bc] sm:$0xff]
    %v2397 = vld [vmem:[#allocation8 + $0x1c4] sm:$0xf]
    %v2398 = vld [vmem:[#allocation8 + $0x1c8] sm:$0xff]
    %v2399 = vld [vmem:[#allocation8 + $0x1d0] sm:$0xf]
    %v2400 = vld [vmem:[#allocation8 + $0x1d4] sm:$0xff]
    %v2401 = vld [vmem:[#allocation8 + $0x1dc] sm:$0xf]
    %v2402 = vld [vmem:[#allocation8 + $0x1e0] sm:$0xff]
    %v2403 = vld [vmem:[#allocation8 + $0x1e8] sm:$0xf]
    %v2404 = vld [vmem:[#allocation8 + $0x1ec] sm:$0xff]
    %v2405 = vld [vmem:[#allocation8 + $0x1f4] sm:$0xf]
    %v2406 = vld [vmem:[#allocation8 + $0x1f8] sm:$0xff]
    %v2407 = vld [vmem:[#allocation8 + $0x200] sm:$0xf]
    %v2408 = vld [vmem:[#allocation8 + $0x204] sm:$0xff]
    %v2409 = vld [vmem:[#allocation8 + $0x20c] sm:$0xf]
    %v2410 = vld [vmem:[#allocation8 + $0x210] sm:$0xff]
    %v2411 = vld [vmem:[#allocation8 + $0x218] sm:$0xf]
    %v2412 = vld [vmem:[#allocation8 + $0x21c] sm:$0xff]
    %v2413 = vld [vmem:[#allocation8 + $0x224] sm:$0xf]
    %v2414 = vld [vmem:[#allocation8 + $0x228] sm:$0xff]
    %v2415 = vld [vmem:[#allocation8 + $0x230] sm:$0xf]
    %v2416 = vld [vmem:[#allocation8 + $0x234] sm:$0xff]
    %v2417 = vld [vmem:[#allocation8 + $0x23c] sm:$0xf]
    %v2418 = vld [vmem:[%s6] sm:$0x7]
    %v2420 = vlaneseq
    %v2421 = vshrl.u32 %v2420, 7
    %v2422 = vsub.s32 0, %v2421
    %v2423 = vrot.slane %v2418, %v2422
    %v2424 = vlaneseq
    %v2425 = vshrl.u32 %v2424, 7
    %v2426 = vsub.s32 1, %v2425
    %v2427 = vrot.slane %v2418, %v2426
    %v2428 = vlaneseq
    %v2429 = vshrl.u32 %v2428, 7
    %v2430 = vsub.s32 2, %v2429
    %v2431 = vrot.slane %v2418, %v2430
    %v2531 = vunpack.c.l.b16 %v2322
    %v2532 = vunpack.c.h.b16 %v2322
    %v2533 = vunpack.c.l.b16 %v2323
    %v2534 = vunpack.c.l.b16 %v2324
    %v2535 = vunpack.c.h.b16 %v2324
    %v2536 = vunpack.c.l.b16 %v2325
    %v2537 = vunpack.c.l.b16 %v2326
    %v2538 = vunpack.c.h.b16 %v2326
    %v2539 = vunpack.c.l.b16 %v2327
    %v2540 = vunpack.c.l.b16 %v2328
    %v2541 = vunpack.c.h.b16 %v2328
    %v2542 = vunpack.c.l.b16 %v2329
    %v2543 = vunpack.c.l.b16 %v2330
    %v2544 = vunpack.c.h.b16 %v2330
    %v2545 = vunpack.c.l.b16 %v2331
    %v2546 = vunpack.c.l.b16 %v2332
    %v2547 = vunpack.c.h.b16 %v2332
    %v2548 = vunpack.c.l.b16 %v2333
    %v2549 = vunpack.c.l.b16 %v2334
    %v2550 = vunpack.c.h.b16 %v2334
    %v2551 = vunpack.c.l.b16 %v2335
    %v2552 = vunpack.c.l.b16 %v2336
    %v2553 = vunpack.c.h.b16 %v2336
    %v2554 = vunpack.c.l.b16 %v2337
    %v2555 = vunpack.c.l.b16 %v2338
    %v2556 = vunpack.c.h.b16 %v2338
    %v2557 = vunpack.c.l.b16 %v2339
    %v2558 = vunpack.c.l.b16 %v2340
    %v2559 = vunpack.c.h.b16 %v2340
    %v2560 = vunpack.c.l.b16 %v2341
    %v2561 = vunpack.c.l.b16 %v2342
    %v2562 = vunpack.c.h.b16 %v2342
    %v2563 = vunpack.c.l.b16 %v2343
    %v2564 = vunpack.c.l.b16 %v2344
    %v2565 = vunpack.c.h.b16 %v2344
    %v2566 = vunpack.c.l.b16 %v2345
    %v2567 = vunpack.c.l.b16 %v2346
    %v2568 = vunpack.c.h.b16 %v2346
    %v2569 = vunpack.c.l.b16 %v2347
    %v2570 = vunpack.c.l.b16 %v2348
    %v2571 = vunpack.c.h.b16 %v2348
    %v2572 = vunpack.c.l.b16 %v2349
    %v2573 = vunpack.c.l.b16 %v2350
    %v2574 = vunpack.c.h.b16 %v2350
    %v2575 = vunpack.c.l.b16 %v2351
    %v2576 = vunpack.c.l.b16 %v2352
    %v2577 = vunpack.c.h.b16 %v2352
    %v2578 = vunpack.c.l.b16 %v2353
    %v2579 = vunpack.c.l.b16 %v2354
    %v2580 = vunpack.c.h.b16 %v2354
    %v2581 = vunpack.c.l.b16 %v2355
    %v2582 = vunpack.c.l.b16 %v2356
    %v2583 = vunpack.c.h.b16 %v2356
    %v2584 = vunpack.c.l.b16 %v2357
    %v2585 = vunpack.c.l.b16 %v2358
    %v2586 = vunpack.c.h.b16 %v2358
    %v2587 = vunpack.c.l.b16 %v2359
    %v2588 = vunpack.c.l.b16 %v2360
    %v2589 = vunpack.c.h.b16 %v2360
    %v2590 = vunpack.c.l.b16 %v2361
    %v2591 = vunpack.c.l.b16 %v2362
    %v2592 = vunpack.c.h.b16 %v2362
    %v2593 = vunpack.c.l.b16 %v2363
    %v2594 = vunpack.c.l.b16 %v2364
    %v2595 = vunpack.c.h.b16 %v2364
    %v2596 = vunpack.c.l.b16 %v2365
    %v2597 = vunpack.c.l.b16 %v2366
    %v2598 = vunpack.c.h.b16 %v2366
    %v2599 = vunpack.c.l.b16 %v2367
    %v2600 = vunpack.c.l.b16 %v2368
    %v2601 = vunpack.c.h.b16 %v2368
    %v2602 = vunpack.c.l.b16 %v2369
    %v2603 = vunpack.c.l.b16 %v2370
    %v2604 = vunpack.c.h.b16 %v2370
    %v2605 = vunpack.c.l.b16 %v2371
    %v2606 = vunpack.c.l.b16 %v2372
    %v2607 = vunpack.c.h.b16 %v2372
    %v2608 = vunpack.c.l.b16 %v2373
    %v2609 = vunpack.c.l.b16 %v2374
    %v2610 = vunpack.c.h.b16 %v2374
    %v2611 = vunpack.c.l.b16 %v2375
    %v2612 = vunpack.c.l.b16 %v2376
    %v2613 = vunpack.c.h.b16 %v2376
    %v2614 = vunpack.c.l.b16 %v2377
    %v2615 = vunpack.c.l.b16 %v2378
    %v2616 = vunpack.c.h.b16 %v2378
    %v2617 = vunpack.c.l.b16 %v2379
    %v2618 = vunpack.c.l.b16 %v2380
    %v2619 = vunpack.c.h.b16 %v2380
    %v2620 = vunpack.c.l.b16 %v2381
    %v2621 = vunpack.c.l.b16 %v2382
    %v2622 = vunpack.c.h.b16 %v2382
    %v2623 = vunpack.c.l.b16 %v2383
    %v2624 = vunpack.c.l.b16 %v2384
    %v2625 = vunpack.c.h.b16 %v2384
    %v2626 = vunpack.c.l.b16 %v2385
    %v2627 = vunpack.c.l.b16 %v2386
    %v2628 = vunpack.c.h.b16 %v2386
    %v2629 = vunpack.c.l.b16 %v2387
    %v2630 = vunpack.c.l.b16 %v2388
    %v2631 = vunpack.c.h.b16 %v2388
    %v2632 = vunpack.c.l.b16 %v2389
    %v2633 = vunpack.c.l.b16 %v2390
    %v2634 = vunpack.c.h.b16 %v2390
    %v2635 = vunpack.c.l.b16 %v2391
    %v2636 = vunpack.c.l.b16 %v2392
    %v2637 = vunpack.c.h.b16 %v2392
    %v2638 = vunpack.c.l.b16 %v2393
    %v2639 = vunpack.c.l.b16 %v2394
    %v2640 = vunpack.c.h.b16 %v2394
    %v2641 = vunpack.c.l.b16 %v2395
    %v2642 = vunpack.c.l.b16 %v2396
    %v2643 = vunpack.c.h.b16 %v2396
    %v2644 = vunpack.c.l.b16 %v2397
    %v2645 = vunpack.c.l.b16 %v2398
    %v2646 = vunpack.c.h.b16 %v2398
    %v2647 = vunpack.c.l.b16 %v2399
    %v2648 = vunpack.c.l.b16 %v2400
    %v2649 = vunpack.c.h.b16 %v2400
    %v2650 = vunpack.c.l.b16 %v2401
    %v2651 = vunpack.c.l.b16 %v2402
    %v2652 = vunpack.c.h.b16 %v2402
    %v2653 = vunpack.c.l.b16 %v2403
    %v2654 = vunpack.c.l.b16 %v2404
    %v2655 = vunpack.c.h.b16 %v2404
    %v2656 = vunpack.c.l.b16 %v2405
    %v2657 = vunpack.c.l.b16 %v2406
    %v2658 = vunpack.c.h.b16 %v2406
    %v2659 = vunpack.c.l.b16 %v2407
    %v2660 = vunpack.c.l.b16 %v2408
    %v2661 = vunpack.c.h.b16 %v2408
    %v2662 = vunpack.c.l.b16 %v2409
    %v2663 = vunpack.c.l.b16 %v2410
    %v2664 = vunpack.c.h.b16 %v2410
    %v2665 = vunpack.c.l.b16 %v2411
    %v2666 = vunpack.c.l.b16 %v2412
    %v2667 = vunpack.c.h.b16 %v2412
    %v2668 = vunpack.c.l.b16 %v2413
    %v2669 = vunpack.c.l.b16 %v2414
    %v2670 = vunpack.c.h.b16 %v2414
    %v2671 = vunpack.c.l.b16 %v2415
    %v2672 = vunpack.c.l.b16 %v2416
    %v2673 = vunpack.c.h.b16 %v2416
    %v2674 = vunpack.c.l.b16 %v2417
    %v2675 = vpack.c.b16 %v2534, %v2531
    %v2676 = vpack.c.b16 %v2535, %v2532
    %v2677 = vpack.c.b16 %v2536, %v2533
    %v2678 = vpack.c.b16 %v2540, %v2537
    %v2679 = vpack.c.b16 %v2541, %v2538
    %v2680 = vpack.c.b16 %v2542, %v2539
    %v2681 = vpack.c.b16 %v2546, %v2543
    %v2682 = vpack.c.b16 %v2547, %v2544
    %v2683 = vpack.c.b16 %v2548, %v2545
    %v2684 = vpack.c.b16 %v2552, %v2549
    %v2685 = vpack.c.b16 %v2553, %v2550
    %v2686 = vpack.c.b16 %v2554, %v2551
    %v2687 = vpack.c.b16 %v2558, %v2555
    %v2688 = vpack.c.b16 %v2559, %v2556
    %v2689 = vpack.c.b16 %v2560, %v2557
    %v2690 = vpack.c.b16 %v2564, %v2561
    %v2691 = vpack.c.b16 %v2565, %v2562
    %v2692 = vpack.c.b16 %v2566, %v2563
    %v2693 = vpack.c.b16 %v2570, %v2567
    %v2694 = vpack.c.b16 %v2571, %v2568
    %v2695 = vpack.c.b16 %v2572, %v2569
    %v2696 = vpack.c.b16 %v2576, %v2573
    %v2697 = vpack.c.b16 %v2577, %v2574
    %v2698 = vpack.c.b16 %v2578, %v2575
    %v2699 = vpack.c.b16 %v2582, %v2579
    %v2700 = vpack.c.b16 %v2583, %v2580
    %v2701 = vpack.c.b16 %v2584, %v2581
    %v2702 = vpack.c.b16 %v2588, %v2585
    %v2703 = vpack.c.b16 %v2589, %v2586
    %v2704 = vpack.c.b16 %v2590, %v2587
    %v2705 = vpack.c.b16 %v2594, %v2591
    %v2706 = vpack.c.b16 %v2595, %v2592
    %v2707 = vpack.c.b16 %v2596, %v2593
    %v2708 = vpack.c.b16 %v2600, %v2597
    %v2709 = vpack.c.b16 %v2601, %v2598
    %v2710 = vpack.c.b16 %v2602, %v2599
    %v2711 = vpack.c.b16 %v2606, %v2603
    %v2712 = vpack.c.b16 %v2607, %v2604
    %v2713 = vpack.c.b16 %v2608, %v2605
    %v2714 = vpack.c.b16 %v2612, %v2609
    %v2715 = vpack.c.b16 %v2613, %v2610
    %v2716 = vpack.c.b16 %v2614, %v2611
    %v2717 = vpack.c.b16 %v2618, %v2615
    %v2718 = vpack.c.b16 %v2619, %v2616
    %v2719 = vpack.c.b16 %v2620, %v2617
    %v2720 = vpack.c.b16 %v2624, %v2621
    %v2721 = vpack.c.b16 %v2625, %v2622
    %v2722 = vpack.c.b16 %v2626, %v2623
    %v2723 = vpack.c.b16 %v2630, %v2627
    %v2724 = vpack.c.b16 %v2631, %v2628
    %v2725 = vpack.c.b16 %v2632, %v2629
    %v2726 = vpack.c.b16 %v2636, %v2633
    %v2727 = vpack.c.b16 %v2637, %v2634
    %v2728 = vpack.c.b16 %v2638, %v2635
    %v2729 = vpack.c.b16 %v2642, %v2639
    %v2730 = vpack.c.b16 %v2643, %v2640
    %v2731 = vpack.c.b16 %v2644, %v2641
    %v2732 = vpack.c.b16 %v2648, %v2645
    %v2733 = vpack.c.b16 %v2649, %v2646
    %v2734 = vpack.c.b16 %v2650, %v2647
    %v2735 = vpack.c.b16 %v2654, %v2651
    %v2736 = vpack.c.b16 %v2655, %v2652
    %v2737 = vpack.c.b16 %v2656, %v2653
    %v2738 = vpack.c.b16 %v2660, %v2657
    %v2739 = vpack.c.b16 %v2661, %v2658
    %v2740 = vpack.c.b16 %v2662, %v2659
    %v2741 = vpack.c.b16 %v2666, %v2663
    %v2742 = vpack.c.b16 %v2667, %v2664
    %v2743 = vpack.c.b16 %v2668, %v2665
    %v2744 = vpack.c.b16 %v2672, %v2669
    %v2745 = vpack.c.b16 %v2673, %v2670
    %v2746 = vpack.c.b16 %v2674, %v2671
    %2819 = vmatprep.subr.bf16.mxu0 %v2676
    %2820 = vmatpush1.bf16.msra.mxu0 %v2675
    %2821 = vmatprep.subr.bf16.mxu0 %v2679
    %2822 = vmatpush1.bf16.msra.mxu0 %v2678
    %2823 = vmatprep.subr.bf16.mxu0 %v2682
    %2824 = vmatpush1.bf16.msra.mxu0 %v2681
    %2825 = vmatprep.subr.bf16.mxu0 %v2685
    %2826 = vmatpush1.bf16.msra.mxu0 %v2684
    %2827 = vmatprep.subr.bf16.mxu0 %v2688
    %2828 = vmatpush1.bf16.msra.mxu0 %v2687
    %2829 = vmatprep.subr.bf16.mxu0 %v2691
    %2830 = vmatpush1.bf16.msra.mxu0 %v2690
    %2831 = vmatprep.subr.bf16.mxu0 %v2694
    %2832 = vmatpush1.bf16.msra.mxu0 %v2693
    %2833 = vmatprep.subr.bf16.mxu0 %v2697
    %2834 = vmatpush1.bf16.msra.mxu0 %v2696
    %2835 = vmatprep.subr.bf16.mxu0 %v2700
    %2836 = vmatpush1.bf16.msra.mxu0 %v2699
    %2837 = vmatprep.subr.bf16.mxu0 %v2703
    %2838 = vmatpush1.bf16.msra.mxu0 %v2702
    %2839 = vmatprep.subr.bf16.mxu0 %v2706
    %2840 = vmatpush1.bf16.msra.mxu0 %v2705
    %2841 = vmatprep.subr.bf16.mxu0 %v2709
    %2842 = vmatpush1.bf16.msra.mxu0 %v2708
    %2843 = vmatprep.subr.bf16.mxu0 %v2712
    %2844 = vmatpush1.bf16.msra.mxu0 %v2711
    %2845 = vmatprep.subr.bf16.mxu0 %v2715
    %2846 = vmatpush1.bf16.msra.mxu0 %v2714
    %2847 = vmatprep.subr.bf16.mxu0 %v2718
    %2848 = vmatpush1.bf16.msra.mxu0 %v2717
    %2849 = vmatprep.subr.bf16.mxu0 %v2721
    %2850 = vmatpush1.bf16.msra.mxu0 %v2720
    %2851 = vmatprep.mubr.bf16.mxu0 %v2320
    %2852 = vmatmul.mubr.bf16.gmra.mrb[0].mxu0 %v2319
    %v2853 = vpop.f32.mrb[0].mxu0
    %v2854 = vadd.f32 %v2423, %v2853
    %v2855 = vpop.f32.mrb[0].mxu0
    %v2856 = vadd.f32 %v2427, %v2855
    %v2857 = vpop.f32.mrb[0].mxu0
    %v2858 = vadd.f32 %v2423, %v2857
    %v2859 = vpop.f32.mrb[0].mxu0
    %v2860 = vadd.f32 %v2427, %v2859
    %2861 = vdwg.mxu0
    %2862 = vmatprep.subr.bf16.mxu0 %v2724
    %2863 = vmatpush1.bf16.msra.mxu0 %v2723
    %2864 = vmatprep.subr.bf16.mxu0 %v2727
    %2865 = vmatpush1.bf16.msra.mxu0 %v2726
    %2866 = vmatprep.subr.bf16.mxu0 %v2730
    %2867 = vmatpush1.bf16.msra.mxu0 %v2729
    %2868 = vmatprep.subr.bf16.mxu0 %v2733
    %2869 = vmatpush1.bf16.msra.mxu0 %v2732
    %2870 = vmatprep.subr.bf16.mxu0 %v2736
    %2871 = vmatpush1.bf16.msra.mxu0 %v2735
    %2872 = vmatprep.subr.bf16.mxu0 %v2739
    %2873 = vmatpush1.bf16.msra.mxu0 %v2738
    %2874 = vmatprep.subr.bf16.mxu0 %v2742
    %2875 = vmatpush1.bf16.msra.mxu0 %v2741
    %2876 = vmatprep.subr.bf16.mxu0 %v2745
    %2877 = vmatpush1.bf16.msra.mxu0 %v2744
    %2878 = vmatprep.subr.bf16.mxu0 0
    %2879 = vmatpush1.bf16.msra.mxu0 0
    %2880 = vmatprep.subr.bf16.mxu0 0
    %2881 = vmatpush1.bf16.msra.mxu0 0
    %2882 = vmatprep.subr.bf16.mxu0 0
    %2883 = vmatpush1.bf16.msra.mxu0 0
    %2884 = vmatprep.subr.bf16.mxu0 0
    %2885 = vmatpush1.bf16.msra.mxu0 0
    %2886 = vmatprep.subr.bf16.mxu0 0
    %2887 = vmatpush1.bf16.msra.mxu0 0
    %2888 = vmatprep.subr.bf16.mxu0 0
    %2889 = vmatpush1.bf16.msra.mxu0 0
    %2890 = vmatprep.subr.bf16.mxu0 0
    %2891 = vmatpush1.bf16.msra.mxu0 0
    %2892 = vmatprep.subr.bf16.mxu0 0
    %2893 = vmatpush1.bf16.msra.mxu0 0
    %2894 = vmatprep.mubr.bf16.mxu0 0
    %2895 = vmatmul.mubr.bf16.gmra.mrb[0].mxu0 %v2321
    %v2896 = vpop.f32.mrb[0].mxu0
    %v2897 = vadd.f32 %v2854, %v2896
    %v2898 = vpop.f32.mrb[0].mxu0
    %v2899 = vadd.f32 %v2856, %v2898
    %v2900 = vpop.f32.mrb[0].mxu0
    %v2901 = vadd.f32 %v2858, %v2900
    %v2902 = vpop.f32.mrb[0].mxu0
    %v2903 = vadd.f32 %v2860, %v2902
    %2904 = vdwg.mxu0
    %2905 = vmatprep.subr.bf16.mxu0 0
    %2906 = vmatpush1.bf16.msra.mxu0 %v2677
    %2907 = vmatprep.subr.bf16.mxu0 0
    %2908 = vmatpush1.bf16.msra.mxu0 %v2680
    %2909 = vmatprep.subr.bf16.mxu0 0
    %2910 = vmatpush1.bf16.msra.mxu0 %v2683
    %2911 = vmatprep.subr.bf16.mxu0 0
    %2912 = vmatpush1.bf16.msra.mxu0 %v2686
    %2913 = vmatprep.subr.bf16.mxu0 0
    %2914 = vmatpush1.bf16.msra.mxu0 %v2689
    %2915 = vmatprep.subr.bf16.mxu0 0
    %2916 = vmatpush1.bf16.msra.mxu0 %v2692
    %2917 = vmatprep.subr.bf16.mxu0 0
    %2918 = vmatpush1.bf16.msra.mxu0 %v2695
    %2919 = vmatprep.subr.bf16.mxu0 0
    %2920 = vmatpush1.bf16.msra.mxu0 %v2698
    %2921 = vmatprep.subr.bf16.mxu0 0
    %2922 = vmatpush1.bf16.msra.mxu0 %v2701
    %2923 = vmatprep.subr.bf16.mxu0 0
    %2924 = vmatpush1.bf16.msra.mxu0 %v2704
    %2925 = vmatprep.subr.bf16.mxu0 0
    %2926 = vmatpush1.bf16.msra.mxu0 %v2707
    %2927 = vmatprep.subr.bf16.mxu0 0
    %2928 = vmatpush1.bf16.msra.mxu0 %v2710
    %2929 = vmatprep.subr.bf16.mxu0 0
    %2930 = vmatpush1.bf16.msra.mxu0 %v2713
    %2931 = vmatprep.subr.bf16.mxu0 0
    %2932 = vmatpush1.bf16.msra.mxu0 %v2716
    %2933 = vmatprep.subr.bf16.mxu0 0
    %2934 = vmatpush1.bf16.msra.mxu0 %v2719
    %2935 = vmatprep.subr.bf16.mxu0 0
    %2936 = vmatpush1.bf16.msra.mxu0 %v2722
    %2937 = vmatprep.mubr.bf16.mxu0 %v2320
    %2938 = vmatmul.mubr.bf16.gmra.mrb[0].mxu0 %v2319
    %v2939 = vpop.f32.mrb[0].mxu0
    %v2940 = vadd.f32 %v2431, %v2939
    %v2941 = vpop.f32.mrb[0].mxu0
    %v2942 = vpop.f32.mrb[0].mxu0
    %v2943 = vadd.f32 %v2431, %v2942
    %v2944 = vpop.f32.mrb[0].mxu0
    %2945 = vdwg.mxu0
    %2946 = vmatprep.subr.bf16.mxu0 0
    %2947 = vmatpush1.bf16.msra.mxu0 %v2725
    %2948 = vmatprep.subr.bf16.mxu0 0
    %2949 = vmatpush1.bf16.msra.mxu0 %v2728
    %2950 = vmatprep.subr.bf16.mxu0 0
    %2951 = vmatpush1.bf16.msra.mxu0 %v2731
    %2952 = vmatprep.subr.bf16.mxu0 0
    %2953 = vmatpush1.bf16.msra.mxu0 %v2734
    %2954 = vmatprep.subr.bf16.mxu0 0
    %2955 = vmatpush1.bf16.msra.mxu0 %v2737
    %2956 = vmatprep.subr.bf16.mxu0 0
    %2957 = vmatpush1.bf16.msra.mxu0 %v2740
    %2958 = vmatprep.subr.bf16.mxu0 0
    %2959 = vmatpush1.bf16.msra.mxu0 %v2743
    %2960 = vmatprep.subr.bf16.mxu0 0
    %2961 = vmatpush1.bf16.msra.mxu0 %v2746
    %2962 = vmatprep.subr.bf16.mxu0 0
    %2963 = vmatpush1.bf16.msra.mxu0 0
    %2964 = vmatprep.subr.bf16.mxu0 0
    %2965 = vmatpush1.bf16.msra.mxu0 0
    %2966 = vmatprep.subr.bf16.mxu0 0
    %2967 = vmatpush1.bf16.msra.mxu0 0
    %2968 = vmatprep.subr.bf16.mxu0 0
    %2969 = vmatpush1.bf16.msra.mxu0 0
    %2970 = vmatprep.subr.bf16.mxu0 0
    %2971 = vmatpush1.bf16.msra.mxu0 0
    %2972 = vmatprep.subr.bf16.mxu0 0
    %2973 = vmatpush1.bf16.msra.mxu0 0
    %2974 = vmatprep.subr.bf16.mxu0 0
    %2975 = vmatpush1.bf16.msra.mxu0 0
    %2976 = vmatprep.subr.bf16.mxu0 0
    %2977 = vmatpush1.bf16.msra.mxu0 0
    %2978 = vmatprep.mubr.bf16.mxu0 0
    %2979 = vmatmul.mubr.bf16.gmra.mrb[0].mxu0 %v2321
    %v2980 = vpop.f32.mrb[0].mxu0
    %v2981 = vadd.f32 %v2940, %v2980
    %v2982 = vpop.f32.mrb[0].mxu0
    %v2983 = vpop.f32.mrb[0].mxu0
    %v2984 = vadd.f32 %v2943, %v2983
    %v2985 = vpop.f32.mrb[0].mxu0
    %2986 = vdwg.mxu0
    %v2987 = vmax.f32 %v2897, 0.0
    %v2988 = vmax.f32 %v2899, 0.0
    %v2989 = vmax.f32 %v2981, 0.0
    %v2990 = vmax.f32 %v2901, 0.0
    %v2991 = vmax.f32 %v2903, 0.0
    %v2992 = vmax.f32 %v2984, 0.0
    %v2993 = vpack.c.bf16 %v2990, %v2987
    %v2994 = vpack.c.bf16 %v2991, %v2988
    %v2995 = vpack.c.bf16 %v2992, %v2989
    %v2996 = vld [vmem:[#allocation10] sm:$0xff]
    %v2997 = vld [vmem:[#allocation10 + $0x8] sm:$0xf]
    %v2998 = vld [vmem:[#allocation10 + $0xc] sm:$0xff]
    %v2999 = vld [vmem:[#allocation10 + $0x14] sm:$0xf]
    %v3000 = vld [vmem:[#allocation10 + $0x18] sm:$0xff]
    %v3001 = vld [vmem:[#allocation10 + $0x20] sm:$0xf]
    %v3002 = vld [vmem:[#allocation10 + $0x24] sm:$0xff]
    %v3003 = vld [vmem:[#allocation10 + $0x2c] sm:$0xf]
    %v3004 = vld [vmem:[#allocation10 + $0x30] sm:$0xff]
    %v3005 = vld [vmem:[#allocation10 + $0x38] sm:$0xf]
    %v3006 = vld [vmem:[#allocation10 + $0x3c] sm:$0xff]
    %v3007 = vld [vmem:[#allocation10 + $0x44] sm:$0xf]
    %v3008 = vld [vmem:[#allocation10 + $0x48] sm:$0xff]
    %v3009 = vld [vmem:[#allocation10 + $0x50] sm:$0xf]
    %v3010 = vld [vmem:[#allocation10 + $0x54] sm:$0xff]
    %v3011 = vld [vmem:[#allocation10 + $0x5c] sm:$0xf]
    %v3012 = vld [vmem:[#allocation10 + $0x60] sm:$0xff]
    %v3013 = vld [vmem:[#allocation10 + $0x68] sm:$0xf]
    %v3014 = vld [vmem:[#allocation10 + $0x6c] sm:$0xff]
    %v3015 = vld [vmem:[#allocation10 + $0x74] sm:$0xf]
    %v3016 = vld [vmem:[#allocation10 + $0x78] sm:$0xff]
    %v3017 = vld [vmem:[#allocation10 + $0x80] sm:$0xf]
    %v3018 = vld [vmem:[#allocation10 + $0x84] sm:$0xff]
    %v3019 = vld [vmem:[#allocation10 + $0x8c] sm:$0xf]
    %v3020 = vld [vmem:[#allocation10 + $0x90] sm:$0xff]
    %v3021 = vld [vmem:[#allocation10 + $0x98] sm:$0xf]
    %v3022 = vld [vmem:[#allocation10 + $0x9c] sm:$0xff]
    %v3023 = vld [vmem:[#allocation10 + $0xa4] sm:$0xf]
    %v3024 = vld [vmem:[#allocation10 + $0xa8] sm:$0xff]
    %v3025 = vld [vmem:[#allocation10 + $0xb0] sm:$0xf]
    %v3026 = vld [vmem:[#allocation10 + $0xb4] sm:$0xff]
    %v3027 = vld [vmem:[#allocation10 + $0xbc] sm:$0xf]
    %v3028 = vld [vmem:[#allocation10 + $0xc0] sm:$0xff]
    %v3029 = vld [vmem:[#allocation10 + $0xc8] sm:$0xf]
    %v3030 = vld [vmem:[#allocation10 + $0xcc] sm:$0xff]
    %v3031 = vld [vmem:[#allocation10 + $0xd4] sm:$0xf]
    %v3032 = vld [vmem:[#allocation10 + $0xd8] sm:$0xff]
    %v3033 = vld [vmem:[#allocation10 + $0xe0] sm:$0xf]
    %v3034 = vld [vmem:[#allocation10 + $0xe4] sm:$0xff]
    %v3035 = vld [vmem:[#allocation10 + $0xec] sm:$0xf]
    %v3036 = vld [vmem:[#allocation10 + $0xf0] sm:$0xff]
    %v3037 = vld [vmem:[#allocation10 + $0xf8] sm:$0xf]
    %v3038 = vld [vmem:[#allocation10 + $0xfc] sm:$0xff]
    %v3039 = vld [vmem:[#allocation10 + $0x104] sm:$0xf]
    %v3040 = vld [vmem:[#allocation10 + $0x108] sm:$0xff]
    %v3041 = vld [vmem:[#allocation10 + $0x110] sm:$0xf]
    %v3042 = vld [vmem:[#allocation10 + $0x114] sm:$0xff]
    %v3043 = vld [vmem:[#allocation10 + $0x11c] sm:$0xf]
    %v3044 = vld [vmem:[#allocation10 + $0x120] sm:$0xff]
    %v3045 = vld [vmem:[#allocation10 + $0x128] sm:$0xf]
    %v3046 = vld [vmem:[#allocation10 + $0x12c] sm:$0xff]
    %v3047 = vld [vmem:[#allocation10 + $0x134] sm:$0xf]
    %v3048 = vld [vmem:[#allocation10 + $0x138] sm:$0xff]
    %v3049 = vld [vmem:[#allocation10 + $0x140] sm:$0xf]
    %v3050 = vld [vmem:[#allocation10 + $0x144] sm:$0xff]
    %v3051 = vld [vmem:[#allocation10 + $0x14c] sm:$0xf]
    %v3052 = vld [vmem:[#allocation10 + $0x150] sm:$0xff]
    %v3053 = vld [vmem:[#allocation10 + $0x158] sm:$0xf]
    %v3054 = vld [vmem:[#allocation10 + $0x15c] sm:$0xff]
    %v3055 = vld [vmem:[#allocation10 + $0x164] sm:$0xf]
    %v3056 = vld [vmem:[#allocation10 + $0x168] sm:$0xff]
    %v3057 = vld [vmem:[#allocation10 + $0x170] sm:$0xf]
    %v3058 = vld [vmem:[#allocation10 + $0x174] sm:$0xff]
    %v3059 = vld [vmem:[#allocation10 + $0x17c] sm:$0xf]
    %v3060 = vld [vmem:[#allocation10 + $0x180] sm:$0xff]
    %v3061 = vld [vmem:[#allocation10 + $0x188] sm:$0xf]
    %v3062 = vld [vmem:[#allocation10 + $0x18c] sm:$0xff]
    %v3063 = vld [vmem:[#allocation10 + $0x194] sm:$0xf]
    %v3064 = vld [vmem:[#allocation10 + $0x198] sm:$0xff]
    %v3065 = vld [vmem:[#allocation10 + $0x1a0] sm:$0xf]
    %v3066 = vld [vmem:[#allocation10 + $0x1a4] sm:$0xff]
    %v3067 = vld [vmem:[#allocation10 + $0x1ac] sm:$0xf]
    %v3068 = vld [vmem:[#allocation10 + $0x1b0] sm:$0xff]
    %v3069 = vld [vmem:[#allocation10 + $0x1b8] sm:$0xf]
    %v3070 = vld [vmem:[#allocation10 + $0x1bc] sm:$0xff]
    %v3071 = vld [vmem:[#allocation10 + $0x1c4] sm:$0xf]
    %v3072 = vld [vmem:[#allocation10 + $0x1c8] sm:$0xff]
    %v3073 = vld [vmem:[#allocation10 + $0x1d0] sm:$0xf]
    %v3074 = vld [vmem:[#allocation10 + $0x1d4] sm:$0xff]
    %v3075 = vld [vmem:[#allocation10 + $0x1dc] sm:$0xf]
    %v3076 = vld [vmem:[#allocation10 + $0x1e0] sm:$0xff]
    %v3077 = vld [vmem:[#allocation10 + $0x1e8] sm:$0xf]
    %v3078 = vld [vmem:[#allocation10 + $0x1ec] sm:$0xff]
    %v3079 = vld [vmem:[#allocation10 + $0x1f4] sm:$0xf]
    %v3080 = vld [vmem:[#allocation10 + $0x1f8] sm:$0xff]
    %v3081 = vld [vmem:[#allocation10 + $0x200] sm:$0xf]
    %v3082 = vld [vmem:[#allocation10 + $0x204] sm:$0xff]
    %v3083 = vld [vmem:[#allocation10 + $0x20c] sm:$0xf]
    %v3084 = vld [vmem:[#allocation10 + $0x210] sm:$0xff]
    %v3085 = vld [vmem:[#allocation10 + $0x218] sm:$0xf]
    %v3086 = vld [vmem:[#allocation10 + $0x21c] sm:$0xff]
    %v3087 = vld [vmem:[#allocation10 + $0x224] sm:$0xf]
    %v3088 = vld [vmem:[#allocation10 + $0x228] sm:$0xff]
    %v3089 = vld [vmem:[#allocation10 + $0x230] sm:$0xf]
    %v3090 = vld [vmem:[#allocation10 + $0x234] sm:$0xff]
    %v3091 = vld [vmem:[#allocation10 + $0x23c] sm:$0xf]
    %v3092 = vld [vmem:[%s8] sm:$0x7]
    %v3094 = vlaneseq
    %v3095 = vshrl.u32 %v3094, 7
    %v3096 = vsub.s32 0, %v3095
    %v3097 = vrot.slane %v3092, %v3096
    %v3098 = vlaneseq
    %v3099 = vshrl.u32 %v3098, 7
    %v3100 = vsub.s32 1, %v3099
    %v3101 = vrot.slane %v3092, %v3100
    %v3102 = vlaneseq
    %v3103 = vshrl.u32 %v3102, 7
    %v3104 = vsub.s32 2, %v3103
    %v3105 = vrot.slane %v3092, %v3104
    %v3205 = vunpack.c.l.b16 %v2996
    %v3206 = vunpack.c.h.b16 %v2996
    %v3207 = vunpack.c.l.b16 %v2997
    %v3208 = vunpack.c.l.b16 %v2998
    %v3209 = vunpack.c.h.b16 %v2998
    %v3210 = vunpack.c.l.b16 %v2999
    %v3211 = vunpack.c.l.b16 %v3000
    %v3212 = vunpack.c.h.b16 %v3000
    %v3213 = vunpack.c.l.b16 %v3001
    %v3214 = vunpack.c.l.b16 %v3002
    %v3215 = vunpack.c.h.b16 %v3002
    %v3216 = vunpack.c.l.b16 %v3003
    %v3217 = vunpack.c.l.b16 %v3004
    %v3218 = vunpack.c.h.b16 %v3004
    %v3219 = vunpack.c.l.b16 %v3005
    %v3220 = vunpack.c.l.b16 %v3006
    %v3221 = vunpack.c.h.b16 %v3006
    %v3222 = vunpack.c.l.b16 %v3007
    %v3223 = vunpack.c.l.b16 %v3008
    %v3224 = vunpack.c.h.b16 %v3008
    %v3225 = vunpack.c.l.b16 %v3009
    %v3226 = vunpack.c.l.b16 %v3010
    %v3227 = vunpack.c.h.b16 %v3010
    %v3228 = vunpack.c.l.b16 %v3011
    %v3229 = vunpack.c.l.b16 %v3012
    %v3230 = vunpack.c.h.b16 %v3012
    %v3231 = vunpack.c.l.b16 %v3013
    %v3232 = vunpack.c.l.b16 %v3014
    %v3233 = vunpack.c.h.b16 %v3014
    %v3234 = vunpack.c.l.b16 %v3015
    %v3235 = vunpack.c.l.b16 %v3016
    %v3236 = vunpack.c.h.b16 %v3016
    %v3237 = vunpack.c.l.b16 %v3017
    %v3238 = vunpack.c.l.b16 %v3018
    %v3239 = vunpack.c.h.b16 %v3018
    %v3240 = vunpack.c.l.b16 %v3019
    %v3241 = vunpack.c.l.b16 %v3020
    %v3242 = vunpack.c.h.b16 %v3020
    %v3243 = vunpack.c.l.b16 %v3021
    %v3244 = vunpack.c.l.b16 %v3022
    %v3245 = vunpack.c.h.b16 %v3022
    %v3246 = vunpack.c.l.b16 %v3023
    %v3247 = vunpack.c.l.b16 %v3024
    %v3248 = vunpack.c.h.b16 %v3024
    %v3249 = vunpack.c.l.b16 %v3025
    %v3250 = vunpack.c.l.b16 %v3026
    %v3251 = vunpack.c.h.b16 %v3026
    %v3252 = vunpack.c.l.b16 %v3027
    %v3253 = vunpack.c.l.b16 %v3028
    %v3254 = vunpack.c.h.b16 %v3028
    %v3255 = vunpack.c.l.b16 %v3029
    %v3256 = vunpack.c.l.b16 %v3030
    %v3257 = vunpack.c.h.b16 %v3030
    %v3258 = vunpack.c.l.b16 %v3031
    %v3259 = vunpack.c.l.b16 %v3032
    %v3260 = vunpack.c.h.b16 %v3032
    %v3261 = vunpack.c.l.b16 %v3033
    %v3262 = vunpack.c.l.b16 %v3034
    %v3263 = vunpack.c.h.b16 %v3034
    %v3264 = vunpack.c.l.b16 %v3035
    %v3265 = vunpack.c.l.b16 %v3036
    %v3266 = vunpack.c.h.b16 %v3036
    %v3267 = vunpack.c.l.b16 %v3037
    %v3268 = vunpack.c.l.b16 %v3038
    %v3269 = vunpack.c.h.b16 %v3038
    %v3270 = vunpack.c.l.b16 %v3039
    %v3271 = vunpack.c.l.b16 %v3040
    %v3272 = vunpack.c.h.b16 %v3040
    %v3273 = vunpack.c.l.b16 %v3041
    %v3274 = vunpack.c.l.b16 %v3042
    %v3275 = vunpack.c.h.b16 %v3042
    %v3276 = vunpack.c.l.b16 %v3043
    %v3277 = vunpack.c.l.b16 %v3044
    %v3278 = vunpack.c.h.b16 %v3044
    %v3279 = vunpack.c.l.b16 %v3045
    %v3280 = vunpack.c.l.b16 %v3046
    %v3281 = vunpack.c.h.b16 %v3046
    %v3282 = vunpack.c.l.b16 %v3047
    %v3283 = vunpack.c.l.b16 %v3048
    %v3284 = vunpack.c.h.b16 %v3048
    %v3285 = vunpack.c.l.b16 %v3049
    %v3286 = vunpack.c.l.b16 %v3050
    %v3287 = vunpack.c.h.b16 %v3050
    %v3288 = vunpack.c.l.b16 %v3051
    %v3289 = vunpack.c.l.b16 %v3052
    %v3290 = vunpack.c.h.b16 %v3052
    %v3291 = vunpack.c.l.b16 %v3053
    %v3292 = vunpack.c.l.b16 %v3054
    %v3293 = vunpack.c.h.b16 %v3054
    %v3294 = vunpack.c.l.b16 %v3055
    %v3295 = vunpack.c.l.b16 %v3056
    %v3296 = vunpack.c.h.b16 %v3056
    %v3297 = vunpack.c.l.b16 %v3057
    %v3298 = vunpack.c.l.b16 %v3058
    %v3299 = vunpack.c.h.b16 %v3058
    %v3300 = vunpack.c.l.b16 %v3059
    %v3301 = vunpack.c.l.b16 %v3060
    %v3302 = vunpack.c.h.b16 %v3060
    %v3303 = vunpack.c.l.b16 %v3061
    %v3304 = vunpack.c.l.b16 %v3062
    %v3305 = vunpack.c.h.b16 %v3062
    %v3306 = vunpack.c.l.b16 %v3063
    %v3307 = vunpack.c.l.b16 %v3064
    %v3308 = vunpack.c.h.b16 %v3064
    %v3309 = vunpack.c.l.b16 %v3065
    %v3310 = vunpack.c.l.b16 %v3066
    %v3311 = vunpack.c.h.b16 %v3066
    %v3312 = vunpack.c.l.b16 %v3067
    %v3313 = vunpack.c.l.b16 %v3068
    %v3314 = vunpack.c.h.b16 %v3068
    %v3315 = vunpack.c.l.b16 %v3069
    %v3316 = vunpack.c.l.b16 %v3070
    %v3317 = vunpack.c.h.b16 %v3070
    %v3318 = vunpack.c.l.b16 %v3071
    %v3319 = vunpack.c.l.b16 %v3072
    %v3320 = vunpack.c.h.b16 %v3072
    %v3321 = vunpack.c.l.b16 %v3073
    %v3322 = vunpack.c.l.b16 %v3074
    %v3323 = vunpack.c.h.b16 %v3074
    %v3324 = vunpack.c.l.b16 %v3075
    %v3325 = vunpack.c.l.b16 %v3076
    %v3326 = vunpack.c.h.b16 %v3076
    %v3327 = vunpack.c.l.b16 %v3077
    %v3328 = vunpack.c.l.b16 %v3078
    %v3329 = vunpack.c.h.b16 %v3078
    %v3330 = vunpack.c.l.b16 %v3079
    %v3331 = vunpack.c.l.b16 %v3080
    %v3332 = vunpack.c.h.b16 %v3080
    %v3333 = vunpack.c.l.b16 %v3081
    %v3334 = vunpack.c.l.b16 %v3082
    %v3335 = vunpack.c.h.b16 %v3082
    %v3336 = vunpack.c.l.b16 %v3083
    %v3337 = vunpack.c.l.b16 %v3084
    %v3338 = vunpack.c.h.b16 %v3084
    %v3339 = vunpack.c.l.b16 %v3085
    %v3340 = vunpack.c.l.b16 %v3086
    %v3341 = vunpack.c.h.b16 %v3086
    %v3342 = vunpack.c.l.b16 %v3087
    %v3343 = vunpack.c.l.b16 %v3088
    %v3344 = vunpack.c.h.b16 %v3088
    %v3345 = vunpack.c.l.b16 %v3089
    %v3346 = vunpack.c.l.b16 %v3090
    %v3347 = vunpack.c.h.b16 %v3090
    %v3348 = vunpack.c.l.b16 %v3091
    %v3349 = vpack.c.b16 %v3208, %v3205
    %v3350 = vpack.c.b16 %v3209, %v3206
    %v3351 = vpack.c.b16 %v3210, %v3207
    %v3352 = vpack.c.b16 %v3214, %v3211
    %v3353 = vpack.c.b16 %v3215, %v3212
    %v3354 = vpack.c.b16 %v3216, %v3213
    %v3355 = vpack.c.b16 %v3220, %v3217
    %v3356 = vpack.c.b16 %v3221, %v3218
    %v3357 = vpack.c.b16 %v3222, %v3219
    %v3358 = vpack.c.b16 %v3226, %v3223
    %v3359 = vpack.c.b16 %v3227, %v3224
    %v3360 = vpack.c.b16 %v3228, %v3225
    %v3361 = vpack.c.b16 %v3232, %v3229
    %v3362 = vpack.c.b16 %v3233, %v3230
    %v3363 = vpack.c.b16 %v3234, %v3231
    %v3364 = vpack.c.b16 %v3238, %v3235
    %v3365 = vpack.c.b16 %v3239, %v3236
    %v3366 = vpack.c.b16 %v3240, %v3237
    %v3367 = vpack.c.b16 %v3244, %v3241
    %v3368 = vpack.c.b16 %v3245, %v3242
    %v3369 = vpack.c.b16 %v3246, %v3243
    %v3370 = vpack.c.b16 %v3250, %v3247
    %v3371 = vpack.c.b16 %v3251, %v3248
    %v3372 = vpack.c.b16 %v3252, %v3249
    %v3373 = vpack.c.b16 %v3256, %v3253
    %v3374 = vpack.c.b16 %v3257, %v3254
    %v3375 = vpack.c.b16 %v3258, %v3255
    %v3376 = vpack.c.b16 %v3262, %v3259
    %v3377 = vpack.c.b16 %v3263, %v3260
    %v3378 = vpack.c.b16 %v3264, %v3261
    %v3379 = vpack.c.b16 %v3268, %v3265
    %v3380 = vpack.c.b16 %v3269, %v3266
    %v3381 = vpack.c.b16 %v3270, %v3267
    %v3382 = vpack.c.b16 %v3274, %v3271
    %v3383 = vpack.c.b16 %v3275, %v3272
    %v3384 = vpack.c.b16 %v3276, %v3273
    %v3385 = vpack.c.b16 %v3280, %v3277
    %v3386 = vpack.c.b16 %v3281, %v3278
    %v3387 = vpack.c.b16 %v3282, %v3279
    %v3388 = vpack.c.b16 %v3286, %v3283
    %v3389 = vpack.c.b16 %v3287, %v3284
    %v3390 = vpack.c.b16 %v3288, %v3285
    %v3391 = vpack.c.b16 %v3292, %v3289
    %v3392 = vpack.c.b16 %v3293, %v3290
    %v3393 = vpack.c.b16 %v3294, %v3291
    %v3394 = vpack.c.b16 %v3298, %v3295
    %v3395 = vpack.c.b16 %v3299, %v3296
    %v3396 = vpack.c.b16 %v3300, %v3297
    %v3397 = vpack.c.b16 %v3304, %v3301
    %v3398 = vpack.c.b16 %v3305, %v3302
    %v3399 = vpack.c.b16 %v3306, %v3303
    %v3400 = vpack.c.b16 %v3310, %v3307
    %v3401 = vpack.c.b16 %v3311, %v3308
    %v3402 = vpack.c.b16 %v3312, %v3309
    %v3403 = vpack.c.b16 %v3316, %v3313
    %v3404 = vpack.c.b16 %v3317, %v3314
    %v3405 = vpack.c.b16 %v3318, %v3315
    %v3406 = vpack.c.b16 %v3322, %v3319
    %v3407 = vpack.c.b16 %v3323, %v3320
    %v3408 = vpack.c.b16 %v3324, %v3321
    %v3409 = vpack.c.b16 %v3328, %v3325
    %v3410 = vpack.c.b16 %v3329, %v3326
    %v3411 = vpack.c.b16 %v3330, %v3327
    %v3412 = vpack.c.b16 %v3334, %v3331
    %v3413 = vpack.c.b16 %v3335, %v3332
    %v3414 = vpack.c.b16 %v3336, %v3333
    %v3415 = vpack.c.b16 %v3340, %v3337
    %v3416 = vpack.c.b16 %v3341, %v3338
    %v3417 = vpack.c.b16 %v3342, %v3339
    %v3418 = vpack.c.b16 %v3346, %v3343
    %v3419 = vpack.c.b16 %v3347, %v3344
    %v3420 = vpack.c.b16 %v3348, %v3345
    %3493 = vmatprep.subr.bf16.mxu0 %v3350
    %3494 = vmatpush1.bf16.msra.mxu0 %v3349
    %3495 = vmatprep.subr.bf16.mxu0 %v3353
    %3496 = vmatpush1.bf16.msra.mxu0 %v3352
    %3497 = vmatprep.subr.bf16.mxu0 %v3356
    %3498 = vmatpush1.bf16.msra.mxu0 %v3355
    %3499 = vmatprep.subr.bf16.mxu0 %v3359
    %3500 = vmatpush1.bf16.msra.mxu0 %v3358
    %3501 = vmatprep.subr.bf16.mxu0 %v3362
    %3502 = vmatpush1.bf16.msra.mxu0 %v3361
    %3503 = vmatprep.subr.bf16.mxu0 %v3365
    %3504 = vmatpush1.bf16.msra.mxu0 %v3364
    %3505 = vmatprep.subr.bf16.mxu0 %v3368
    %3506 = vmatpush1.bf16.msra.mxu0 %v3367
    %3507 = vmatprep.subr.bf16.mxu0 %v3371
    %3508 = vmatpush1.bf16.msra.mxu0 %v3370
    %3509 = vmatprep.subr.bf16.mxu0 %v3374
    %3510 = vmatpush1.bf16.msra.mxu0 %v3373
    %3511 = vmatprep.subr.bf16.mxu0 %v3377
    %3512 = vmatpush1.bf16.msra.mxu0 %v3376
    %3513 = vmatprep.subr.bf16.mxu0 %v3380
    %3514 = vmatpush1.bf16.msra.mxu0 %v3379
    %3515 = vmatprep.subr.bf16.mxu0 %v3383
    %3516 = vmatpush1.bf16.msra.mxu0 %v3382
    %3517 = vmatprep.subr.bf16.mxu0 %v3386
    %3518 = vmatpush1.bf16.msra.mxu0 %v3385
    %3519 = vmatprep.subr.bf16.mxu0 %v3389
    %3520 = vmatpush1.bf16.msra.mxu0 %v3388
    %3521 = vmatprep.subr.bf16.mxu0 %v3392
    %3522 = vmatpush1.bf16.msra.mxu0 %v3391
    %3523 = vmatprep.subr.bf16.mxu0 %v3395
    %3524 = vmatpush1.bf16.msra.mxu0 %v3394
    %3525 = vmatprep.mubr.bf16.mxu0 %v2994
    %3526 = vmatmul.mubr.bf16.gmra.mrb[0].mxu0 %v2993
    %v3527 = vpop.f32.mrb[0].mxu0
    %v3528 = vadd.f32 %v3097, %v3527
    %v3529 = vpop.f32.mrb[0].mxu0
    %v3530 = vadd.f32 %v3101, %v3529
    %v3531 = vpop.f32.mrb[0].mxu0
    %v3532 = vadd.f32 %v3097, %v3531
    %v3533 = vpop.f32.mrb[0].mxu0
    %v3534 = vadd.f32 %v3101, %v3533
    %3535 = vdwg.mxu0
    %3536 = vmatprep.subr.bf16.mxu0 %v3398
    %3537 = vmatpush1.bf16.msra.mxu0 %v3397
    %3538 = vmatprep.subr.bf16.mxu0 %v3401
    %3539 = vmatpush1.bf16.msra.mxu0 %v3400
    %3540 = vmatprep.subr.bf16.mxu0 %v3404
    %3541 = vmatpush1.bf16.msra.mxu0 %v3403
    %3542 = vmatprep.subr.bf16.mxu0 %v3407
    %3543 = vmatpush1.bf16.msra.mxu0 %v3406
    %3544 = vmatprep.subr.bf16.mxu0 %v3410
    %3545 = vmatpush1.bf16.msra.mxu0 %v3409
    %3546 = vmatprep.subr.bf16.mxu0 %v3413
    %3547 = vmatpush1.bf16.msra.mxu0 %v3412
    %3548 = vmatprep.subr.bf16.mxu0 %v3416
    %3549 = vmatpush1.bf16.msra.mxu0 %v3415
    %3550 = vmatprep.subr.bf16.mxu0 %v3419
    %3551 = vmatpush1.bf16.msra.mxu0 %v3418
    %3552 = vmatprep.subr.bf16.mxu0 0
    %3553 = vmatpush1.bf16.msra.mxu0 0
    %3554 = vmatprep.subr.bf16.mxu0 0
    %3555 = vmatpush1.bf16.msra.mxu0 0
    %3556 = vmatprep.subr.bf16.mxu0 0
    %3557 = vmatpush1.bf16.msra.mxu0 0
    %3558 = vmatprep.subr.bf16.mxu0 0
    %3559 = vmatpush1.bf16.msra.mxu0 0
    %3560 = vmatprep.subr.bf16.mxu0 0
    %3561 = vmatpush1.bf16.msra.mxu0 0
    %3562 = vmatprep.subr.bf16.mxu0 0
    %3563 = vmatpush1.bf16.msra.mxu0 0
    %3564 = vmatprep.subr.bf16.mxu0 0
    %3565 = vmatpush1.bf16.msra.mxu0 0
    %3566 = vmatprep.subr.bf16.mxu0 0
    %3567 = vmatpush1.bf16.msra.mxu0 0
    %3568 = vmatprep.mubr.bf16.mxu0 0
    %3569 = vmatmul.mubr.bf16.gmra.mrb[0].mxu0 %v2995
    %v3570 = vpop.f32.mrb[0].mxu0
    %v3571 = vadd.f32 %v3528, %v3570
    %v3572 = vpop.f32.mrb[0].mxu0
    %v3573 = vadd.f32 %v3530, %v3572
    %v3574 = vpop.f32.mrb[0].mxu0
    %v3575 = vadd.f32 %v3532, %v3574
    %v3576 = vpop.f32.mrb[0].mxu0
    %v3577 = vadd.f32 %v3534, %v3576
    %3578 = vdwg.mxu0
    %3579 = vmatprep.subr.bf16.mxu0 0
    %3580 = vmatpush1.bf16.msra.mxu0 %v3351
    %3581 = vmatprep.subr.bf16.mxu0 0
    %3582 = vmatpush1.bf16.msra.mxu0 %v3354
    %3583 = vmatprep.subr.bf16.mxu0 0
    %3584 = vmatpush1.bf16.msra.mxu0 %v3357
    %3585 = vmatprep.subr.bf16.mxu0 0
    %3586 = vmatpush1.bf16.msra.mxu0 %v3360
    %3587 = vmatprep.subr.bf16.mxu0 0
    %3588 = vmatpush1.bf16.msra.mxu0 %v3363
    %3589 = vmatprep.subr.bf16.mxu0 0
    %3590 = vmatpush1.bf16.msra.mxu0 %v3366
    %3591 = vmatprep.subr.bf16.mxu0 0
    %3592 = vmatpush1.bf16.msra.mxu0 %v3369
    %3593 = vmatprep.subr.bf16.mxu0 0
    %3594 = vmatpush1.bf16.msra.mxu0 %v3372
    %3595 = vmatprep.subr.bf16.mxu0 0
    %3596 = vmatpush1.bf16.msra.mxu0 %v3375
    %3597 = vmatprep.subr.bf16.mxu0 0
    %3598 = vmatpush1.bf16.msra.mxu0 %v3378
    %3599 = vmatprep.subr.bf16.mxu0 0
    %3600 = vmatpush1.bf16.msra.mxu0 %v3381
    %3601 = vmatprep.subr.bf16.mxu0 0
    %3602 = vmatpush1.bf16.msra.mxu0 %v3384
    %3603 = vmatprep.subr.bf16.mxu0 0
    %3604 = vmatpush1.bf16.msra.mxu0 %v3387
    %3605 = vmatprep.subr.bf16.mxu0 0
    %3606 = vmatpush1.bf16.msra.mxu0 %v3390
    %3607 = vmatprep.subr.bf16.mxu0 0
    %3608 = vmatpush1.bf16.msra.mxu0 %v3393
    %3609 = vmatprep.subr.bf16.mxu0 0
    %3610 = vmatpush1.bf16.msra.mxu0 %v3396
    %3611 = vmatprep.mubr.bf16.mxu0 %v2994
    %3612 = vmatmul.mubr.bf16.gmra.mrb[0].mxu0 %v2993
    %v3613 = vpop.f32.mrb[0].mxu0
    %v3614 = vadd.f32 %v3105, %v3613
    %v3615 = vpop.f32.mrb[0].mxu0
    %v3616 = vpop.f32.mrb[0].mxu0
    %v3617 = vadd.f32 %v3105, %v3616
    %v3618 = vpop.f32.mrb[0].mxu0
    %3619 = vdwg.mxu0
    %3620 = vmatprep.subr.bf16.mxu0 0
    %3621 = vmatpush1.bf16.msra.mxu0 %v3399
    %3622 = vmatprep.subr.bf16.mxu0 0
    %3623 = vmatpush1.bf16.msra.mxu0 %v3402
    %3624 = vmatprep.subr.bf16.mxu0 0
    %3625 = vmatpush1.bf16.msra.mxu0 %v3405
    %3626 = vmatprep.subr.bf16.mxu0 0
    %3627 = vmatpush1.bf16.msra.mxu0 %v3408
    %3628 = vmatprep.subr.bf16.mxu0 0
    %3629 = vmatpush1.bf16.msra.mxu0 %v3411
    %3630 = vmatprep.subr.bf16.mxu0 0
    %3631 = vmatpush1.bf16.msra.mxu0 %v3414
    %3632 = vmatprep.subr.bf16.mxu0 0
    %3633 = vmatpush1.bf16.msra.mxu0 %v3417
    %3634 = vmatprep.subr.bf16.mxu0 0
    %3635 = vmatpush1.bf16.msra.mxu0 %v3420
    %3636 = vmatprep.subr.bf16.mxu0 0
    %3637 = vmatpush1.bf16.msra.mxu0 0
    %3638 = vmatprep.subr.bf16.mxu0 0
    %3639 = vmatpush1.bf16.msra.mxu0 0
    %3640 = vmatprep.subr.bf16.mxu0 0
    %3641 = vmatpush1.bf16.msra.mxu0 0
    %3642 = vmatprep.subr.bf16.mxu0 0
    %3643 = vmatpush1.bf16.msra.mxu0 0
    %3644 = vmatprep.subr.bf16.mxu0 0
    %3645 = vmatpush1.bf16.msra.mxu0 0
    %3646 = vmatprep.subr.bf16.mxu0 0
    %3647 = vmatpush1.bf16.msra.mxu0 0
    %3648 = vmatprep.subr.bf16.mxu0 0
    %3649 = vmatpush1.bf16.msra.mxu0 0
    %3650 = vmatprep.subr.bf16.mxu0 0
    %3651 = vmatpush1.bf16.msra.mxu0 0
    %3652 = vmatprep.mubr.bf16.mxu0 0
    %3653 = vmatmul.mubr.bf16.gmra.mrb[0].mxu0 %v2995
    %v3654 = vpop.f32.mrb[0].mxu0
    %v3655 = vadd.f32 %v3614, %v3654
    %v3656 = vpop.f32.mrb[0].mxu0
    %v3657 = vpop.f32.mrb[0].mxu0
    %v3658 = vadd.f32 %v3617, %v3657
    %v3659 = vpop.f32.mrb[0].mxu0
    %3660 = vdwg.mxu0
    %v3661 = vmax.f32 %v3571, 0.0
    %v3662 = vmax.f32 %v3573, 0.0
    %v3663 = vmax.f32 %v3655, 0.0
    %v3664 = vmax.f32 %v3575, 0.0
    %v3665 = vmax.f32 %v3577, 0.0
    %v3666 = vmax.f32 %v3658, 0.0
    %v3667 = vpack.c.bf16 %v3664, %v3661
    %v3668 = vpack.c.bf16 %v3665, %v3662
    %v3669 = vpack.c.bf16 %v3666, %v3663
    %v3670 = vld [vmem:[#allocation11] sm:$0xf]
    %v3671 = vld [vmem:[#allocation11 + $0x4] sm:$0xf]
    %v3672 = vld [vmem:[#allocation11 + $0x8] sm:$0xf]
    %v3673 = vld [vmem:[#allocation11 + $0xc] sm:$0xf]
    %v3674 = vld [vmem:[#allocation11 + $0x10] sm:$0xf]
    %v3675 = vld [vmem:[#allocation11 + $0x14] sm:$0xf]
    %v3676 = vld [vmem:[#allocation11 + $0x18] sm:$0xf]
    %v3677 = vld [vmem:[#allocation11 + $0x1c] sm:$0xf]
    %v3678 = vld [vmem:[#allocation11 + $0x20] sm:$0xf]
    %v3679 = vld [vmem:[#allocation11 + $0x24] sm:$0xf]
    %v3680 = vld [vmem:[#allocation11 + $0x28] sm:$0xf]
    %v3681 = vld [vmem:[#allocation11 + $0x2c] sm:$0xf]
    %v3682 = vld [vmem:[#allocation11 + $0x30] sm:$0xf]
    %v3683 = vld [vmem:[#allocation11 + $0x34] sm:$0xf]
    %v3684 = vld [vmem:[#allocation11 + $0x38] sm:$0xf]
    %v3685 = vld [vmem:[#allocation11 + $0x3c] sm:$0xf]
    %v3686 = vld [vmem:[#allocation11 + $0x40] sm:$0xf]
    %v3687 = vld [vmem:[#allocation11 + $0x44] sm:$0xf]
    %v3688 = vld [vmem:[#allocation11 + $0x48] sm:$0xf]
    %v3689 = vld [vmem:[#allocation11 + $0x4c] sm:$0xf]
    %v3690 = vld [vmem:[#allocation11 + $0x50] sm:$0xf]
    %v3691 = vld [vmem:[#allocation11 + $0x54] sm:$0xf]
    %v3692 = vld [vmem:[#allocation11 + $0x58] sm:$0xf]
    %v3693 = vld [vmem:[#allocation11 + $0x5c] sm:$0xf]
    %v3694 = vld [vmem:[#allocation11 + $0x60] sm:$0xf]
    %v3695 = vld [vmem:[#allocation11 + $0x64] sm:$0xf]
    %v3696 = vld [vmem:[#allocation11 + $0x68] sm:$0xf]
    %v3697 = vld [vmem:[#allocation11 + $0x6c] sm:$0xf]
    %v3698 = vld [vmem:[#allocation11 + $0x70] sm:$0xf]
    %v3699 = vld [vmem:[#allocation11 + $0x74] sm:$0xf]
    %v3700 = vld [vmem:[#allocation11 + $0x78] sm:$0xf]
    %v3701 = vld [vmem:[#allocation11 + $0x7c] sm:$0xf]
    %v3702 = vld [vmem:[#allocation11 + $0x80] sm:$0xf]
    %v3703 = vld [vmem:[#allocation11 + $0x84] sm:$0xf]
    %v3704 = vld [vmem:[#allocation11 + $0x88] sm:$0xf]
    %v3705 = vld [vmem:[#allocation11 + $0x8c] sm:$0xf]
    %v3706 = vld [vmem:[#allocation11 + $0x90] sm:$0xf]
    %v3707 = vld [vmem:[#allocation11 + $0x94] sm:$0xf]
    %v3708 = vld [vmem:[#allocation11 + $0x98] sm:$0xf]
    %v3709 = vld [vmem:[#allocation11 + $0x9c] sm:$0xf]
    %v3710 = vld [vmem:[#allocation11 + $0xa0] sm:$0xf]
    %v3711 = vld [vmem:[#allocation11 + $0xa4] sm:$0xf]
    %v3712 = vld [vmem:[#allocation11 + $0xa8] sm:$0xf]
    %v3713 = vld [vmem:[#allocation11 + $0xac] sm:$0xf]
    %v3714 = vld [vmem:[#allocation11 + $0xb0] sm:$0xf]
    %v3715 = vld [vmem:[#allocation11 + $0xb4] sm:$0xf]
    %v3716 = vld [vmem:[#allocation11 + $0xb8] sm:$0xf]
    %v3717 = vld [vmem:[#allocation11 + $0xbc] sm:$0xf]
    %v3718 = vld [vmem:[%s10] sm:$0x1]
    %v3720 = vlaneseq
    %v3721 = vshrl.u32 %v3720, 7
    %v3722 = vsub.s32 0, %v3721
    %v3723 = vrot.slane %v3718, %v3722
    %v3773 = vunpack.c.l.b16 %v3670
    %v3774 = vunpack.c.l.b16 %v3671
    %v3775 = vunpack.c.l.b16 %v3672
    %v3776 = vunpack.c.l.b16 %v3673
    %v3777 = vunpack.c.l.b16 %v3674
    %v3778 = vunpack.c.l.b16 %v3675
    %v3779 = vunpack.c.l.b16 %v3676
    %v3780 = vunpack.c.l.b16 %v3677
    %v3781 = vunpack.c.l.b16 %v3678
    %v3782 = vunpack.c.l.b16 %v3679
    %v3783 = vunpack.c.l.b16 %v3680
    %v3784 = vunpack.c.l.b16 %v3681
    %v3785 = vunpack.c.l.b16 %v3682
    %v3786 = vunpack.c.l.b16 %v3683
    %v3787 = vunpack.c.l.b16 %v3684
    %v3788 = vunpack.c.l.b16 %v3685
    %v3789 = vunpack.c.l.b16 %v3686
    %v3790 = vunpack.c.l.b16 %v3687
    %v3791 = vunpack.c.l.b16 %v3688
    %v3792 = vunpack.c.l.b16 %v3689
    %v3793 = vunpack.c.l.b16 %v3690
    %v3794 = vunpack.c.l.b16 %v3691
    %v3795 = vunpack.c.l.b16 %v3692
    %v3796 = vunpack.c.l.b16 %v3693
    %v3797 = vunpack.c.l.b16 %v3694
    %v3798 = vunpack.c.l.b16 %v3695
    %v3799 = vunpack.c.l.b16 %v3696
    %v3800 = vunpack.c.l.b16 %v3697
    %v3801 = vunpack.c.l.b16 %v3698
    %v3802 = vunpack.c.l.b16 %v3699
    %v3803 = vunpack.c.l.b16 %v3700
    %v3804 = vunpack.c.l.b16 %v3701
    %v3805 = vunpack.c.l.b16 %v3702
    %v3806 = vunpack.c.l.b16 %v3703
    %v3807 = vunpack.c.l.b16 %v3704
    %v3808 = vunpack.c.l.b16 %v3705
    %v3809 = vunpack.c.l.b16 %v3706
    %v3810 = vunpack.c.l.b16 %v3707
    %v3811 = vunpack.c.l.b16 %v3708
    %v3812 = vunpack.c.l.b16 %v3709
    %v3813 = vunpack.c.l.b16 %v3710
    %v3814 = vunpack.c.l.b16 %v3711
    %v3815 = vunpack.c.l.b16 %v3712
    %v3816 = vunpack.c.l.b16 %v3713
    %v3817 = vunpack.c.l.b16 %v3714
    %v3818 = vunpack.c.l.b16 %v3715
    %v3819 = vunpack.c.l.b16 %v3716
    %v3820 = vunpack.c.l.b16 %v3717
    %v3821 = vpack.c.b16 %v3774, %v3773
    %v3822 = vpack.c.b16 %v3776, %v3775
    %v3823 = vpack.c.b16 %v3778, %v3777
    %v3824 = vpack.c.b16 %v3780, %v3779
    %v3825 = vpack.c.b16 %v3782, %v3781
    %v3826 = vpack.c.b16 %v3784, %v3783
    %v3827 = vpack.c.b16 %v3786, %v3785
    %v3828 = vpack.c.b16 %v3788, %v3787
    %v3829 = vpack.c.b16 %v3790, %v3789
    %v3830 = vpack.c.b16 %v3792, %v3791
    %v3831 = vpack.c.b16 %v3794, %v3793
    %v3832 = vpack.c.b16 %v3796, %v3795
    %v3833 = vpack.c.b16 %v3798, %v3797
    %v3834 = vpack.c.b16 %v3800, %v3799
    %v3835 = vpack.c.b16 %v3802, %v3801
    %v3836 = vpack.c.b16 %v3804, %v3803
    %v3837 = vpack.c.b16 %v3806, %v3805
    %v3838 = vpack.c.b16 %v3808, %v3807
    %v3839 = vpack.c.b16 %v3810, %v3809
    %v3840 = vpack.c.b16 %v3812, %v3811
    %v3841 = vpack.c.b16 %v3814, %v3813
    %v3842 = vpack.c.b16 %v3816, %v3815
    %v3843 = vpack.c.b16 %v3818, %v3817
    %v3844 = vpack.c.b16 %v3820, %v3819
    %3869 = vmatprep.subr.bf16.mxu0 0
    %3870 = vmatpush1.bf16.msra.mxu0 %v3821
    %3871 = vmatprep.subr.bf16.mxu0 0
    %3872 = vmatpush1.bf16.msra.mxu0 %v3822
    %3873 = vmatprep.subr.bf16.mxu0 0
    %3874 = vmatpush1.bf16.msra.mxu0 %v3823
    %3875 = vmatprep.subr.bf16.mxu0 0
    %3876 = vmatpush1.bf16.msra.mxu0 %v3824
    %3877 = vmatprep.subr.bf16.mxu0 0
    %3878 = vmatpush1.bf16.msra.mxu0 %v3825
    %3879 = vmatprep.subr.bf16.mxu0 0
    %3880 = vmatpush1.bf16.msra.mxu0 %v3826
    %3881 = vmatprep.subr.bf16.mxu0 0
    %3882 = vmatpush1.bf16.msra.mxu0 %v3827
    %3883 = vmatprep.subr.bf16.mxu0 0
    %3884 = vmatpush1.bf16.msra.mxu0 %v3828
    %3885 = vmatprep.subr.bf16.mxu0 0
    %3886 = vmatpush1.bf16.msra.mxu0 %v3829
    %3887 = vmatprep.subr.bf16.mxu0 0
    %3888 = vmatpush1.bf16.msra.mxu0 %v3830
    %3889 = vmatprep.subr.bf16.mxu0 0
    %3890 = vmatpush1.bf16.msra.mxu0 %v3831
    %3891 = vmatprep.subr.bf16.mxu0 0
    %3892 = vmatpush1.bf16.msra.mxu0 %v3832
    %3893 = vmatprep.subr.bf16.mxu0 0
    %3894 = vmatpush1.bf16.msra.mxu0 %v3833
    %3895 = vmatprep.subr.bf16.mxu0 0
    %3896 = vmatpush1.bf16.msra.mxu0 %v3834
    %3897 = vmatprep.subr.bf16.mxu0 0
    %3898 = vmatpush1.bf16.msra.mxu0 %v3835
    %3899 = vmatprep.subr.bf16.mxu0 0
    %3900 = vmatpush1.bf16.msra.mxu0 %v3836
    %3901 = vmatprep.mubr.bf16.mxu0 %v3668
    %3902 = vmatmul.mubr.bf16.gmra.mrb[0].mxu0 %v3667
    %v3903 = vpop.f32.mrb[0].mxu0
    %v3904 = vadd.f32 %v3723, %v3903
    %v3905 = vpop.f32.mrb[0].mxu0
    %v3906 = vpop.f32.mrb[0].mxu0
    %v3907 = vadd.f32 %v3723, %v3906
    %v3908 = vpop.f32.mrb[0].mxu0
    %3909 = vdwg.mxu0
    %3910 = vmatprep.subr.bf16.mxu0 0
    %3911 = vmatpush1.bf16.msra.mxu0 %v3837
    %3912 = vmatprep.subr.bf16.mxu0 0
    %3913 = vmatpush1.bf16.msra.mxu0 %v3838
    %3914 = vmatprep.subr.bf16.mxu0 0
    %3915 = vmatpush1.bf16.msra.mxu0 %v3839
    %3916 = vmatprep.subr.bf16.mxu0 0
    %3917 = vmatpush1.bf16.msra.mxu0 %v3840
    %3918 = vmatprep.subr.bf16.mxu0 0
    %3919 = vmatpush1.bf16.msra.mxu0 %v3841
    %3920 = vmatprep.subr.bf16.mxu0 0
    %3921 = vmatpush1.bf16.msra.mxu0 %v3842
    %3922 = vmatprep.subr.bf16.mxu0 0
    %3923 = vmatpush1.bf16.msra.mxu0 %v3843
    %3924 = vmatprep.subr.bf16.mxu0 0
    %3925 = vmatpush1.bf16.msra.mxu0 %v3844
    %3926 = vmatprep.subr.bf16.mxu0 0
    %3927 = vmatpush1.bf16.msra.mxu0 0
    %3928 = vmatprep.subr.bf16.mxu0 0
    %3929 = vmatpush1.bf16.msra.mxu0 0
    %3930 = vmatprep.subr.bf16.mxu0 0
    %3931 = vmatpush1.bf16.msra.mxu0 0
    %3932 = vmatprep.subr.bf16.mxu0 0
    %3933 = vmatpush1.bf16.msra.mxu0 0
    %3934 = vmatprep.subr.bf16.mxu0 0
    %3935 = vmatpush1.bf16.msra.mxu0 0
    %3936 = vmatprep.subr.bf16.mxu0 0
    %3937 = vmatpush1.bf16.msra.mxu0 0
    %3938 = vmatprep.subr.bf16.mxu0 0
    %3939 = vmatpush1.bf16.msra.mxu0 0
    %3940 = vmatprep.subr.bf16.mxu0 0
    %3941 = vmatpush1.bf16.msra.mxu0 0
    %3942 = vmatprep.mubr.bf16.mxu0 0
    %3943 = vmatmul.mubr.bf16.gmra.mrb[0].mxu0 %v3669
    %v3944 = vpop.f32.mrb[0].mxu0
    %v3945 = vadd.f32 %v3904, %v3944
    %v3946 = vpop.f32.mrb[0].mxu0
    %v3947 = vpop.f32.mrb[0].mxu0
    %v3948 = vadd.f32 %v3907, %v3947
    %v3949 = vpop.f32.mrb[0].mxu0
    %3950 = vdwg.mxu0
    %3951 = vst [vmem:[#allocation13] sm:$0xff] %v3945
    %3952 = vst [vmem:[#allocation13 + $0x8] sm:$0xff] %v3948
    // Predicated region
    $region70: #{tpu_custom_call.1} parent=1 // pred_check
      _
    $region71: #{tpu_custom_call.1} parent=1 // pred_check_branch
      %3954 = sbr.rel (0) target = $region73
    $region72: #{tpu_custom_call.1} parent=1 // pred_region
      %s3956 = ssub.s32 256, 256
      %3957 = vsyncadd [#allocation4], %s3956
      %s3958 = sshll.u32 [#allocation13], 4
      %s3959 = int_to_ptr.vmem [resolvable:$true] %s3958
      %3964 = dma.vmem_to_hbm [thread:$0]  %s3959, 256, %s11, [#allocation4], 128, 128, 8
    $region73: #{tpu_custom_call.1} parent=1 // pred_fallthru
      _
    // Predicated region
    $region74: #{tpu_custom_call.1} parent=1 // pred_check
      _
    $region75: #{tpu_custom_call.1} parent=1 // pred_check_branch
      %3966 = sbr.rel (0) target = $region77
    $region76: #{tpu_custom_call.1} parent=1 // pred_region
      %3967 = dma.done [#allocation4], 256
    $region77: #{tpu_custom_call.1} parent=1 // pred_fallthru
      _
    %3968 = vsyncpa [#allocation3], 1
    %3969 = vsyncpa [#allocation6], 1
    %3970 = vsyncpa [#allocation9], 1
    %3971 = vsyncpa [#allocation12], 1
    %3972 = vsyncpa [#allocation4], 1

</llo_original>
